<compile_context>
chip_gen: v6e
topology: v6e:2x2x1
jax: 0.10.0
libtpu: 0.0.40
codegen_flags: <defaults>
</compile_context>

<pallas_src>
import functools
import math

import jax
import jax.numpy as jnp
from jax.experimental import pallas as pl
from jax.experimental.pallas import tpu as pltpu


def _largest_divisor_leq(n: int, cap: int) -> int:
    """Largest divisor of n that is <= cap (>= 1)."""
    cap = max(1, min(n, cap))
    for d in range(cap, 0, -1):
        if n % d == 0:
            return d
    return 1


# --------------------------------------------------------------------------
# Kernel
# --------------------------------------------------------------------------
def _spatial_attention_kernel(x_ref, w_ref, out_ref,
                              avg_pad_ref, max_pad_ref, attn_ref,
                              *, ksize, height, width, chunk_c):
    # x_ref       : (Bb, C, H*W)   lane-dense VMEM block
    # w_ref       : (2*K*K,)       SMEM flat conv weights [avg-ch | max-ch]
    # out_ref     : (Bb, C, H*W)   lane-dense VMEM block
    # avg_pad_ref : (H+2p, W+2p)   f32 VMEM scratch (zero halo + interior)
    # max_pad_ref : (H+2p, W+2p)   f32 VMEM scratch
    # attn_ref    : (1, H*W)       f32 VMEM scratch (flat attention map)
    k = ksize
    pad = k // 2
    bb, c, hw = x_ref.shape
    h, w = height, width
    cc = chunk_c
    n_chunks = c // cc
    inv_c = jnp.float32(1.0 / c)

    # Zero the small padded scratch every step.  (Not the zero-once trick:
    # the batch grid axis is "parallel", so on v7x each core only sees a
    # subset of grid steps and scratch state cannot persist across them.
    # The scratch is tiny now that the 128-lane offset was dropped.)
    avg_pad_ref[...] = jnp.zeros_like(avg_pad_ref)
    max_pad_ref[...] = jnp.zeros_like(max_pad_ref)

    for bi in range(bb):                               # Bb is a small static int
        # ---- channel pooling, streamed over channel chunks (f32 accum) ----
        s = jnp.zeros((1, hw), jnp.float32)
        m = jnp.full((1, hw), -jnp.inf, jnp.float32)

        if n_chunks <= 8:                              # fully static / unrolled
            for ci in range(n_chunks):
                chunk = x_ref[bi, ci * cc:(ci + 1) * cc, :].astype(jnp.float32)
                s = s + jnp.sum(chunk, axis=0, keepdims=True)
                m = jnp.maximum(m, jnp.max(chunk, axis=0, keepdims=True))
        else:
            def pool_body(ci, carry):
                ps, pm = carry
                c0 = pl.multiple_of(ci * cc, cc)
                chunk = x_ref[bi, pl.ds(c0, cc), :].astype(jnp.float32)
                ps = ps + jnp.sum(chunk, axis=0, keepdims=True)
                pm = jnp.maximum(pm, jnp.max(chunk, axis=0, keepdims=True))
                return ps, pm
            s, m = jax.lax.fori_loop(0, n_chunks, pool_body, (s, m))

        avg_flat = s * inv_c                           # (1, H*W)
        max_flat = m                                   # (1, H*W)

        # ---- relayout (1, H*W) -> (H, W) interior of the padded scratch ----
        # Static-slice row copies (no value reshape; definitely lowerable).
        for i in range(h):
            cols = slice(i * w, (i + 1) * w)
            avg_pad_ref[pad + i:pad + i + 1, pad:pad + w] = avg_flat[:, cols]
            max_pad_ref[pad + i:pad + i + 1, pad:pad + w] = max_flat[:, cols]

        # ---- KxK "same" conv: scalar(SMEM) x vreg taps on the VPU ----------
        # Lane (column) shifts hoisted: one lane-offset load per kx, then
        # sublane-only value slices per ky.  Four partial accumulators break
        # the 2*K*K-deep serial add chain.
        accs = [jnp.zeros((h, w), jnp.float32) for _ in range(4)]
        t = 0
        for kx in range(k):
            a_sh = avg_pad_ref[:, kx:kx + w]           # (H+2p, W)
            m_sh = max_pad_ref[:, kx:kx + w]
            for ky in range(k):
                w_avg = w_ref[ky * k + kx]             # SMEM scalar
                w_max = w_ref[k * k + ky * k + kx]
                accs[t % 4] = accs[t % 4] + a_sh[ky:ky + h, :] * w_avg
                accs[(t + 1) % 4] = accs[(t + 1) % 4] + m_sh[ky:ky + h, :] * w_max
                t += 2
        attn_hw = jax.nn.sigmoid((accs[0] + accs[1]) + (accs[2] + accs[3]))

        # ---- relayout (H, W) -> flat (1, H*W) through scratch ---------------
        for i in range(h):
            attn_ref[0:1, i * w:(i + 1) * w] = attn_hw[i:i + 1, :]
        attn_flat = attn_ref[...]                      # (1, H*W)

        # ---- x * attn, streamed over channel chunks, lane-dense f32->dtype --
        if n_chunks <= 8:
            for ci in range(n_chunks):
                sl = slice(ci * cc, (ci + 1) * cc)
                xv = x_ref[bi, sl, :].astype(jnp.float32)
                out_ref[bi, sl, :] = (xv * attn_flat).astype(out_ref.dtype)
        else:
            @pl.loop(0, n_chunks)
            def _(ci):
                c0 = pl.multiple_of(ci * cc, cc)
                xv = x_ref[bi, pl.ds(c0, cc), :].astype(jnp.float32)
                out_ref[bi, pl.ds(c0, cc), :] = (xv * attn_flat).astype(out_ref.dtype)


# --------------------------------------------------------------------------
# Wrapper
# --------------------------------------------------------------------------
def spatial_attention_forward(x_nchw, conv_weight_oihw, kernel_size=7):
    """SpatialAttention.forward: x * sigmoid(conv([mean_c(x), max_c(x)]))."""
    assert kernel_size in (3, 7), "kernel size must be 3 or 7"
    b, c, h, w = x_nchw.shape
    k = kernel_size
    assert conv_weight_oihw.shape == (1, 2, k, k)
    pad = k // 2
    hw = h * w
    itemsize = x_nchw.dtype.itemsize

    # Lane-dense view of the bulk data; the reshape is contiguous => free.
    x_flat = x_nchw.reshape(b, c, hw)
    # (1, 2, K, K) OIHW -> flat (2*K*K,): [avg-channel | max-channel] weights.
    w_flat = conv_weight_oihw.reshape(2 * k * k).astype(jnp.float32)

    # Batch elements per grid step: big enough to amortize the ~0.35us/step
    # overhead, small enough to double-buffer in VMEM, and keeping >= 2 grid
    # steps when possible so both v7x TensorCores get "parallel" work.
    per_b_bytes = c * hw * itemsize
    bb_cap = max(1, (8 << 20) // max(per_b_bytes, 1))
    if b >= 2:
        bb_cap = min(bb_cap, b // 2)
    bb = _largest_divisor_leq(b, bb_cap)
    grid = (b // bb,)
    # TODO(synk): if a single (C, H*W) slab ever exceeds the VMEM budget, add
    # a channel-blocked grid (pool into persistent scratch, second pass for
    # the multiply) instead of one block per batch element.

    # Channel chunk for streaming (keeps the live f32 working set <= ~256 KiB).
    cc = _largest_divisor_leq(c, max(1, (256 << 10) // max(hw * 4, 1)))

    kernel = functools.partial(_spatial_attention_kernel,
                               ksize=k, height=h, width=w, chunk_c=cc)

    scratch_rows = h + 2 * pad
    scratch_cols = w + 2 * pad

    # Explicit VMEM budget: double-buffered in/out blocks + scratch + headroom.
    block_bytes = bb * c * hw * itemsize
    scratch_bytes = (2 * pl.cdiv(scratch_rows, 8) * 8 * max(scratch_cols, 128)
                     + max(hw, 128)) * 4
    vmem_limit = int(min(64 << 20,
                         max(16 << 20, 4 * block_bytes + scratch_bytes + (2 << 20))))

    cost = pl.CostEstimate(
        flops=b * hw * (3 * c + 4 * k * k + 1),
        transcendentals=b * hw,                         # sigmoid
        bytes_accessed=2 * b * c * hw * itemsize + 2 * k * k * 4)

    out_flat = pl.pallas_call(
        kernel,
        out_shape=jax.ShapeDtypeStruct((b, c, hw), x_nchw.dtype),
        grid=grid,
        in_specs=[
            pl.BlockSpec((bb, c, hw), lambda i: (i, 0, 0)),
            pl.BlockSpec(memory_space=pltpu.MemorySpace.SMEM),
        ],
        out_specs=pl.BlockSpec((bb, c, hw), lambda i: (i, 0, 0)),
        scratch_shapes=[
            pltpu.VMEM((scratch_rows, scratch_cols), jnp.float32),
            pltpu.VMEM((scratch_rows, scratch_cols), jnp.float32),
            pltpu.VMEM((1, hw), jnp.float32),
        ],
        compiler_params=pltpu.CompilerParams(
            dimension_semantics=("parallel",),
            vmem_limit_bytes=vmem_limit),
        cost_estimate=cost,
    )(x_flat, w_flat)
    return out_flat.reshape(b, c, h, w)


# --------------------------------------------------------------------------
# Pure-JAX reference (correctness sanity check)
# --------------------------------------------------------------------------
def _ref_spatial_attention(x_nchw, conv_weight_oihw):
    avg = jnp.mean(x_nchw, axis=1, keepdims=True)
    mx = jnp.max(x_nchw, axis=1, keepdims=True)
    pooled = jnp.concatenate([avg, mx], axis=1)            # (B, 2, H, W)
    attn = jax.lax.conv_general_dilated(
        pooled, conv_weight_oihw, window_strides=(1, 1), padding="SAME",
        dimension_numbers=("NCHW", "OIHW", "NCHW"))
    return x_nchw * jax.nn.sigmoid(attn)


# --------------------------------------------------------------------------
# Main
# --------------------------------------------------------------------------
if __name__ == "__main__":
    key = jax.random.PRNGKey(0)
    B, C, H, W = 2, 4, 16, 16
    K = 7                                                   # module default

    k_x, k_w = jax.random.split(key)
    x = jax.random.normal(k_x, (B, C, H, W), jnp.float32)

    # nn.Conv2d(2, 1, 7, padding=3, bias=False) weight in OIHW layout.
    bound = 1.0 / math.sqrt(2 * K * K)
    w_oihw = jax.random.uniform(k_w, (1, 2, K, K), jnp.float32, -bound, bound)

    out = spatial_attention_forward(x, w_oihw, kernel_size=K)
    out = jax.block_until_ready(out)

    ref = jax.block_until_ready(_ref_spatial_attention(x, w_oihw))
    assert out.shape == (B, C, H, W)
    assert jnp.allclose(out, ref, rtol=1e-4, atol=1e-5), "mismatch vs reference"

    print("KERNEL_OK")
</pallas_src>

<mosaic_0001>
module attributes {stable_mosaic.version = 11 : i64} {
  func.func @_spatial_attention_kernel(%arg0: i32, %arg1: memref<1x4x256xf32, #tpu.memory_space<vmem>>, %arg2: memref<98xf32, #tpu.memory_space<smem>>, %arg3: memref<1x4x256xf32, #tpu.memory_space<vmem>>, %arg4: memref<22x22xf32, #tpu.memory_space<vmem>>, %arg5: memref<22x22xf32, #tpu.memory_space<vmem>>, %arg6: memref<1x256xf32, #tpu.memory_space<vmem>>) attributes {dimension_semantics = [#tpu.dimension_semantics<parallel>], iteration_bounds = array<i64: 2>, scalar_prefetch = 0 : i64, scratch_operands = 3 : i64, tpu.core_type = #tpu.core_type<tc>, window_params = [{transform_indices = @transform_0, window_bounds = array<i64: 1, 4, 256>}, {transform_indices = @transform_1, window_bounds = array<i64: 98>}, {transform_indices = @transform_2, window_bounds = array<i64: 1, 4, 256>}]} {
    %cst = arith.constant 0.000000e+00 : f32
    %0 = vector.broadcast %cst : f32 to vector<22x22xf32>
    %c0 = arith.constant 0 : index
    %c0_0 = arith.constant 0 : index
    %1 = vector.load %arg4[%c0, %c0_0] : memref<22x22xf32, #tpu.memory_space<vmem>>, vector<22x22xf32>
    tpu.vector_store %arg4[%c0, %c0_0], %0 {strides = array<i32>} : memref<22x22xf32, #tpu.memory_space<vmem>>, vector<22x22xf32>,
    %cst_1 = arith.constant 0.000000e+00 : f32
    %2 = vector.broadcast %cst_1 : f32 to vector<22x22xf32>
    %c0_2 = arith.constant 0 : index
    %c0_3 = arith.constant 0 : index
    %3 = vector.load %arg5[%c0_2, %c0_3] : memref<22x22xf32, #tpu.memory_space<vmem>>, vector<22x22xf32>
    tpu.vector_store %arg5[%c0_2, %c0_3], %2 {strides = array<i32>} : memref<22x22xf32, #tpu.memory_space<vmem>>, vector<22x22xf32>,
    %cst_4 = arith.constant 0.000000e+00 : f32
    %4 = vector.broadcast %cst_4 : f32 to vector<1x256xf32>
    %cst_5 = arith.constant 0xFF800000 : f32
    %5 = vector.broadcast %cst_5 : f32 to vector<1x256xf32>
    %c0_6 = arith.constant 0 : index
    %c0_7 = arith.constant 0 : index
    %c0_8 = arith.constant 0 : index
    %6 = vector.load %arg1[%c0_6, %c0_7, %c0_8] : memref<1x4x256xf32, #tpu.memory_space<vmem>>, vector<1x4x256xf32>
    %7 = vector.shape_cast %6 : vector<1x4x256xf32> to vector<4x256xf32>
    %cst_9 = arith.constant dense<0.000000e+00> : vector<256xf32>
    %8 = vector.multi_reduction <add>, %7, %cst_9 [0] : vector<4x256xf32> to vector<256xf32>
    %9 = vector.shape_cast %8 : vector<256xf32> to vector<1x256xf32>
    %10 = arith.addf %4, %9 : vector<1x256xf32>
    %cst_10 = arith.constant dense<0xFF800000> : vector<256xf32>
    %11 = vector.multi_reduction <maximumf>, %7, %cst_10 [0] : vector<4x256xf32> to vector<256xf32>
    %12 = vector.shape_cast %11 : vector<256xf32> to vector<1x256xf32>
    %13 = arith.maximumf %5, %12 : vector<1x256xf32>
    %cst_11 = arith.constant 2.500000e-01 : f32
    %14 = vector.broadcast %cst_11 : f32 to vector<1x256xf32>
    %15 = arith.mulf %10, %14 : vector<1x256xf32>
    %16 = vector.extract_strided_slice %15 {offsets = [0, 0], sizes = [1, 16], strides = [1, 1]} : vector<1x256xf32> to vector<1x16xf32>
    %c3 = arith.constant 3 : index
    %c3_12 = arith.constant 3 : index
    %17 = vector.load %arg4[%c3, %c3_12] : memref<22x22xf32, #tpu.memory_space<vmem>>, vector<1x16xf32>
    tpu.vector_store %arg4[%c3, %c3_12], %16 {strides = array<i32>} : memref<22x22xf32, #tpu.memory_space<vmem>>, vector<1x16xf32>,
    %18 = vector.extract_strided_slice %13 {offsets = [0, 0], sizes = [1, 16], strides = [1, 1]} : vector<1x256xf32> to vector<1x16xf32>
    %c3_13 = arith.constant 3 : index
    %c3_14 = arith.constant 3 : index
    %19 = vector.load %arg5[%c3_13, %c3_14] : memref<22x22xf32, #tpu.memory_space<vmem>>, vector<1x16xf32>
    tpu.vector_store %arg5[%c3_13, %c3_14], %18 {strides = array<i32>} : memref<22x22xf32, #tpu.memory_space<vmem>>, vector<1x16xf32>,
    %20 = vector.extract_strided_slice %15 {offsets = [0, 16], sizes = [1, 16], strides = [1, 1]} : vector<1x256xf32> to vector<1x16xf32>
    %c4 = arith.constant 4 : index
    %c3_15 = arith.constant 3 : index
    %21 = vector.load %arg4[%c4, %c3_15] : memref<22x22xf32, #tpu.memory_space<vmem>>, vector<1x16xf32>
    tpu.vector_store %arg4[%c4, %c3_15], %20 {strides = array<i32>} : memref<22x22xf32, #tpu.memory_space<vmem>>, vector<1x16xf32>,
    %22 = vector.extract_strided_slice %13 {offsets = [0, 16], sizes = [1, 16], strides = [1, 1]} : vector<1x256xf32> to vector<1x16xf32>
    %c4_16 = arith.constant 4 : index
    %c3_17 = arith.constant 3 : index
    %23 = vector.load %arg5[%c4_16, %c3_17] : memref<22x22xf32, #tpu.memory_space<vmem>>, vector<1x16xf32>
    tpu.vector_store %arg5[%c4_16, %c3_17], %22 {strides = array<i32>} : memref<22x22xf32, #tpu.memory_space<vmem>>, vector<1x16xf32>,
    %24 = vector.extract_strided_slice %15 {offsets = [0, 32], sizes = [1, 16], strides = [1, 1]} : vector<1x256xf32> to vector<1x16xf32>
    %c5 = arith.constant 5 : index
    %c3_18 = arith.constant 3 : index
    %25 = vector.load %arg4[%c5, %c3_18] : memref<22x22xf32, #tpu.memory_space<vmem>>, vector<1x16xf32>
    tpu.vector_store %arg4[%c5, %c3_18], %24 {strides = array<i32>} : memref<22x22xf32, #tpu.memory_space<vmem>>, vector<1x16xf32>,
    %26 = vector.extract_strided_slice %13 {offsets = [0, 32], sizes = [1, 16], strides = [1, 1]} : vector<1x256xf32> to vector<1x16xf32>
    %c5_19 = arith.constant 5 : index
    %c3_20 = arith.constant 3 : index
    %27 = vector.load %arg5[%c5_19, %c3_20] : memref<22x22xf32, #tpu.memory_space<vmem>>, vector<1x16xf32>
    tpu.vector_store %arg5[%c5_19, %c3_20], %26 {strides = array<i32>} : memref<22x22xf32, #tpu.memory_space<vmem>>, vector<1x16xf32>,
    %28 = vector.extract_strided_slice %15 {offsets = [0, 48], sizes = [1, 16], strides = [1, 1]} : vector<1x256xf32> to vector<1x16xf32>
    %c6 = arith.constant 6 : index
    %c3_21 = arith.constant 3 : index
    %29 = vector.load %arg4[%c6, %c3_21] : memref<22x22xf32, #tpu.memory_space<vmem>>, vector<1x16xf32>
    tpu.vector_store %arg4[%c6, %c3_21], %28 {strides = array<i32>} : memref<22x22xf32, #tpu.memory_space<vmem>>, vector<1x16xf32>,
    %30 = vector.extract_strided_slice %13 {offsets = [0, 48], sizes = [1, 16], strides = [1, 1]} : vector<1x256xf32> to vector<1x16xf32>
    %c6_22 = arith.constant 6 : index
    %c3_23 = arith.constant 3 : index
    %31 = vector.load %arg5[%c6_22, %c3_23] : memref<22x22xf32, #tpu.memory_space<vmem>>, vector<1x16xf32>
    tpu.vector_store %arg5[%c6_22, %c3_23], %30 {strides = array<i32>} : memref<22x22xf32, #tpu.memory_space<vmem>>, vector<1x16xf32>,
    %32 = vector.extract_strided_slice %15 {offsets = [0, 64], sizes = [1, 16], strides = [1, 1]} : vector<1x256xf32> to vector<1x16xf32>
    %c7 = arith.constant 7 : index
    %c3_24 = arith.constant 3 : index
    %33 = vector.load %arg4[%c7, %c3_24] : memref<22x22xf32, #tpu.memory_space<vmem>>, vector<1x16xf32>
    tpu.vector_store %arg4[%c7, %c3_24], %32 {strides = array<i32>} : memref<22x22xf32, #tpu.memory_space<vmem>>, vector<1x16xf32>,
    %34 = vector.extract_strided_slice %13 {offsets = [0, 64], sizes = [1, 16], strides = [1, 1]} : vector<1x256xf32> to vector<1x16xf32>
    %c7_25 = arith.constant 7 : index
    %c3_26 = arith.constant 3 : index
    %35 = vector.load %arg5[%c7_25, %c3_26] : memref<22x22xf32, #tpu.memory_space<vmem>>, vector<1x16xf32>
    tpu.vector_store %arg5[%c7_25, %c3_26], %34 {strides = array<i32>} : memref<22x22xf32, #tpu.memory_space<vmem>>, vector<1x16xf32>,
    %36 = vector.extract_strided_slice %15 {offsets = [0, 80], sizes = [1, 16], strides = [1, 1]} : vector<1x256xf32> to vector<1x16xf32>
    %c8 = arith.constant 8 : index
    %c3_27 = arith.constant 3 : index
    %37 = vector.load %arg4[%c8, %c3_27] : memref<22x22xf32, #tpu.memory_space<vmem>>, vector<1x16xf32>
    tpu.vector_store %arg4[%c8, %c3_27], %36 {strides = array<i32>} : memref<22x22xf32, #tpu.memory_space<vmem>>, vector<1x16xf32>,
    %38 = vector.extract_strided_slice %13 {offsets = [0, 80], sizes = [1, 16], strides = [1, 1]} : vector<1x256xf32> to vector<1x16xf32>
    %c8_28 = arith.constant 8 : index
    %c3_29 = arith.constant 3 : index
    %39 = vector.load %arg5[%c8_28, %c3_29] : memref<22x22xf32, #tpu.memory_space<vmem>>, vector<1x16xf32>
    tpu.vector_store %arg5[%c8_28, %c3_29], %38 {strides = array<i32>} : memref<22x22xf32, #tpu.memory_space<vmem>>, vector<1x16xf32>,
    %40 = vector.extract_strided_slice %15 {offsets = [0, 96], sizes = [1, 16], strides = [1, 1]} : vector<1x256xf32> to vector<1x16xf32>
    %c9 = arith.constant 9 : index
    %c3_30 = arith.constant 3 : index
    %41 = vector.load %arg4[%c9, %c3_30] : memref<22x22xf32, #tpu.memory_space<vmem>>, vector<1x16xf32>
    tpu.vector_store %arg4[%c9, %c3_30], %40 {strides = array<i32>} : memref<22x22xf32, #tpu.memory_space<vmem>>, vector<1x16xf32>,
    %42 = vector.extract_strided_slice %13 {offsets = [0, 96], sizes = [1, 16], strides = [1, 1]} : vector<1x256xf32> to vector<1x16xf32>
    %c9_31 = arith.constant 9 : index
    %c3_32 = arith.constant 3 : index
    %43 = vector.load %arg5[%c9_31, %c3_32] : memref<22x22xf32, #tpu.memory_space<vmem>>, vector<1x16xf32>
    tpu.vector_store %arg5[%c9_31, %c3_32], %42 {strides = array<i32>} : memref<22x22xf32, #tpu.memory_space<vmem>>, vector<1x16xf32>,
    %44 = vector.extract_strided_slice %15 {offsets = [0, 112], sizes = [1, 16], strides = [1, 1]} : vector<1x256xf32> to vector<1x16xf32>
    %c10 = arith.constant 10 : index
    %c3_33 = arith.constant 3 : index
    %45 = vector.load %arg4[%c10, %c3_33] : memref<22x22xf32, #tpu.memory_space<vmem>>, vector<1x16xf32>
    tpu.vector_store %arg4[%c10, %c3_33], %44 {strides = array<i32>} : memref<22x22xf32, #tpu.memory_space<vmem>>, vector<1x16xf32>,
    %46 = vector.extract_strided_slice %13 {offsets = [0, 112], sizes = [1, 16], strides = [1, 1]} : vector<1x256xf32> to vector<1x16xf32>
    %c10_34 = arith.constant 10 : index
    %c3_35 = arith.constant 3 : index
    %47 = vector.load %arg5[%c10_34, %c3_35] : memref<22x22xf32, #tpu.memory_space<vmem>>, vector<1x16xf32>
    tpu.vector_store %arg5[%c10_34, %c3_35], %46 {strides = array<i32>} : memref<22x22xf32, #tpu.memory_space<vmem>>, vector<1x16xf32>,
    %48 = vector.extract_strided_slice %15 {offsets = [0, 128], sizes = [1, 16], strides = [1, 1]} : vector<1x256xf32> to vector<1x16xf32>
    %c11 = arith.constant 11 : index
    %c3_36 = arith.constant 3 : index
    %49 = vector.load %arg4[%c11, %c3_36] : memref<22x22xf32, #tpu.memory_space<vmem>>, vector<1x16xf32>
    tpu.vector_store %arg4[%c11, %c3_36], %48 {strides = array<i32>} : memref<22x22xf32, #tpu.memory_space<vmem>>, vector<1x16xf32>,
    %50 = vector.extract_strided_slice %13 {offsets = [0, 128], sizes = [1, 16], strides = [1, 1]} : vector<1x256xf32> to vector<1x16xf32>
    %c11_37 = arith.constant 11 : index
    %c3_38 = arith.constant 3 : index
    %51 = vector.load %arg5[%c11_37, %c3_38] : memref<22x22xf32, #tpu.memory_space<vmem>>, vector<1x16xf32>
    tpu.vector_store %arg5[%c11_37, %c3_38], %50 {strides = array<i32>} : memref<22x22xf32, #tpu.memory_space<vmem>>, vector<1x16xf32>,
    %52 = vector.extract_strided_slice %15 {offsets = [0, 144], sizes = [1, 16], strides = [1, 1]} : vector<1x256xf32> to vector<1x16xf32>
    %c12 = arith.constant 12 : index
    %c3_39 = arith.constant 3 : index
    %53 = vector.load %arg4[%c12, %c3_39] : memref<22x22xf32, #tpu.memory_space<vmem>>, vector<1x16xf32>
    tpu.vector_store %arg4[%c12, %c3_39], %52 {strides = array<i32>} : memref<22x22xf32, #tpu.memory_space<vmem>>, vector<1x16xf32>,
    %54 = vector.extract_strided_slice %13 {offsets = [0, 144], sizes = [1, 16], strides = [1, 1]} : vector<1x256xf32> to vector<1x16xf32>
    %c12_40 = arith.constant 12 : index
    %c3_41 = arith.constant 3 : index
    %55 = vector.load %arg5[%c12_40, %c3_41] : memref<22x22xf32, #tpu.memory_space<vmem>>, vector<1x16xf32>
    tpu.vector_store %arg5[%c12_40, %c3_41], %54 {strides = array<i32>} : memref<22x22xf32, #tpu.memory_space<vmem>>, vector<1x16xf32>,
    %56 = vector.extract_strided_slice %15 {offsets = [0, 160], sizes = [1, 16], strides = [1, 1]} : vector<1x256xf32> to vector<1x16xf32>
    %c13 = arith.constant 13 : index
    %c3_42 = arith.constant 3 : index
    %57 = vector.load %arg4[%c13, %c3_42] : memref<22x22xf32, #tpu.memory_space<vmem>>, vector<1x16xf32>
    tpu.vector_store %arg4[%c13, %c3_42], %56 {strides = array<i32>} : memref<22x22xf32, #tpu.memory_space<vmem>>, vector<1x16xf32>,
    %58 = vector.extract_strided_slice %13 {offsets = [0, 160], sizes = [1, 16], strides = [1, 1]} : vector<1x256xf32> to vector<1x16xf32>
    %c13_43 = arith.constant 13 : index
    %c3_44 = arith.constant 3 : index
    %59 = vector.load %arg5[%c13_43, %c3_44] : memref<22x22xf32, #tpu.memory_space<vmem>>, vector<1x16xf32>
    tpu.vector_store %arg5[%c13_43, %c3_44], %58 {strides = array<i32>} : memref<22x22xf32, #tpu.memory_space<vmem>>, vector<1x16xf32>,
    %60 = vector.extract_strided_slice %15 {offsets = [0, 176], sizes = [1, 16], strides = [1, 1]} : vector<1x256xf32> to vector<1x16xf32>
    %c14 = arith.constant 14 : index
    %c3_45 = arith.constant 3 : index
    %61 = vector.load %arg4[%c14, %c3_45] : memref<22x22xf32, #tpu.memory_space<vmem>>, vector<1x16xf32>
    tpu.vector_store %arg4[%c14, %c3_45], %60 {strides = array<i32>} : memref<22x22xf32, #tpu.memory_space<vmem>>, vector<1x16xf32>,
    %62 = vector.extract_strided_slice %13 {offsets = [0, 176], sizes = [1, 16], strides = [1, 1]} : vector<1x256xf32> to vector<1x16xf32>
    %c14_46 = arith.constant 14 : index
    %c3_47 = arith.constant 3 : index
    %63 = vector.load %arg5[%c14_46, %c3_47] : memref<22x22xf32, #tpu.memory_space<vmem>>, vector<1x16xf32>
    tpu.vector_store %arg5[%c14_46, %c3_47], %62 {strides = array<i32>} : memref<22x22xf32, #tpu.memory_space<vmem>>, vector<1x16xf32>,
    %64 = vector.extract_strided_slice %15 {offsets = [0, 192], sizes = [1, 16], strides = [1, 1]} : vector<1x256xf32> to vector<1x16xf32>
    %c15 = arith.constant 15 : index
    %c3_48 = arith.constant 3 : index
    %65 = vector.load %arg4[%c15, %c3_48] : memref<22x22xf32, #tpu.memory_space<vmem>>, vector<1x16xf32>
    tpu.vector_store %arg4[%c15, %c3_48], %64 {strides = array<i32>} : memref<22x22xf32, #tpu.memory_space<vmem>>, vector<1x16xf32>,
    %66 = vector.extract_strided_slice %13 {offsets = [0, 192], sizes = [1, 16], strides = [1, 1]} : vector<1x256xf32> to vector<1x16xf32>
    %c15_49 = arith.constant 15 : index
    %c3_50 = arith.constant 3 : index
    %67 = vector.load %arg5[%c15_49, %c3_50] : memref<22x22xf32, #tpu.memory_space<vmem>>, vector<1x16xf32>
    tpu.vector_store %arg5[%c15_49, %c3_50], %66 {strides = array<i32>} : memref<22x22xf32, #tpu.memory_space<vmem>>, vector<1x16xf32>,
    %68 = vector.extract_strided_slice %15 {offsets = [0, 208], sizes = [1, 16], strides = [1, 1]} : vector<1x256xf32> to vector<1x16xf32>
    %c16 = arith.constant 16 : index
    %c3_51 = arith.constant 3 : index
    %69 = vector.load %arg4[%c16, %c3_51] : memref<22x22xf32, #tpu.memory_space<vmem>>, vector<1x16xf32>
    tpu.vector_store %arg4[%c16, %c3_51], %68 {strides = array<i32>} : memref<22x22xf32, #tpu.memory_space<vmem>>, vector<1x16xf32>,
    %70 = vector.extract_strided_slice %13 {offsets = [0, 208], sizes = [1, 16], strides = [1, 1]} : vector<1x256xf32> to vector<1x16xf32>
    %c16_52 = arith.constant 16 : index
    %c3_53 = arith.constant 3 : index
    %71 = vector.load %arg5[%c16_52, %c3_53] : memref<22x22xf32, #tpu.memory_space<vmem>>, vector<1x16xf32>
    tpu.vector_store %arg5[%c16_52, %c3_53], %70 {strides = array<i32>} : memref<22x22xf32, #tpu.memory_space<vmem>>, vector<1x16xf32>,
    %72 = vector.extract_strided_slice %15 {offsets = [0, 224], sizes = [1, 16], strides = [1, 1]} : vector<1x256xf32> to vector<1x16xf32>
    %c17 = arith.constant 17 : index
    %c3_54 = arith.constant 3 : index
    %73 = vector.load %arg4[%c17, %c3_54] : memref<22x22xf32, #tpu.memory_space<vmem>>, vector<1x16xf32>
    tpu.vector_store %arg4[%c17, %c3_54], %72 {strides = array<i32>} : memref<22x22xf32, #tpu.memory_space<vmem>>, vector<1x16xf32>,
    %74 = vector.extract_strided_slice %13 {offsets = [0, 224], sizes = [1, 16], strides = [1, 1]} : vector<1x256xf32> to vector<1x16xf32>
    %c17_55 = arith.constant 17 : index
    %c3_56 = arith.constant 3 : index
    %75 = vector.load %arg5[%c17_55, %c3_56] : memref<22x22xf32, #tpu.memory_space<vmem>>, vector<1x16xf32>
    tpu.vector_store %arg5[%c17_55, %c3_56], %74 {strides = array<i32>} : memref<22x22xf32, #tpu.memory_space<vmem>>, vector<1x16xf32>,
    %76 = vector.extract_strided_slice %15 {offsets = [0, 240], sizes = [1, 16], strides = [1, 1]} : vector<1x256xf32> to vector<1x16xf32>
    %c18 = arith.constant 18 : index
    %c3_57 = arith.constant 3 : index
    %77 = vector.load %arg4[%c18, %c3_57] : memref<22x22xf32, #tpu.memory_space<vmem>>, vector<1x16xf32>
    tpu.vector_store %arg4[%c18, %c3_57], %76 {strides = array<i32>} : memref<22x22xf32, #tpu.memory_space<vmem>>, vector<1x16xf32>,
    %78 = vector.extract_strided_slice %13 {offsets = [0, 240], sizes = [1, 16], strides = [1, 1]} : vector<1x256xf32> to vector<1x16xf32>
    %c18_58 = arith.constant 18 : index
    %c3_59 = arith.constant 3 : index
    %79 = vector.load %arg5[%c18_58, %c3_59] : memref<22x22xf32, #tpu.memory_space<vmem>>, vector<1x16xf32>
    tpu.vector_store %arg5[%c18_58, %c3_59], %78 {strides = array<i32>} : memref<22x22xf32, #tpu.memory_space<vmem>>, vector<1x16xf32>,
    %cst_60 = arith.constant 0.000000e+00 : f32
    %80 = vector.broadcast %cst_60 : f32 to vector<16x16xf32>
    %cst_61 = arith.constant 0.000000e+00 : f32
    %81 = vector.broadcast %cst_61 : f32 to vector<16x16xf32>
    %cst_62 = arith.constant 0.000000e+00 : f32
    %82 = vector.broadcast %cst_62 : f32 to vector<16x16xf32>
    %cst_63 = arith.constant 0.000000e+00 : f32
    %83 = vector.broadcast %cst_63 : f32 to vector<16x16xf32>
    %c0_64 = arith.constant 0 : index
    %c0_65 = arith.constant 0 : index
    %84 = vector.load %arg4[%c0_64, %c0_65] : memref<22x22xf32, #tpu.memory_space<vmem>>, vector<22x16xf32>
    %c0_66 = arith.constant 0 : index
    %c0_67 = arith.constant 0 : index
    %85 = vector.load %arg5[%c0_66, %c0_67] : memref<22x22xf32, #tpu.memory_space<vmem>>, vector<22x16xf32>
    %c0_68 = arith.constant 0 : index
    %86 = memref.load %arg2[%c0_68] : memref<98xf32, #tpu.memory_space<smem>>
    %c49 = arith.constant 49 : index
    %87 = memref.load %arg2[%c49] : memref<98xf32, #tpu.memory_space<smem>>
    %88 = vector.extract_strided_slice %84 {offsets = [0, 0], sizes = [16, 16], strides = [1, 1]} : vector<22x16xf32> to vector<16x16xf32>
    %89 = vector.broadcast %86 : f32 to vector<16x16xf32>
    %90 = arith.mulf %88, %89 : vector<16x16xf32>
    %91 = arith.addf %80, %90 : vector<16x16xf32>
    %92 = vector.extract_strided_slice %85 {offsets = [0, 0], sizes = [16, 16], strides = [1, 1]} : vector<22x16xf32> to vector<16x16xf32>
    %93 = vector.broadcast %87 : f32 to vector<16x16xf32>
    %94 = arith.mulf %92, %93 : vector<16x16xf32>
    %95 = arith.addf %81, %94 : vector<16x16xf32>
    %c7_69 = arith.constant 7 : index
    %96 = memref.load %arg2[%c7_69] : memref<98xf32, #tpu.memory_space<smem>>
    %c56 = arith.constant 56 : index
    %97 = memref.load %arg2[%c56] : memref<98xf32, #tpu.memory_space<smem>>
    %98 = vector.extract_strided_slice %84 {offsets = [1, 0], sizes = [16, 16], strides = [1, 1]} : vector<22x16xf32> to vector<16x16xf32>
    %99 = vector.broadcast %96 : f32 to vector<16x16xf32>
    %100 = arith.mulf %98, %99 : vector<16x16xf32>
    %101 = arith.addf %82, %100 : vector<16x16xf32>
    %102 = vector.extract_strided_slice %85 {offsets = [1, 0], sizes = [16, 16], strides = [1, 1]} : vector<22x16xf32> to vector<16x16xf32>
    %103 = vector.broadcast %97 : f32 to vector<16x16xf32>
    %104 = arith.mulf %102, %103 : vector<16x16xf32>
    %105 = arith.addf %83, %104 : vector<16x16xf32>
    %c14_70 = arith.constant 14 : index
    %106 = memref.load %arg2[%c14_70] : memref<98xf32, #tpu.memory_space<smem>>
    %c63 = arith.constant 63 : index
    %107 = memref.load %arg2[%c63] : memref<98xf32, #tpu.memory_space<smem>>
    %108 = vector.extract_strided_slice %84 {offsets = [2, 0], sizes = [16, 16], strides = [1, 1]} : vector<22x16xf32> to vector<16x16xf32>
    %109 = vector.broadcast %106 : f32 to vector<16x16xf32>
    %110 = arith.mulf %108, %109 : vector<16x16xf32>
    %111 = arith.addf %91, %110 : vector<16x16xf32>
    %112 = vector.extract_strided_slice %85 {offsets = [2, 0], sizes = [16, 16], strides = [1, 1]} : vector<22x16xf32> to vector<16x16xf32>
    %113 = vector.broadcast %107 : f32 to vector<16x16xf32>
    %114 = arith.mulf %112, %113 : vector<16x16xf32>
    %115 = arith.addf %95, %114 : vector<16x16xf32>
    %c21 = arith.constant 21 : index
    %116 = memref.load %arg2[%c21] : memref<98xf32, #tpu.memory_space<smem>>
    %c70 = arith.constant 70 : index
    %117 = memref.load %arg2[%c70] : memref<98xf32, #tpu.memory_space<smem>>
    %118 = vector.extract_strided_slice %84 {offsets = [3, 0], sizes = [16, 16], strides = [1, 1]} : vector<22x16xf32> to vector<16x16xf32>
    %119 = vector.broadcast %116 : f32 to vector<16x16xf32>
    %120 = arith.mulf %118, %119 : vector<16x16xf32>
    %121 = arith.addf %101, %120 : vector<16x16xf32>
    %122 = vector.extract_strided_slice %85 {offsets = [3, 0], sizes = [16, 16], strides = [1, 1]} : vector<22x16xf32> to vector<16x16xf32>
    %123 = vector.broadcast %117 : f32 to vector<16x16xf32>
    %124 = arith.mulf %122, %123 : vector<16x16xf32>
    %125 = arith.addf %105, %124 : vector<16x16xf32>
    %c28 = arith.constant 28 : index
    %126 = memref.load %arg2[%c28] : memref<98xf32, #tpu.memory_space<smem>>
    %c77 = arith.constant 77 : index
    %127 = memref.load %arg2[%c77] : memref<98xf32, #tpu.memory_space<smem>>
    %128 = vector.extract_strided_slice %84 {offsets = [4, 0], sizes = [16, 16], strides = [1, 1]} : vector<22x16xf32> to vector<16x16xf32>
    %129 = vector.broadcast %126 : f32 to vector<16x16xf32>
    %130 = arith.mulf %128, %129 : vector<16x16xf32>
    %131 = arith.addf %111, %130 : vector<16x16xf32>
    %132 = vector.extract_strided_slice %85 {offsets = [4, 0], sizes = [16, 16], strides = [1, 1]} : vector<22x16xf32> to vector<16x16xf32>
    %133 = vector.broadcast %127 : f32 to vector<16x16xf32>
    %134 = arith.mulf %132, %133 : vector<16x16xf32>
    %135 = arith.addf %115, %134 : vector<16x16xf32>
    %c35 = arith.constant 35 : index
    %136 = memref.load %arg2[%c35] : memref<98xf32, #tpu.memory_space<smem>>
    %c84 = arith.constant 84 : index
    %137 = memref.load %arg2[%c84] : memref<98xf32, #tpu.memory_space<smem>>
    %138 = vector.extract_strided_slice %84 {offsets = [5, 0], sizes = [16, 16], strides = [1, 1]} : vector<22x16xf32> to vector<16x16xf32>
    %139 = vector.broadcast %136 : f32 to vector<16x16xf32>
    %140 = arith.mulf %138, %139 : vector<16x16xf32>
    %141 = arith.addf %121, %140 : vector<16x16xf32>
    %142 = vector.extract_strided_slice %85 {offsets = [5, 0], sizes = [16, 16], strides = [1, 1]} : vector<22x16xf32> to vector<16x16xf32>
    %143 = vector.broadcast %137 : f32 to vector<16x16xf32>
    %144 = arith.mulf %142, %143 : vector<16x16xf32>
    %145 = arith.addf %125, %144 : vector<16x16xf32>
    %c42 = arith.constant 42 : index
    %146 = memref.load %arg2[%c42] : memref<98xf32, #tpu.memory_space<smem>>
    %c91 = arith.constant 91 : index
    %147 = memref.load %arg2[%c91] : memref<98xf32, #tpu.memory_space<smem>>
    %148 = vector.extract_strided_slice %84 {offsets = [6, 0], sizes = [16, 16], strides = [1, 1]} : vector<22x16xf32> to vector<16x16xf32>
    %149 = vector.broadcast %146 : f32 to vector<16x16xf32>
    %150 = arith.mulf %148, %149 : vector<16x16xf32>
    %151 = arith.addf %131, %150 : vector<16x16xf32>
    %152 = vector.extract_strided_slice %85 {offsets = [6, 0], sizes = [16, 16], strides = [1, 1]} : vector<22x16xf32> to vector<16x16xf32>
    %153 = vector.broadcast %147 : f32 to vector<16x16xf32>
    %154 = arith.mulf %152, %153 : vector<16x16xf32>
    %155 = arith.addf %135, %154 : vector<16x16xf32>
    %c0_71 = arith.constant 0 : index
    %c1 = arith.constant 1 : index
    %156 = vector.load %arg4[%c0_71, %c1] : memref<22x22xf32, #tpu.memory_space<vmem>>, vector<22x16xf32>
    %c0_72 = arith.constant 0 : index
    %c1_73 = arith.constant 1 : index
    %157 = vector.load %arg5[%c0_72, %c1_73] : memref<22x22xf32, #tpu.memory_space<vmem>>, vector<22x16xf32>
    %c1_74 = arith.constant 1 : index
    %158 = memref.load %arg2[%c1_74] : memref<98xf32, #tpu.memory_space<smem>>
    %c50 = arith.constant 50 : index
    %159 = memref.load %arg2[%c50] : memref<98xf32, #tpu.memory_space<smem>>
    %160 = vector.extract_strided_slice %156 {offsets = [0, 0], sizes = [16, 16], strides = [1, 1]} : vector<22x16xf32> to vector<16x16xf32>
    %161 = vector.broadcast %158 : f32 to vector<16x16xf32>
    %162 = arith.mulf %160, %161 : vector<16x16xf32>
    %163 = arith.addf %141, %162 : vector<16x16xf32>
    %164 = vector.extract_strided_slice %157 {offsets = [0, 0], sizes = [16, 16], strides = [1, 1]} : vector<22x16xf32> to vector<16x16xf32>
    %165 = vector.broadcast %159 : f32 to vector<16x16xf32>
    %166 = arith.mulf %164, %165 : vector<16x16xf32>
    %167 = arith.addf %145, %166 : vector<16x16xf32>
    %c8_75 = arith.constant 8 : index
    %168 = memref.load %arg2[%c8_75] : memref<98xf32, #tpu.memory_space<smem>>
    %c57 = arith.constant 57 : index
    %169 = memref.load %arg2[%c57] : memref<98xf32, #tpu.memory_space<smem>>
    %170 = vector.extract_strided_slice %156 {offsets = [1, 0], sizes = [16, 16], strides = [1, 1]} : vector<22x16xf32> to vector<16x16xf32>
    %171 = vector.broadcast %168 : f32 to vector<16x16xf32>
    %172 = arith.mulf %170, %171 : vector<16x16xf32>
    %173 = arith.addf %151, %172 : vector<16x16xf32>
    %174 = vector.extract_strided_slice %157 {offsets = [1, 0], sizes = [16, 16], strides = [1, 1]} : vector<22x16xf32> to vector<16x16xf32>
    %175 = vector.broadcast %169 : f32 to vector<16x16xf32>
    %176 = arith.mulf %174, %175 : vector<16x16xf32>
    %177 = arith.addf %155, %176 : vector<16x16xf32>
    %c15_76 = arith.constant 15 : index
    %178 = memref.load %arg2[%c15_76] : memref<98xf32, #tpu.memory_space<smem>>
    %c64 = arith.constant 64 : index
    %179 = memref.load %arg2[%c64] : memref<98xf32, #tpu.memory_space<smem>>
    %180 = vector.extract_strided_slice %156 {offsets = [2, 0], sizes = [16, 16], strides = [1, 1]} : vector<22x16xf32> to vector<16x16xf32>
    %181 = vector.broadcast %178 : f32 to vector<16x16xf32>
    %182 = arith.mulf %180, %181 : vector<16x16xf32>
    %183 = arith.addf %163, %182 : vector<16x16xf32>
    %184 = vector.extract_strided_slice %157 {offsets = [2, 0], sizes = [16, 16], strides = [1, 1]} : vector<22x16xf32> to vector<16x16xf32>
    %185 = vector.broadcast %179 : f32 to vector<16x16xf32>
    %186 = arith.mulf %184, %185 : vector<16x16xf32>
    %187 = arith.addf %167, %186 : vector<16x16xf32>
    %c22 = arith.constant 22 : index
    %188 = memref.load %arg2[%c22] : memref<98xf32, #tpu.memory_space<smem>>
    %c71 = arith.constant 71 : index
    %189 = memref.load %arg2[%c71] : memref<98xf32, #tpu.memory_space<smem>>
    %190 = vector.extract_strided_slice %156 {offsets = [3, 0], sizes = [16, 16], strides = [1, 1]} : vector<22x16xf32> to vector<16x16xf32>
    %191 = vector.broadcast %188 : f32 to vector<16x16xf32>
    %192 = arith.mulf %190, %191 : vector<16x16xf32>
    %193 = arith.addf %173, %192 : vector<16x16xf32>
    %194 = vector.extract_strided_slice %157 {offsets = [3, 0], sizes = [16, 16], strides = [1, 1]} : vector<22x16xf32> to vector<16x16xf32>
    %195 = vector.broadcast %189 : f32 to vector<16x16xf32>
    %196 = arith.mulf %194, %195 : vector<16x16xf32>
    %197 = arith.addf %177, %196 : vector<16x16xf32>
    %c29 = arith.constant 29 : index
    %198 = memref.load %arg2[%c29] : memref<98xf32, #tpu.memory_space<smem>>
    %c78 = arith.constant 78 : index
    %199 = memref.load %arg2[%c78] : memref<98xf32, #tpu.memory_space<smem>>
    %200 = vector.extract_strided_slice %156 {offsets = [4, 0], sizes = [16, 16], strides = [1, 1]} : vector<22x16xf32> to vector<16x16xf32>
    %201 = vector.broadcast %198 : f32 to vector<16x16xf32>
    %202 = arith.mulf %200, %201 : vector<16x16xf32>
    %203 = arith.addf %183, %202 : vector<16x16xf32>
    %204 = vector.extract_strided_slice %157 {offsets = [4, 0], sizes = [16, 16], strides = [1, 1]} : vector<22x16xf32> to vector<16x16xf32>
    %205 = vector.broadcast %199 : f32 to vector<16x16xf32>
    %206 = arith.mulf %204, %205 : vector<16x16xf32>
    %207 = arith.addf %187, %206 : vector<16x16xf32>
    %c36 = arith.constant 36 : index
    %208 = memref.load %arg2[%c36] : memref<98xf32, #tpu.memory_space<smem>>
    %c85 = arith.constant 85 : index
    %209 = memref.load %arg2[%c85] : memref<98xf32, #tpu.memory_space<smem>>
    %210 = vector.extract_strided_slice %156 {offsets = [5, 0], sizes = [16, 16], strides = [1, 1]} : vector<22x16xf32> to vector<16x16xf32>
    %211 = vector.broadcast %208 : f32 to vector<16x16xf32>
    %212 = arith.mulf %210, %211 : vector<16x16xf32>
    %213 = arith.addf %193, %212 : vector<16x16xf32>
    %214 = vector.extract_strided_slice %157 {offsets = [5, 0], sizes = [16, 16], strides = [1, 1]} : vector<22x16xf32> to vector<16x16xf32>
    %215 = vector.broadcast %209 : f32 to vector<16x16xf32>
    %216 = arith.mulf %214, %215 : vector<16x16xf32>
    %217 = arith.addf %197, %216 : vector<16x16xf32>
    %c43 = arith.constant 43 : index
    %218 = memref.load %arg2[%c43] : memref<98xf32, #tpu.memory_space<smem>>
    %c92 = arith.constant 92 : index
    %219 = memref.load %arg2[%c92] : memref<98xf32, #tpu.memory_space<smem>>
    %220 = vector.extract_strided_slice %156 {offsets = [6, 0], sizes = [16, 16], strides = [1, 1]} : vector<22x16xf32> to vector<16x16xf32>
    %221 = vector.broadcast %218 : f32 to vector<16x16xf32>
    %222 = arith.mulf %220, %221 : vector<16x16xf32>
    %223 = arith.addf %203, %222 : vector<16x16xf32>
    %224 = vector.extract_strided_slice %157 {offsets = [6, 0], sizes = [16, 16], strides = [1, 1]} : vector<22x16xf32> to vector<16x16xf32>
    %225 = vector.broadcast %219 : f32 to vector<16x16xf32>
    %226 = arith.mulf %224, %225 : vector<16x16xf32>
    %227 = arith.addf %207, %226 : vector<16x16xf32>
    %c0_77 = arith.constant 0 : index
    %c2 = arith.constant 2 : index
    %228 = vector.load %arg4[%c0_77, %c2] : memref<22x22xf32, #tpu.memory_space<vmem>>, vector<22x16xf32>
    %c0_78 = arith.constant 0 : index
    %c2_79 = arith.constant 2 : index
    %229 = vector.load %arg5[%c0_78, %c2_79] : memref<22x22xf32, #tpu.memory_space<vmem>>, vector<22x16xf32>
    %c2_80 = arith.constant 2 : index
    %230 = memref.load %arg2[%c2_80] : memref<98xf32, #tpu.memory_space<smem>>
    %c51 = arith.constant 51 : index
    %231 = memref.load %arg2[%c51] : memref<98xf32, #tpu.memory_space<smem>>
    %232 = vector.extract_strided_slice %228 {offsets = [0, 0], sizes = [16, 16], strides = [1, 1]} : vector<22x16xf32> to vector<16x16xf32>
    %233 = vector.broadcast %230 : f32 to vector<16x16xf32>
    %234 = arith.mulf %232, %233 : vector<16x16xf32>
    %235 = arith.addf %213, %234 : vector<16x16xf32>
    %236 = vector.extract_strided_slice %229 {offsets = [0, 0], sizes = [16, 16], strides = [1, 1]} : vector<22x16xf32> to vector<16x16xf32>
    %237 = vector.broadcast %231 : f32 to vector<16x16xf32>
    %238 = arith.mulf %236, %237 : vector<16x16xf32>
    %239 = arith.addf %217, %238 : vector<16x16xf32>
    %c9_81 = arith.constant 9 : index
    %240 = memref.load %arg2[%c9_81] : memref<98xf32, #tpu.memory_space<smem>>
    %c58 = arith.constant 58 : index
    %241 = memref.load %arg2[%c58] : memref<98xf32, #tpu.memory_space<smem>>
    %242 = vector.extract_strided_slice %228 {offsets = [1, 0], sizes = [16, 16], strides = [1, 1]} : vector<22x16xf32> to vector<16x16xf32>
    %243 = vector.broadcast %240 : f32 to vector<16x16xf32>
    %244 = arith.mulf %242, %243 : vector<16x16xf32>
    %245 = arith.addf %223, %244 : vector<16x16xf32>
    %246 = vector.extract_strided_slice %229 {offsets = [1, 0], sizes = [16, 16], strides = [1, 1]} : vector<22x16xf32> to vector<16x16xf32>
    %247 = vector.broadcast %241 : f32 to vector<16x16xf32>
    %248 = arith.mulf %246, %247 : vector<16x16xf32>
    %249 = arith.addf %227, %248 : vector<16x16xf32>
    %c16_82 = arith.constant 16 : index
    %250 = memref.load %arg2[%c16_82] : memref<98xf32, #tpu.memory_space<smem>>
    %c65 = arith.constant 65 : index
    %251 = memref.load %arg2[%c65] : memref<98xf32, #tpu.memory_space<smem>>
    %252 = vector.extract_strided_slice %228 {offsets = [2, 0], sizes = [16, 16], strides = [1, 1]} : vector<22x16xf32> to vector<16x16xf32>
    %253 = vector.broadcast %250 : f32 to vector<16x16xf32>
    %254 = arith.mulf %252, %253 : vector<16x16xf32>
    %255 = arith.addf %235, %254 : vector<16x16xf32>
    %256 = vector.extract_strided_slice %229 {offsets = [2, 0], sizes = [16, 16], strides = [1, 1]} : vector<22x16xf32> to vector<16x16xf32>
    %257 = vector.broadcast %251 : f32 to vector<16x16xf32>
    %258 = arith.mulf %256, %257 : vector<16x16xf32>
    %259 = arith.addf %239, %258 : vector<16x16xf32>
    %c23 = arith.constant 23 : index
    %260 = memref.load %arg2[%c23] : memref<98xf32, #tpu.memory_space<smem>>
    %c72 = arith.constant 72 : index
    %261 = memref.load %arg2[%c72] : memref<98xf32, #tpu.memory_space<smem>>
    %262 = vector.extract_strided_slice %228 {offsets = [3, 0], sizes = [16, 16], strides = [1, 1]} : vector<22x16xf32> to vector<16x16xf32>
    %263 = vector.broadcast %260 : f32 to vector<16x16xf32>
    %264 = arith.mulf %262, %263 : vector<16x16xf32>
    %265 = arith.addf %245, %264 : vector<16x16xf32>
    %266 = vector.extract_strided_slice %229 {offsets = [3, 0], sizes = [16, 16], strides = [1, 1]} : vector<22x16xf32> to vector<16x16xf32>
    %267 = vector.broadcast %261 : f32 to vector<16x16xf32>
    %268 = arith.mulf %266, %267 : vector<16x16xf32>
    %269 = arith.addf %249, %268 : vector<16x16xf32>
    %c30 = arith.constant 30 : index
    %270 = memref.load %arg2[%c30] : memref<98xf32, #tpu.memory_space<smem>>
    %c79 = arith.constant 79 : index
    %271 = memref.load %arg2[%c79] : memref<98xf32, #tpu.memory_space<smem>>
    %272 = vector.extract_strided_slice %228 {offsets = [4, 0], sizes = [16, 16], strides = [1, 1]} : vector<22x16xf32> to vector<16x16xf32>
    %273 = vector.broadcast %270 : f32 to vector<16x16xf32>
    %274 = arith.mulf %272, %273 : vector<16x16xf32>
    %275 = arith.addf %255, %274 : vector<16x16xf32>
    %276 = vector.extract_strided_slice %229 {offsets = [4, 0], sizes = [16, 16], strides = [1, 1]} : vector<22x16xf32> to vector<16x16xf32>
    %277 = vector.broadcast %271 : f32 to vector<16x16xf32>
    %278 = arith.mulf %276, %277 : vector<16x16xf32>
    %279 = arith.addf %259, %278 : vector<16x16xf32>
    %c37 = arith.constant 37 : index
    %280 = memref.load %arg2[%c37] : memref<98xf32, #tpu.memory_space<smem>>
    %c86 = arith.constant 86 : index
    %281 = memref.load %arg2[%c86] : memref<98xf32, #tpu.memory_space<smem>>
    %282 = vector.extract_strided_slice %228 {offsets = [5, 0], sizes = [16, 16], strides = [1, 1]} : vector<22x16xf32> to vector<16x16xf32>
    %283 = vector.broadcast %280 : f32 to vector<16x16xf32>
    %284 = arith.mulf %282, %283 : vector<16x16xf32>
    %285 = arith.addf %265, %284 : vector<16x16xf32>
    %286 = vector.extract_strided_slice %229 {offsets = [5, 0], sizes = [16, 16], strides = [1, 1]} : vector<22x16xf32> to vector<16x16xf32>
    %287 = vector.broadcast %281 : f32 to vector<16x16xf32>
    %288 = arith.mulf %286, %287 : vector<16x16xf32>
    %289 = arith.addf %269, %288 : vector<16x16xf32>
    %c44 = arith.constant 44 : index
    %290 = memref.load %arg2[%c44] : memref<98xf32, #tpu.memory_space<smem>>
    %c93 = arith.constant 93 : index
    %291 = memref.load %arg2[%c93] : memref<98xf32, #tpu.memory_space<smem>>
    %292 = vector.extract_strided_slice %228 {offsets = [6, 0], sizes = [16, 16], strides = [1, 1]} : vector<22x16xf32> to vector<16x16xf32>
    %293 = vector.broadcast %290 : f32 to vector<16x16xf32>
    %294 = arith.mulf %292, %293 : vector<16x16xf32>
    %295 = arith.addf %275, %294 : vector<16x16xf32>
    %296 = vector.extract_strided_slice %229 {offsets = [6, 0], sizes = [16, 16], strides = [1, 1]} : vector<22x16xf32> to vector<16x16xf32>
    %297 = vector.broadcast %291 : f32 to vector<16x16xf32>
    %298 = arith.mulf %296, %297 : vector<16x16xf32>
    %299 = arith.addf %279, %298 : vector<16x16xf32>
    %c0_83 = arith.constant 0 : index
    %c3_84 = arith.constant 3 : index
    %300 = vector.load %arg4[%c0_83, %c3_84] : memref<22x22xf32, #tpu.memory_space<vmem>>, vector<22x16xf32>
    %c0_85 = arith.constant 0 : index
    %c3_86 = arith.constant 3 : index
    %301 = vector.load %arg5[%c0_85, %c3_86] : memref<22x22xf32, #tpu.memory_space<vmem>>, vector<22x16xf32>
    %c3_87 = arith.constant 3 : index
    %302 = memref.load %arg2[%c3_87] : memref<98xf32, #tpu.memory_space<smem>>
    %c52 = arith.constant 52 : index
    %303 = memref.load %arg2[%c52] : memref<98xf32, #tpu.memory_space<smem>>
    %304 = vector.extract_strided_slice %300 {offsets = [0, 0], sizes = [16, 16], strides = [1, 1]} : vector<22x16xf32> to vector<16x16xf32>
    %305 = vector.broadcast %302 : f32 to vector<16x16xf32>
    %306 = arith.mulf %304, %305 : vector<16x16xf32>
    %307 = arith.addf %285, %306 : vector<16x16xf32>
    %308 = vector.extract_strided_slice %301 {offsets = [0, 0], sizes = [16, 16], strides = [1, 1]} : vector<22x16xf32> to vector<16x16xf32>
    %309 = vector.broadcast %303 : f32 to vector<16x16xf32>
    %310 = arith.mulf %308, %309 : vector<16x16xf32>
    %311 = arith.addf %289, %310 : vector<16x16xf32>
    %c10_88 = arith.constant 10 : index
    %312 = memref.load %arg2[%c10_88] : memref<98xf32, #tpu.memory_space<smem>>
    %c59 = arith.constant 59 : index
    %313 = memref.load %arg2[%c59] : memref<98xf32, #tpu.memory_space<smem>>
    %314 = vector.extract_strided_slice %300 {offsets = [1, 0], sizes = [16, 16], strides = [1, 1]} : vector<22x16xf32> to vector<16x16xf32>
    %315 = vector.broadcast %312 : f32 to vector<16x16xf32>
    %316 = arith.mulf %314, %315 : vector<16x16xf32>
    %317 = arith.addf %295, %316 : vector<16x16xf32>
    %318 = vector.extract_strided_slice %301 {offsets = [1, 0], sizes = [16, 16], strides = [1, 1]} : vector<22x16xf32> to vector<16x16xf32>
    %319 = vector.broadcast %313 : f32 to vector<16x16xf32>
    %320 = arith.mulf %318, %319 : vector<16x16xf32>
    %321 = arith.addf %299, %320 : vector<16x16xf32>
    %c17_89 = arith.constant 17 : index
    %322 = memref.load %arg2[%c17_89] : memref<98xf32, #tpu.memory_space<smem>>
    %c66 = arith.constant 66 : index
    %323 = memref.load %arg2[%c66] : memref<98xf32, #tpu.memory_space<smem>>
    %324 = vector.extract_strided_slice %300 {offsets = [2, 0], sizes = [16, 16], strides = [1, 1]} : vector<22x16xf32> to vector<16x16xf32>
    %325 = vector.broadcast %322 : f32 to vector<16x16xf32>
    %326 = arith.mulf %324, %325 : vector<16x16xf32>
    %327 = arith.addf %307, %326 : vector<16x16xf32>
    %328 = vector.extract_strided_slice %301 {offsets = [2, 0], sizes = [16, 16], strides = [1, 1]} : vector<22x16xf32> to vector<16x16xf32>
    %329 = vector.broadcast %323 : f32 to vector<16x16xf32>
    %330 = arith.mulf %328, %329 : vector<16x16xf32>
    %331 = arith.addf %311, %330 : vector<16x16xf32>
    %c24 = arith.constant 24 : index
    %332 = memref.load %arg2[%c24] : memref<98xf32, #tpu.memory_space<smem>>
    %c73 = arith.constant 73 : index
    %333 = memref.load %arg2[%c73] : memref<98xf32, #tpu.memory_space<smem>>
    %334 = vector.extract_strided_slice %300 {offsets = [3, 0], sizes = [16, 16], strides = [1, 1]} : vector<22x16xf32> to vector<16x16xf32>
    %335 = vector.broadcast %332 : f32 to vector<16x16xf32>
    %336 = arith.mulf %334, %335 : vector<16x16xf32>
    %337 = arith.addf %317, %336 : vector<16x16xf32>
    %338 = vector.extract_strided_slice %301 {offsets = [3, 0], sizes = [16, 16], strides = [1, 1]} : vector<22x16xf32> to vector<16x16xf32>
    %339 = vector.broadcast %333 : f32 to vector<16x16xf32>
    %340 = arith.mulf %338, %339 : vector<16x16xf32>
    %341 = arith.addf %321, %340 : vector<16x16xf32>
    %c31 = arith.constant 31 : index
    %342 = memref.load %arg2[%c31] : memref<98xf32, #tpu.memory_space<smem>>
    %c80 = arith.constant 80 : index
    %343 = memref.load %arg2[%c80] : memref<98xf32, #tpu.memory_space<smem>>
    %344 = vector.extract_strided_slice %300 {offsets = [4, 0], sizes = [16, 16], strides = [1, 1]} : vector<22x16xf32> to vector<16x16xf32>
    %345 = vector.broadcast %342 : f32 to vector<16x16xf32>
    %346 = arith.mulf %344, %345 : vector<16x16xf32>
    %347 = arith.addf %327, %346 : vector<16x16xf32>
    %348 = vector.extract_strided_slice %301 {offsets = [4, 0], sizes = [16, 16], strides = [1, 1]} : vector<22x16xf32> to vector<16x16xf32>
    %349 = vector.broadcast %343 : f32 to vector<16x16xf32>
    %350 = arith.mulf %348, %349 : vector<16x16xf32>
    %351 = arith.addf %331, %350 : vector<16x16xf32>
    %c38 = arith.constant 38 : index
    %352 = memref.load %arg2[%c38] : memref<98xf32, #tpu.memory_space<smem>>
    %c87 = arith.constant 87 : index
    %353 = memref.load %arg2[%c87] : memref<98xf32, #tpu.memory_space<smem>>
    %354 = vector.extract_strided_slice %300 {offsets = [5, 0], sizes = [16, 16], strides = [1, 1]} : vector<22x16xf32> to vector<16x16xf32>
    %355 = vector.broadcast %352 : f32 to vector<16x16xf32>
    %356 = arith.mulf %354, %355 : vector<16x16xf32>
    %357 = arith.addf %337, %356 : vector<16x16xf32>
    %358 = vector.extract_strided_slice %301 {offsets = [5, 0], sizes = [16, 16], strides = [1, 1]} : vector<22x16xf32> to vector<16x16xf32>
    %359 = vector.broadcast %353 : f32 to vector<16x16xf32>
    %360 = arith.mulf %358, %359 : vector<16x16xf32>
    %361 = arith.addf %341, %360 : vector<16x16xf32>
    %c45 = arith.constant 45 : index
    %362 = memref.load %arg2[%c45] : memref<98xf32, #tpu.memory_space<smem>>
    %c94 = arith.constant 94 : index
    %363 = memref.load %arg2[%c94] : memref<98xf32, #tpu.memory_space<smem>>
    %364 = vector.extract_strided_slice %300 {offsets = [6, 0], sizes = [16, 16], strides = [1, 1]} : vector<22x16xf32> to vector<16x16xf32>
    %365 = vector.broadcast %362 : f32 to vector<16x16xf32>
    %366 = arith.mulf %364, %365 : vector<16x16xf32>
    %367 = arith.addf %347, %366 : vector<16x16xf32>
    %368 = vector.extract_strided_slice %301 {offsets = [6, 0], sizes = [16, 16], strides = [1, 1]} : vector<22x16xf32> to vector<16x16xf32>
    %369 = vector.broadcast %363 : f32 to vector<16x16xf32>
    %370 = arith.mulf %368, %369 : vector<16x16xf32>
    %371 = arith.addf %351, %370 : vector<16x16xf32>
    %c0_90 = arith.constant 0 : index
    %c4_91 = arith.constant 4 : index
    %372 = vector.load %arg4[%c0_90, %c4_91] : memref<22x22xf32, #tpu.memory_space<vmem>>, vector<22x16xf32>
    %c0_92 = arith.constant 0 : index
    %c4_93 = arith.constant 4 : index
    %373 = vector.load %arg5[%c0_92, %c4_93] : memref<22x22xf32, #tpu.memory_space<vmem>>, vector<22x16xf32>
    %c4_94 = arith.constant 4 : index
    %374 = memref.load %arg2[%c4_94] : memref<98xf32, #tpu.memory_space<smem>>
    %c53 = arith.constant 53 : index
    %375 = memref.load %arg2[%c53] : memref<98xf32, #tpu.memory_space<smem>>
    %376 = vector.extract_strided_slice %372 {offsets = [0, 0], sizes = [16, 16], strides = [1, 1]} : vector<22x16xf32> to vector<16x16xf32>
    %377 = vector.broadcast %374 : f32 to vector<16x16xf32>
    %378 = arith.mulf %376, %377 : vector<16x16xf32>
    %379 = arith.addf %357, %378 : vector<16x16xf32>
    %380 = vector.extract_strided_slice %373 {offsets = [0, 0], sizes = [16, 16], strides = [1, 1]} : vector<22x16xf32> to vector<16x16xf32>
    %381 = vector.broadcast %375 : f32 to vector<16x16xf32>
    %382 = arith.mulf %380, %381 : vector<16x16xf32>
    %383 = arith.addf %361, %382 : vector<16x16xf32>
    %c11_95 = arith.constant 11 : index
    %384 = memref.load %arg2[%c11_95] : memref<98xf32, #tpu.memory_space<smem>>
    %c60 = arith.constant 60 : index
    %385 = memref.load %arg2[%c60] : memref<98xf32, #tpu.memory_space<smem>>
    %386 = vector.extract_strided_slice %372 {offsets = [1, 0], sizes = [16, 16], strides = [1, 1]} : vector<22x16xf32> to vector<16x16xf32>
    %387 = vector.broadcast %384 : f32 to vector<16x16xf32>
    %388 = arith.mulf %386, %387 : vector<16x16xf32>
    %389 = arith.addf %367, %388 : vector<16x16xf32>
    %390 = vector.extract_strided_slice %373 {offsets = [1, 0], sizes = [16, 16], strides = [1, 1]} : vector<22x16xf32> to vector<16x16xf32>
    %391 = vector.broadcast %385 : f32 to vector<16x16xf32>
    %392 = arith.mulf %390, %391 : vector<16x16xf32>
    %393 = arith.addf %371, %392 : vector<16x16xf32>
    %c18_96 = arith.constant 18 : index
    %394 = memref.load %arg2[%c18_96] : memref<98xf32, #tpu.memory_space<smem>>
    %c67 = arith.constant 67 : index
    %395 = memref.load %arg2[%c67] : memref<98xf32, #tpu.memory_space<smem>>
    %396 = vector.extract_strided_slice %372 {offsets = [2, 0], sizes = [16, 16], strides = [1, 1]} : vector<22x16xf32> to vector<16x16xf32>
    %397 = vector.broadcast %394 : f32 to vector<16x16xf32>
    %398 = arith.mulf %396, %397 : vector<16x16xf32>
    %399 = arith.addf %379, %398 : vector<16x16xf32>
    %400 = vector.extract_strided_slice %373 {offsets = [2, 0], sizes = [16, 16], strides = [1, 1]} : vector<22x16xf32> to vector<16x16xf32>
    %401 = vector.broadcast %395 : f32 to vector<16x16xf32>
    %402 = arith.mulf %400, %401 : vector<16x16xf32>
    %403 = arith.addf %383, %402 : vector<16x16xf32>
    %c25 = arith.constant 25 : index
    %404 = memref.load %arg2[%c25] : memref<98xf32, #tpu.memory_space<smem>>
    %c74 = arith.constant 74 : index
    %405 = memref.load %arg2[%c74] : memref<98xf32, #tpu.memory_space<smem>>
    %406 = vector.extract_strided_slice %372 {offsets = [3, 0], sizes = [16, 16], strides = [1, 1]} : vector<22x16xf32> to vector<16x16xf32>
    %407 = vector.broadcast %404 : f32 to vector<16x16xf32>
    %408 = arith.mulf %406, %407 : vector<16x16xf32>
    %409 = arith.addf %389, %408 : vector<16x16xf32>
    %410 = vector.extract_strided_slice %373 {offsets = [3, 0], sizes = [16, 16], strides = [1, 1]} : vector<22x16xf32> to vector<16x16xf32>
    %411 = vector.broadcast %405 : f32 to vector<16x16xf32>
    %412 = arith.mulf %410, %411 : vector<16x16xf32>
    %413 = arith.addf %393, %412 : vector<16x16xf32>
    %c32 = arith.constant 32 : index
    %414 = memref.load %arg2[%c32] : memref<98xf32, #tpu.memory_space<smem>>
    %c81 = arith.constant 81 : index
    %415 = memref.load %arg2[%c81] : memref<98xf32, #tpu.memory_space<smem>>
    %416 = vector.extract_strided_slice %372 {offsets = [4, 0], sizes = [16, 16], strides = [1, 1]} : vector<22x16xf32> to vector<16x16xf32>
    %417 = vector.broadcast %414 : f32 to vector<16x16xf32>
    %418 = arith.mulf %416, %417 : vector<16x16xf32>
    %419 = arith.addf %399, %418 : vector<16x16xf32>
    %420 = vector.extract_strided_slice %373 {offsets = [4, 0], sizes = [16, 16], strides = [1, 1]} : vector<22x16xf32> to vector<16x16xf32>
    %421 = vector.broadcast %415 : f32 to vector<16x16xf32>
    %422 = arith.mulf %420, %421 : vector<16x16xf32>
    %423 = arith.addf %403, %422 : vector<16x16xf32>
    %c39 = arith.constant 39 : index
    %424 = memref.load %arg2[%c39] : memref<98xf32, #tpu.memory_space<smem>>
    %c88 = arith.constant 88 : index
    %425 = memref.load %arg2[%c88] : memref<98xf32, #tpu.memory_space<smem>>
    %426 = vector.extract_strided_slice %372 {offsets = [5, 0], sizes = [16, 16], strides = [1, 1]} : vector<22x16xf32> to vector<16x16xf32>
    %427 = vector.broadcast %424 : f32 to vector<16x16xf32>
    %428 = arith.mulf %426, %427 : vector<16x16xf32>
    %429 = arith.addf %409, %428 : vector<16x16xf32>
    %430 = vector.extract_strided_slice %373 {offsets = [5, 0], sizes = [16, 16], strides = [1, 1]} : vector<22x16xf32> to vector<16x16xf32>
    %431 = vector.broadcast %425 : f32 to vector<16x16xf32>
    %432 = arith.mulf %430, %431 : vector<16x16xf32>
    %433 = arith.addf %413, %432 : vector<16x16xf32>
    %c46 = arith.constant 46 : index
    %434 = memref.load %arg2[%c46] : memref<98xf32, #tpu.memory_space<smem>>
    %c95 = arith.constant 95 : index
    %435 = memref.load %arg2[%c95] : memref<98xf32, #tpu.memory_space<smem>>
    %436 = vector.extract_strided_slice %372 {offsets = [6, 0], sizes = [16, 16], strides = [1, 1]} : vector<22x16xf32> to vector<16x16xf32>
    %437 = vector.broadcast %434 : f32 to vector<16x16xf32>
    %438 = arith.mulf %436, %437 : vector<16x16xf32>
    %439 = arith.addf %419, %438 : vector<16x16xf32>
    %440 = vector.extract_strided_slice %373 {offsets = [6, 0], sizes = [16, 16], strides = [1, 1]} : vector<22x16xf32> to vector<16x16xf32>
    %441 = vector.broadcast %435 : f32 to vector<16x16xf32>
    %442 = arith.mulf %440, %441 : vector<16x16xf32>
    %443 = arith.addf %423, %442 : vector<16x16xf32>
    %c0_97 = arith.constant 0 : index
    %c5_98 = arith.constant 5 : index
    %444 = vector.load %arg4[%c0_97, %c5_98] : memref<22x22xf32, #tpu.memory_space<vmem>>, vector<22x16xf32>
    %c0_99 = arith.constant 0 : index
    %c5_100 = arith.constant 5 : index
    %445 = vector.load %arg5[%c0_99, %c5_100] : memref<22x22xf32, #tpu.memory_space<vmem>>, vector<22x16xf32>
    %c5_101 = arith.constant 5 : index
    %446 = memref.load %arg2[%c5_101] : memref<98xf32, #tpu.memory_space<smem>>
    %c54 = arith.constant 54 : index
    %447 = memref.load %arg2[%c54] : memref<98xf32, #tpu.memory_space<smem>>
    %448 = vector.extract_strided_slice %444 {offsets = [0, 0], sizes = [16, 16], strides = [1, 1]} : vector<22x16xf32> to vector<16x16xf32>
    %449 = vector.broadcast %446 : f32 to vector<16x16xf32>
    %450 = arith.mulf %448, %449 : vector<16x16xf32>
    %451 = arith.addf %429, %450 : vector<16x16xf32>
    %452 = vector.extract_strided_slice %445 {offsets = [0, 0], sizes = [16, 16], strides = [1, 1]} : vector<22x16xf32> to vector<16x16xf32>
    %453 = vector.broadcast %447 : f32 to vector<16x16xf32>
    %454 = arith.mulf %452, %453 : vector<16x16xf32>
    %455 = arith.addf %433, %454 : vector<16x16xf32>
    %c12_102 = arith.constant 12 : index
    %456 = memref.load %arg2[%c12_102] : memref<98xf32, #tpu.memory_space<smem>>
    %c61 = arith.constant 61 : index
    %457 = memref.load %arg2[%c61] : memref<98xf32, #tpu.memory_space<smem>>
    %458 = vector.extract_strided_slice %444 {offsets = [1, 0], sizes = [16, 16], strides = [1, 1]} : vector<22x16xf32> to vector<16x16xf32>
    %459 = vector.broadcast %456 : f32 to vector<16x16xf32>
    %460 = arith.mulf %458, %459 : vector<16x16xf32>
    %461 = arith.addf %439, %460 : vector<16x16xf32>
    %462 = vector.extract_strided_slice %445 {offsets = [1, 0], sizes = [16, 16], strides = [1, 1]} : vector<22x16xf32> to vector<16x16xf32>
    %463 = vector.broadcast %457 : f32 to vector<16x16xf32>
    %464 = arith.mulf %462, %463 : vector<16x16xf32>
    %465 = arith.addf %443, %464 : vector<16x16xf32>
    %c19 = arith.constant 19 : index
    %466 = memref.load %arg2[%c19] : memref<98xf32, #tpu.memory_space<smem>>
    %c68 = arith.constant 68 : index
    %467 = memref.load %arg2[%c68] : memref<98xf32, #tpu.memory_space<smem>>
    %468 = vector.extract_strided_slice %444 {offsets = [2, 0], sizes = [16, 16], strides = [1, 1]} : vector<22x16xf32> to vector<16x16xf32>
    %469 = vector.broadcast %466 : f32 to vector<16x16xf32>
    %470 = arith.mulf %468, %469 : vector<16x16xf32>
    %471 = arith.addf %451, %470 : vector<16x16xf32>
    %472 = vector.extract_strided_slice %445 {offsets = [2, 0], sizes = [16, 16], strides = [1, 1]} : vector<22x16xf32> to vector<16x16xf32>
    %473 = vector.broadcast %467 : f32 to vector<16x16xf32>
    %474 = arith.mulf %472, %473 : vector<16x16xf32>
    %475 = arith.addf %455, %474 : vector<16x16xf32>
    %c26 = arith.constant 26 : index
    %476 = memref.load %arg2[%c26] : memref<98xf32, #tpu.memory_space<smem>>
    %c75 = arith.constant 75 : index
    %477 = memref.load %arg2[%c75] : memref<98xf32, #tpu.memory_space<smem>>
    %478 = vector.extract_strided_slice %444 {offsets = [3, 0], sizes = [16, 16], strides = [1, 1]} : vector<22x16xf32> to vector<16x16xf32>
    %479 = vector.broadcast %476 : f32 to vector<16x16xf32>
    %480 = arith.mulf %478, %479 : vector<16x16xf32>
    %481 = arith.addf %461, %480 : vector<16x16xf32>
    %482 = vector.extract_strided_slice %445 {offsets = [3, 0], sizes = [16, 16], strides = [1, 1]} : vector<22x16xf32> to vector<16x16xf32>
    %483 = vector.broadcast %477 : f32 to vector<16x16xf32>
    %484 = arith.mulf %482, %483 : vector<16x16xf32>
    %485 = arith.addf %465, %484 : vector<16x16xf32>
    %c33 = arith.constant 33 : index
    %486 = memref.load %arg2[%c33] : memref<98xf32, #tpu.memory_space<smem>>
    %c82 = arith.constant 82 : index
    %487 = memref.load %arg2[%c82] : memref<98xf32, #tpu.memory_space<smem>>
    %488 = vector.extract_strided_slice %444 {offsets = [4, 0], sizes = [16, 16], strides = [1, 1]} : vector<22x16xf32> to vector<16x16xf32>
    %489 = vector.broadcast %486 : f32 to vector<16x16xf32>
    %490 = arith.mulf %488, %489 : vector<16x16xf32>
    %491 = arith.addf %471, %490 : vector<16x16xf32>
    %492 = vector.extract_strided_slice %445 {offsets = [4, 0], sizes = [16, 16], strides = [1, 1]} : vector<22x16xf32> to vector<16x16xf32>
    %493 = vector.broadcast %487 : f32 to vector<16x16xf32>
    %494 = arith.mulf %492, %493 : vector<16x16xf32>
    %495 = arith.addf %475, %494 : vector<16x16xf32>
    %c40 = arith.constant 40 : index
    %496 = memref.load %arg2[%c40] : memref<98xf32, #tpu.memory_space<smem>>
    %c89 = arith.constant 89 : index
    %497 = memref.load %arg2[%c89] : memref<98xf32, #tpu.memory_space<smem>>
    %498 = vector.extract_strided_slice %444 {offsets = [5, 0], sizes = [16, 16], strides = [1, 1]} : vector<22x16xf32> to vector<16x16xf32>
    %499 = vector.broadcast %496 : f32 to vector<16x16xf32>
    %500 = arith.mulf %498, %499 : vector<16x16xf32>
    %501 = arith.addf %481, %500 : vector<16x16xf32>
    %502 = vector.extract_strided_slice %445 {offsets = [5, 0], sizes = [16, 16], strides = [1, 1]} : vector<22x16xf32> to vector<16x16xf32>
    %503 = vector.broadcast %497 : f32 to vector<16x16xf32>
    %504 = arith.mulf %502, %503 : vector<16x16xf32>
    %505 = arith.addf %485, %504 : vector<16x16xf32>
    %c47 = arith.constant 47 : index
    %506 = memref.load %arg2[%c47] : memref<98xf32, #tpu.memory_space<smem>>
    %c96 = arith.constant 96 : index
    %507 = memref.load %arg2[%c96] : memref<98xf32, #tpu.memory_space<smem>>
    %508 = vector.extract_strided_slice %444 {offsets = [6, 0], sizes = [16, 16], strides = [1, 1]} : vector<22x16xf32> to vector<16x16xf32>
    %509 = vector.broadcast %506 : f32 to vector<16x16xf32>
    %510 = arith.mulf %508, %509 : vector<16x16xf32>
    %511 = arith.addf %491, %510 : vector<16x16xf32>
    %512 = vector.extract_strided_slice %445 {offsets = [6, 0], sizes = [16, 16], strides = [1, 1]} : vector<22x16xf32> to vector<16x16xf32>
    %513 = vector.broadcast %507 : f32 to vector<16x16xf32>
    %514 = arith.mulf %512, %513 : vector<16x16xf32>
    %515 = arith.addf %495, %514 : vector<16x16xf32>
    %c0_103 = arith.constant 0 : index
    %c6_104 = arith.constant 6 : index
    %516 = vector.load %arg4[%c0_103, %c6_104] : memref<22x22xf32, #tpu.memory_space<vmem>>, vector<22x16xf32>
    %c0_105 = arith.constant 0 : index
    %c6_106 = arith.constant 6 : index
    %517 = vector.load %arg5[%c0_105, %c6_106] : memref<22x22xf32, #tpu.memory_space<vmem>>, vector<22x16xf32>
    %c6_107 = arith.constant 6 : index
    %518 = memref.load %arg2[%c6_107] : memref<98xf32, #tpu.memory_space<smem>>
    %c55 = arith.constant 55 : index
    %519 = memref.load %arg2[%c55] : memref<98xf32, #tpu.memory_space<smem>>
    %520 = vector.extract_strided_slice %516 {offsets = [0, 0], sizes = [16, 16], strides = [1, 1]} : vector<22x16xf32> to vector<16x16xf32>
    %521 = vector.broadcast %518 : f32 to vector<16x16xf32>
    %522 = arith.mulf %520, %521 : vector<16x16xf32>
    %523 = arith.addf %501, %522 : vector<16x16xf32>
    %524 = vector.extract_strided_slice %517 {offsets = [0, 0], sizes = [16, 16], strides = [1, 1]} : vector<22x16xf32> to vector<16x16xf32>
    %525 = vector.broadcast %519 : f32 to vector<16x16xf32>
    %526 = arith.mulf %524, %525 : vector<16x16xf32>
    %527 = arith.addf %505, %526 : vector<16x16xf32>
    %c13_108 = arith.constant 13 : index
    %528 = memref.load %arg2[%c13_108] : memref<98xf32, #tpu.memory_space<smem>>
    %c62 = arith.constant 62 : index
    %529 = memref.load %arg2[%c62] : memref<98xf32, #tpu.memory_space<smem>>
    %530 = vector.extract_strided_slice %516 {offsets = [1, 0], sizes = [16, 16], strides = [1, 1]} : vector<22x16xf32> to vector<16x16xf32>
    %531 = vector.broadcast %528 : f32 to vector<16x16xf32>
    %532 = arith.mulf %530, %531 : vector<16x16xf32>
    %533 = arith.addf %511, %532 : vector<16x16xf32>
    %534 = vector.extract_strided_slice %517 {offsets = [1, 0], sizes = [16, 16], strides = [1, 1]} : vector<22x16xf32> to vector<16x16xf32>
    %535 = vector.broadcast %529 : f32 to vector<16x16xf32>
    %536 = arith.mulf %534, %535 : vector<16x16xf32>
    %537 = arith.addf %515, %536 : vector<16x16xf32>
    %c20 = arith.constant 20 : index
    %538 = memref.load %arg2[%c20] : memref<98xf32, #tpu.memory_space<smem>>
    %c69 = arith.constant 69 : index
    %539 = memref.load %arg2[%c69] : memref<98xf32, #tpu.memory_space<smem>>
    %540 = vector.extract_strided_slice %516 {offsets = [2, 0], sizes = [16, 16], strides = [1, 1]} : vector<22x16xf32> to vector<16x16xf32>
    %541 = vector.broadcast %538 : f32 to vector<16x16xf32>
    %542 = arith.mulf %540, %541 : vector<16x16xf32>
    %543 = arith.addf %523, %542 : vector<16x16xf32>
    %544 = vector.extract_strided_slice %517 {offsets = [2, 0], sizes = [16, 16], strides = [1, 1]} : vector<22x16xf32> to vector<16x16xf32>
    %545 = vector.broadcast %539 : f32 to vector<16x16xf32>
    %546 = arith.mulf %544, %545 : vector<16x16xf32>
    %547 = arith.addf %527, %546 : vector<16x16xf32>
    %c27 = arith.constant 27 : index
    %548 = memref.load %arg2[%c27] : memref<98xf32, #tpu.memory_space<smem>>
    %c76 = arith.constant 76 : index
    %549 = memref.load %arg2[%c76] : memref<98xf32, #tpu.memory_space<smem>>
    %550 = vector.extract_strided_slice %516 {offsets = [3, 0], sizes = [16, 16], strides = [1, 1]} : vector<22x16xf32> to vector<16x16xf32>
    %551 = vector.broadcast %548 : f32 to vector<16x16xf32>
    %552 = arith.mulf %550, %551 : vector<16x16xf32>
    %553 = arith.addf %533, %552 : vector<16x16xf32>
    %554 = vector.extract_strided_slice %517 {offsets = [3, 0], sizes = [16, 16], strides = [1, 1]} : vector<22x16xf32> to vector<16x16xf32>
    %555 = vector.broadcast %549 : f32 to vector<16x16xf32>
    %556 = arith.mulf %554, %555 : vector<16x16xf32>
    %557 = arith.addf %537, %556 : vector<16x16xf32>
    %c34 = arith.constant 34 : index
    %558 = memref.load %arg2[%c34] : memref<98xf32, #tpu.memory_space<smem>>
    %c83 = arith.constant 83 : index
    %559 = memref.load %arg2[%c83] : memref<98xf32, #tpu.memory_space<smem>>
    %560 = vector.extract_strided_slice %516 {offsets = [4, 0], sizes = [16, 16], strides = [1, 1]} : vector<22x16xf32> to vector<16x16xf32>
    %561 = vector.broadcast %558 : f32 to vector<16x16xf32>
    %562 = arith.mulf %560, %561 : vector<16x16xf32>
    %563 = arith.addf %543, %562 : vector<16x16xf32>
    %564 = vector.extract_strided_slice %517 {offsets = [4, 0], sizes = [16, 16], strides = [1, 1]} : vector<22x16xf32> to vector<16x16xf32>
    %565 = vector.broadcast %559 : f32 to vector<16x16xf32>
    %566 = arith.mulf %564, %565 : vector<16x16xf32>
    %567 = arith.addf %547, %566 : vector<16x16xf32>
    %c41 = arith.constant 41 : index
    %568 = memref.load %arg2[%c41] : memref<98xf32, #tpu.memory_space<smem>>
    %c90 = arith.constant 90 : index
    %569 = memref.load %arg2[%c90] : memref<98xf32, #tpu.memory_space<smem>>
    %570 = vector.extract_strided_slice %516 {offsets = [5, 0], sizes = [16, 16], strides = [1, 1]} : vector<22x16xf32> to vector<16x16xf32>
    %571 = vector.broadcast %568 : f32 to vector<16x16xf32>
    %572 = arith.mulf %570, %571 : vector<16x16xf32>
    %573 = arith.addf %553, %572 : vector<16x16xf32>
    %574 = vector.extract_strided_slice %517 {offsets = [5, 0], sizes = [16, 16], strides = [1, 1]} : vector<22x16xf32> to vector<16x16xf32>
    %575 = vector.broadcast %569 : f32 to vector<16x16xf32>
    %576 = arith.mulf %574, %575 : vector<16x16xf32>
    %577 = arith.addf %557, %576 : vector<16x16xf32>
    %c48 = arith.constant 48 : index
    %578 = memref.load %arg2[%c48] : memref<98xf32, #tpu.memory_space<smem>>
    %c97 = arith.constant 97 : index
    %579 = memref.load %arg2[%c97] : memref<98xf32, #tpu.memory_space<smem>>
    %580 = vector.extract_strided_slice %516 {offsets = [6, 0], sizes = [16, 16], strides = [1, 1]} : vector<22x16xf32> to vector<16x16xf32>
    %581 = vector.broadcast %578 : f32 to vector<16x16xf32>
    %582 = arith.mulf %580, %581 : vector<16x16xf32>
    %583 = arith.addf %563, %582 : vector<16x16xf32>
    %584 = vector.extract_strided_slice %517 {offsets = [6, 0], sizes = [16, 16], strides = [1, 1]} : vector<22x16xf32> to vector<16x16xf32>
    %585 = vector.broadcast %579 : f32 to vector<16x16xf32>
    %586 = arith.mulf %584, %585 : vector<16x16xf32>
    %587 = arith.addf %567, %586 : vector<16x16xf32>
    %588 = arith.addf %583, %587 : vector<16x16xf32>
    %589 = arith.addf %573, %577 : vector<16x16xf32>
    %590 = arith.addf %588, %589 : vector<16x16xf32>
    %591 = arith.negf %590 : vector<16x16xf32>
    %592 = math.exp %591 : vector<16x16xf32>
    %cst_109 = arith.constant 1.000000e+00 : f32
    %593 = vector.broadcast %cst_109 : f32 to vector<16x16xf32>
    %594 = arith.addf %593, %592 : vector<16x16xf32>
    %595 = arith.divf %593, %594 : vector<16x16xf32>
    %596 = vector.extract_strided_slice %595 {offsets = [0, 0], sizes = [1, 16], strides = [1, 1]} : vector<16x16xf32> to vector<1x16xf32>
    %c0_110 = arith.constant 0 : index
    %c0_111 = arith.constant 0 : index
    %597 = vector.load %arg6[%c0_110, %c0_111] : memref<1x256xf32, #tpu.memory_space<vmem>>, vector<1x16xf32>
    tpu.vector_store %arg6[%c0_110, %c0_111], %596 {strides = array<i32>} : memref<1x256xf32, #tpu.memory_space<vmem>>, vector<1x16xf32>,
    %598 = vector.extract_strided_slice %595 {offsets = [1, 0], sizes = [1, 16], strides = [1, 1]} : vector<16x16xf32> to vector<1x16xf32>
    %c0_112 = arith.constant 0 : index
    %c16_113 = arith.constant 16 : index
    %599 = vector.load %arg6[%c0_112, %c16_113] : memref<1x256xf32, #tpu.memory_space<vmem>>, vector<1x16xf32>
    tpu.vector_store %arg6[%c0_112, %c16_113], %598 {strides = array<i32>} : memref<1x256xf32, #tpu.memory_space<vmem>>, vector<1x16xf32>,
    %600 = vector.extract_strided_slice %595 {offsets = [2, 0], sizes = [1, 16], strides = [1, 1]} : vector<16x16xf32> to vector<1x16xf32>
    %c0_114 = arith.constant 0 : index
    %c32_115 = arith.constant 32 : index
    %601 = vector.load %arg6[%c0_114, %c32_115] : memref<1x256xf32, #tpu.memory_space<vmem>>, vector<1x16xf32>
    tpu.vector_store %arg6[%c0_114, %c32_115], %600 {strides = array<i32>} : memref<1x256xf32, #tpu.memory_space<vmem>>, vector<1x16xf32>,
    %602 = vector.extract_strided_slice %595 {offsets = [3, 0], sizes = [1, 16], strides = [1, 1]} : vector<16x16xf32> to vector<1x16xf32>
    %c0_116 = arith.constant 0 : index
    %c48_117 = arith.constant 48 : index
    %603 = vector.load %arg6[%c0_116, %c48_117] : memref<1x256xf32, #tpu.memory_space<vmem>>, vector<1x16xf32>
    tpu.vector_store %arg6[%c0_116, %c48_117], %602 {strides = array<i32>} : memref<1x256xf32, #tpu.memory_space<vmem>>, vector<1x16xf32>,
    %604 = vector.extract_strided_slice %595 {offsets = [4, 0], sizes = [1, 16], strides = [1, 1]} : vector<16x16xf32> to vector<1x16xf32>
    %c0_118 = arith.constant 0 : index
    %c64_119 = arith.constant 64 : index
    %605 = vector.load %arg6[%c0_118, %c64_119] : memref<1x256xf32, #tpu.memory_space<vmem>>, vector<1x16xf32>
    tpu.vector_store %arg6[%c0_118, %c64_119], %604 {strides = array<i32>} : memref<1x256xf32, #tpu.memory_space<vmem>>, vector<1x16xf32>,
    %606 = vector.extract_strided_slice %595 {offsets = [5, 0], sizes = [1, 16], strides = [1, 1]} : vector<16x16xf32> to vector<1x16xf32>
    %c0_120 = arith.constant 0 : index
    %c80_121 = arith.constant 80 : index
    %607 = vector.load %arg6[%c0_120, %c80_121] : memref<1x256xf32, #tpu.memory_space<vmem>>, vector<1x16xf32>
    tpu.vector_store %arg6[%c0_120, %c80_121], %606 {strides = array<i32>} : memref<1x256xf32, #tpu.memory_space<vmem>>, vector<1x16xf32>,
    %608 = vector.extract_strided_slice %595 {offsets = [6, 0], sizes = [1, 16], strides = [1, 1]} : vector<16x16xf32> to vector<1x16xf32>
    %c0_122 = arith.constant 0 : index
    %c96_123 = arith.constant 96 : index
    %609 = vector.load %arg6[%c0_122, %c96_123] : memref<1x256xf32, #tpu.memory_space<vmem>>, vector<1x16xf32>
    tpu.vector_store %arg6[%c0_122, %c96_123], %608 {strides = array<i32>} : memref<1x256xf32, #tpu.memory_space<vmem>>, vector<1x16xf32>,
    %610 = vector.extract_strided_slice %595 {offsets = [7, 0], sizes = [1, 16], strides = [1, 1]} : vector<16x16xf32> to vector<1x16xf32>
    %c0_124 = arith.constant 0 : index
    %c112 = arith.constant 112 : index
    %611 = vector.load %arg6[%c0_124, %c112] : memref<1x256xf32, #tpu.memory_space<vmem>>, vector<1x16xf32>
    tpu.vector_store %arg6[%c0_124, %c112], %610 {strides = array<i32>} : memref<1x256xf32, #tpu.memory_space<vmem>>, vector<1x16xf32>,
    %612 = vector.extract_strided_slice %595 {offsets = [8, 0], sizes = [1, 16], strides = [1, 1]} : vector<16x16xf32> to vector<1x16xf32>
    %c0_125 = arith.constant 0 : index
    %c128 = arith.constant 128 : index
    %613 = vector.load %arg6[%c0_125, %c128] : memref<1x256xf32, #tpu.memory_space<vmem>>, vector<1x16xf32>
    tpu.vector_store %arg6[%c0_125, %c128], %612 {strides = array<i32>} : memref<1x256xf32, #tpu.memory_space<vmem>>, vector<1x16xf32>,
    %614 = vector.extract_strided_slice %595 {offsets = [9, 0], sizes = [1, 16], strides = [1, 1]} : vector<16x16xf32> to vector<1x16xf32>
    %c0_126 = arith.constant 0 : index
    %c144 = arith.constant 144 : index
    %615 = vector.load %arg6[%c0_126, %c144] : memref<1x256xf32, #tpu.memory_space<vmem>>, vector<1x16xf32>
    tpu.vector_store %arg6[%c0_126, %c144], %614 {strides = array<i32>} : memref<1x256xf32, #tpu.memory_space<vmem>>, vector<1x16xf32>,
    %616 = vector.extract_strided_slice %595 {offsets = [10, 0], sizes = [1, 16], strides = [1, 1]} : vector<16x16xf32> to vector<1x16xf32>
    %c0_127 = arith.constant 0 : index
    %c160 = arith.constant 160 : index
    %617 = vector.load %arg6[%c0_127, %c160] : memref<1x256xf32, #tpu.memory_space<vmem>>, vector<1x16xf32>
    tpu.vector_store %arg6[%c0_127, %c160], %616 {strides = array<i32>} : memref<1x256xf32, #tpu.memory_space<vmem>>, vector<1x16xf32>,
    %618 = vector.extract_strided_slice %595 {offsets = [11, 0], sizes = [1, 16], strides = [1, 1]} : vector<16x16xf32> to vector<1x16xf32>
    %c0_128 = arith.constant 0 : index
    %c176 = arith.constant 176 : index
    %619 = vector.load %arg6[%c0_128, %c176] : memref<1x256xf32, #tpu.memory_space<vmem>>, vector<1x16xf32>
    tpu.vector_store %arg6[%c0_128, %c176], %618 {strides = array<i32>} : memref<1x256xf32, #tpu.memory_space<vmem>>, vector<1x16xf32>,
    %620 = vector.extract_strided_slice %595 {offsets = [12, 0], sizes = [1, 16], strides = [1, 1]} : vector<16x16xf32> to vector<1x16xf32>
    %c0_129 = arith.constant 0 : index
    %c192 = arith.constant 192 : index
    %621 = vector.load %arg6[%c0_129, %c192] : memref<1x256xf32, #tpu.memory_space<vmem>>, vector<1x16xf32>
    tpu.vector_store %arg6[%c0_129, %c192], %620 {strides = array<i32>} : memref<1x256xf32, #tpu.memory_space<vmem>>, vector<1x16xf32>,
    %622 = vector.extract_strided_slice %595 {offsets = [13, 0], sizes = [1, 16], strides = [1, 1]} : vector<16x16xf32> to vector<1x16xf32>
    %c0_130 = arith.constant 0 : index
    %c208 = arith.constant 208 : index
    %623 = vector.load %arg6[%c0_130, %c208] : memref<1x256xf32, #tpu.memory_space<vmem>>, vector<1x16xf32>
    tpu.vector_store %arg6[%c0_130, %c208], %622 {strides = array<i32>} : memref<1x256xf32, #tpu.memory_space<vmem>>, vector<1x16xf32>,
    %624 = vector.extract_strided_slice %595 {offsets = [14, 0], sizes = [1, 16], strides = [1, 1]} : vector<16x16xf32> to vector<1x16xf32>
    %c0_131 = arith.constant 0 : index
    %c224 = arith.constant 224 : index
    %625 = vector.load %arg6[%c0_131, %c224] : memref<1x256xf32, #tpu.memory_space<vmem>>, vector<1x16xf32>
    tpu.vector_store %arg6[%c0_131, %c224], %624 {strides = array<i32>} : memref<1x256xf32, #tpu.memory_space<vmem>>, vector<1x16xf32>,
    %626 = vector.extract_strided_slice %595 {offsets = [15, 0], sizes = [1, 16], strides = [1, 1]} : vector<16x16xf32> to vector<1x16xf32>
    %c0_132 = arith.constant 0 : index
    %c240 = arith.constant 240 : index
    %627 = vector.load %arg6[%c0_132, %c240] : memref<1x256xf32, #tpu.memory_space<vmem>>, vector<1x16xf32>
    tpu.vector_store %arg6[%c0_132, %c240], %626 {strides = array<i32>} : memref<1x256xf32, #tpu.memory_space<vmem>>, vector<1x16xf32>,
    %c0_133 = arith.constant 0 : index
    %c0_134 = arith.constant 0 : index
    %628 = vector.load %arg6[%c0_133, %c0_134] : memref<1x256xf32, #tpu.memory_space<vmem>>, vector<1x256xf32>
    %c0_135 = arith.constant 0 : index
    %c0_136 = arith.constant 0 : index
    %c0_137 = arith.constant 0 : index
    %629 = vector.load %arg1[%c0_135, %c0_136, %c0_137] : memref<1x4x256xf32, #tpu.memory_space<vmem>>, vector<1x4x256xf32>
    %630 = vector.shape_cast %629 : vector<1x4x256xf32> to vector<4x256xf32>
    %631 = vector.broadcast %628 : vector<1x256xf32> to vector<4x256xf32>
    %632 = arith.mulf %630, %631 : vector<4x256xf32>
    %c0_138 = arith.constant 0 : index
    %c0_139 = arith.constant 0 : index
    %c0_140 = arith.constant 0 : index
    %633 = vector.load %arg3[%c0_138, %c0_139, %c0_140] : memref<1x4x256xf32, #tpu.memory_space<vmem>>, vector<1x4x256xf32>
    %634 = vector.shape_cast %633 : vector<1x4x256xf32> to vector<4x256xf32>
    %635 = vector.shape_cast %632 : vector<4x256xf32> to vector<1x4x256xf32>
    tpu.vector_store %arg3[%c0_138, %c0_139, %c0_140], %635 {strides = array<i32>} : memref<1x4x256xf32, #tpu.memory_space<vmem>>, vector<1x4x256xf32>,
    return
  }
  func.func @transform_0(%arg0: i32) -> (i32, i32, i32) {
    %c0_i32 = arith.constant 0 : i32
    %c0_i32_0 = arith.constant 0 : i32
    %c0_i32_1 = arith.constant 0 : i32
    return %arg0, %c0_i32, %c0_i32_0 : i32, i32, i32
  }
  func.func @transform_1(%arg0: i32) -> i32 {
    %c0_i32 = arith.constant 0 : i32
    %c0_i32_0 = arith.constant 0 : i32
    return %c0_i32 : i32
  }
  func.func @transform_2(%arg0: i32) -> (i32, i32, i32) {
    %c0_i32 = arith.constant 0 : i32
    %c0_i32_0 = arith.constant 0 : i32
    %c0_i32_1 = arith.constant 0 : i32
    return %arg0, %c0_i32, %c0_i32_0 : i32, i32, i32
  }
}

</mosaic_0001>

<llo_original>
// kernel: tpu_custom_call.1
$region0: #{tpu_custom_call.1}
  #allocation0 [shape = 'u32[]', space=smem, size = 0x4, offset = 0x4, fixed_abs, tag = 'smem constant byte address 0x4 - core index']
  #allocation1 [shape = 'u32[144,128]{1,0:T(1,128)}', space=vmem, size = 0x12000, scoped, tag = 'internal scratch']
  #allocation2 [shape = 'f32[22,22]{1,0:T(8,128)}', space=vmem, size = 0x3000, scoped, tag = 'scratch operand']
  #allocation3 [shape = 'f32[22,22]{1,0:T(8,128)}', space=vmem, size = 0x3000, scoped, tag = 'scratch operand']
  #allocation4 [shape = 'f32[1,256]{1,0:T(1,128)}', space=vmem, size = 0x400, scoped, tag = 'scratch operand']
  %s0 = inlined_call_operand.hbm [shape: f32[2,4,256], index: 0, kind: input, shape index: {}]
  %s1 = inlined_call_operand.vmem [shape: f32[98], index: 1, kind: input, shape index: {}]
  %s2 = inlined_call_operand.hbm [shape: f32[2,4,256], index: 2, kind: output, shape index: {}]
  %s3 = sld [smem:[#allocation0]]
  $region49: #{tpu_custom_call.1} parent=0
    _
  %s5 = ssub.s32 1, %s3
  %s6 = scalar_select 0, %s5, %s3
  $region1: #{tpu_custom_call.1} parent=0
    #allocation5 [shape = 'u8[8192]{0}', space=vmem, size = 0x2000, scoped, tag = 'input window, operand 0']
    #allocation6 [shape = 's32[2]{0}', space=sflag, size = 0x8, scoped, tag = 'scoped memory for tpu_custom_call.1']
    #allocation7 [shape = 's32[2]{0}', space=sflag, size = 0x8, scoped, tag = 'scoped memory for tpu_custom_call.1']
    #allocation8 [shape = 's32[2]{0}', space=sflag, size = 0x8, scoped, tag = 'scoped memory for tpu_custom_call.1']
    #allocation9 [shape = 'u8[512]{0}', space=smem, size = 0x200, scoped, tag = 'input window, operand 1, single buffered']
    #allocation10 [shape = 'u8[8192]{0}', space=vmem, size = 0x2000, scoped, tag = 'output window, operand 0']
    %7 = vsyncpa [#allocation6], 0
    %s8 = scalar_lea.sflag [#allocation6], 1
    %9 = vsyncpa %s8, 0
    %10 = vsyncpa [#allocation8], 0
    %11 = vsyncpa [#allocation7], 0
    %s12 = scalar_lea.sflag [#allocation7], 1
    %13 = vsyncpa %s12, 0
    loop: start=0, step=1, limit=4
    $region2: #{tpu_custom_call.1} parent=1 // loop_pre_header
      _
    $region3: #{tpu_custom_call.1} parent=1 // loop_header
      %s15 = sphi 0, %s19
      %p16 = scmp.ge.s32.totalorder %s15, 4
      %s25 = sphi 0, %s27
      %s28 = sphi 0, %s25
      %s29 = sphi 0, %s28
      %s45 = sphi 0, %s29
      %s49 = sphi 0, %s49
      %s51 = sphi 0, %s49
      %s52 = sphi 0, %s51
      %s66 = sphi 0, %s52
      %s72 = sphi 0, %s74
      %s75 = sphi 0, %s72
      %s76 = sphi 0, %s75
      %s92 = sphi 0, %s76
    $region4: #{tpu_custom_call.1} parent=1 // loop_header_branch
      %18 = sbr.rel (%p16) target = $region8
    $region5: #{tpu_custom_call.1} parent=1 // loop_body
      %s20 = ssub.s32 %s15, 1
      %s21 = ssub.s32 %s15, 2
      %s22 = sadd.s32 %s15, 1
      %s23 = ssub.s32 %s15, %s22
      %p24 = scmp.eq.s32.totalorder %s23, 0
      %s26 = sadd.s32 %s25, 1
      %s27 = scalar_select %p24, %s25, %s26
      %p30 = pneg %p24
      %p31 = scmp.eq.s32.totalorder %s15, 1
      %p32 = por %p30, %p31
      %p33 = scmp.ne.s32.totalorder %s25, %s28
      %p34 = scmp.eq.s32.totalorder %s15, 0
      %p35 = por %p33, %p34
      %p36 = scmp.ne.s32.totalorder %s25, %s28
      %p37 = scmp.eq.s32.totalorder %s20, 1
      %p38 = por %p36, %p37
      %p39 = scmp.ne.s32.totalorder %s28, %s29
      %p40 = scmp.eq.s32.totalorder %s20, 0
      %p41 = por %p39, %p40
      %p42 = scmp.ne.s32.totalorder %s28, %s29
      %p43 = scmp.eq.s32.totalorder %s21, 1
      %p44 = por %p42, %p43
      %p46 = scmp.ne.s32.totalorder %s29, %s45
      %p47 = scmp.eq.s32.totalorder %s21, 0
      %p48 = por %p46, %p47
      %s50 = sadd.s32 %s49, 1
      %p53 = scmp.eq.s32.totalorder %s15, 1
      %p54 = scmp.ne.s32.totalorder %s49, %s51
      %p55 = scmp.eq.s32.totalorder %s15, 0
      %p56 = por %p54, %p55
      %p57 = scmp.ne.s32.totalorder %s49, %s51
      %p58 = scmp.eq.s32.totalorder %s20, 1
      %p59 = por %p57, %p58
      %p60 = scmp.ne.s32.totalorder %s51, %s52
      %p61 = scmp.eq.s32.totalorder %s20, 0
      %p62 = por %p60, %p61
      %p63 = scmp.ne.s32.totalorder %s51, %s52
      %p64 = scmp.eq.s32.totalorder %s21, 1
      %p65 = por %p63, %p64
      %p67 = scmp.ne.s32.totalorder %s52, %s66
      %p68 = scmp.eq.s32.totalorder %s21, 0
      %p69 = por %p67, %p68
      %s70 = ssub.s32 %s15, %s22
      %p71 = scmp.eq.s32.totalorder %s70, 0
      %s73 = sadd.s32 %s72, 1
      %s74 = scalar_select %p71, %s72, %s73
      %p77 = pneg %p71
      %p78 = scmp.eq.s32.totalorder %s15, 1
      %p79 = por %p77, %p78
      %p80 = scmp.ne.s32.totalorder %s72, %s75
      %p81 = scmp.eq.s32.totalorder %s15, 0
      %p82 = por %p80, %p81
      %p83 = scmp.ne.s32.totalorder %s72, %s75
      %p84 = scmp.eq.s32.totalorder %s20, 1
      %p85 = por %p83, %p84
      %p86 = scmp.ne.s32.totalorder %s75, %s76
      %p87 = scmp.eq.s32.totalorder %s20, 0
      %p88 = por %p86, %p87
      %p89 = scmp.ne.s32.totalorder %s75, %s76
      %p90 = scmp.eq.s32.totalorder %s21, 1
      %p91 = por %p89, %p90
      %p93 = scmp.ne.s32.totalorder %s76, %s92
      %p94 = scmp.eq.s32.totalorder %s21, 0
      %p95 = por %p93, %p94
      %p96 = scmp.le.s32.totalorder 1, %s15
      %p97 = scmp.lt.s32.totalorder %s15, 3
      %p98 = pnand %p96, %p97
      %p99 = pneg %p98
      // Predicated region
      $region9: #{tpu_custom_call.1} parent=5 // pred_check
        _
      $region10: #{tpu_custom_call.1} parent=5 // pred_check_branch
        %101 = sbr.rel (%p98) target = $region12
      $region11: #{tpu_custom_call.1} parent=5 // pred_region
        %s102 = ssub.s32 %s15, 1
        // Predicated region
        $region13: #{tpu_custom_call.1} parent=11 // pred_check
          %p103 = pneg %p62
        $region14: #{tpu_custom_call.1} parent=11 // pred_check_branch
          %105 = sbr.rel (%p103) target = $region16
        $region15: #{tpu_custom_call.1} parent=11 // pred_region
          %s107 = ssub.s32 16, 16
          %108 = vsyncadd [#allocation8], %s107
          %s110 = sshll.u32 %s1, 4
          %s111 = int_to_ptr.vmem [resolvable:$true] %s110
          %113 = dma.vmem_to_smem %s111, 16, [#allocation9], [#allocation8]
        $region16: #{tpu_custom_call.1} parent=11 // pred_fallthru
          _
      $region12: #{tpu_custom_call.1} parent=5 // pred_fallthru
        _
      %p114 = scmp.lt.s32.totalorder %s15, 2
      // Predicated region
      $region17: #{tpu_custom_call.1} parent=5 // pred_check
        %p115 = pneg %p114
      $region18: #{tpu_custom_call.1} parent=5 // pred_check_branch
        %117 = sbr.rel (%p115) target = $region20
      $region19: #{tpu_custom_call.1} parent=5 // pred_region
        // Predicated region
        $region21: #{tpu_custom_call.1} parent=19 // pred_check
          %p118 = pneg %p35
        $region22: #{tpu_custom_call.1} parent=19 // pred_check_branch
          %120 = sbr.rel (%p118) target = $region24
        $region23: #{tpu_custom_call.1} parent=19 // pred_region
          %s121 = sand.u32 %s25, 1
          %s122 = scalar_lea.sflag [#allocation6], %s121
          %s123 = sand.u32 %s25, 1
          %s124 = smul.addr %s123, 8
          %s125 = scalar_lea.vmem [#allocation5], %s124
          %s127 = ssub.s32 128, 128
          %128 = vsyncadd %s122, %s127
          %s129 = smul.addr %s15, 2
          %s130 = smul.addr %s129, 64
          %s131 = scalar_lea.hbm %s0, %s130
          %s133 = sshll.u32 %s125, 4
          %s134 = int_to_ptr.vmem [resolvable:$true] %s133
          %136 = dma.hbm_to_vmem [thread:$0]  %s131, 128, %s134, %s122
        $region24: #{tpu_custom_call.1} parent=19 // pred_fallthru
          _
      $region20: #{tpu_custom_call.1} parent=5 // pred_fallthru
        _
      %p137 = scmp.le.s32.totalorder 1, %s15
      %p138 = scmp.lt.s32.totalorder %s15, 3
      %p139 = pnand %p137, %p138
      %p140 = pneg %p139
      // Predicated region
      $region25: #{tpu_custom_call.1} parent=5 // pred_check
        _
      $region26: #{tpu_custom_call.1} parent=5 // pred_check_branch
        %142 = sbr.rel (%p139) target = $region28
      $region27: #{tpu_custom_call.1} parent=5 // pred_region
        %s143 = ssub.s32 %s15, 1
        %s144 = sand.u32 %s28, 1
        %s145 = scalar_lea.sflag [#allocation6], %s144
        %s146 = sand.u32 %s28, 1
        %s147 = smul.addr %s146, 8
        %s148 = scalar_lea.vmem [#allocation5], %s147
        // Predicated region
        $region29: #{tpu_custom_call.1} parent=27 // pred_check
          %p149 = pneg %p41
        $region30: #{tpu_custom_call.1} parent=27 // pred_check_branch
          %151 = sbr.rel (%p149) target = $region32
        $region31: #{tpu_custom_call.1} parent=27 // pred_region
          %152 = dma.done %s145, 128
        $region32: #{tpu_custom_call.1} parent=27 // pred_fallthru
          _
        // Predicated region
        $region33: #{tpu_custom_call.1} parent=27 // pred_check
          %p153 = pneg %p62
        $region34: #{tpu_custom_call.1} parent=27 // pred_check_branch
          %155 = sbr.rel (%p153) target = $region36
        $region35: #{tpu_custom_call.1} parent=27 // pred_region
          %156 = dma.done [#allocation8], 16
        $region36: #{tpu_custom_call.1} parent=27 // pred_fallthru
          _
        %157 = sfence
        %s158 = sand.u32 %s28, 1
        %s159 = scalar_lea.sflag [#allocation6], %s158
        %s160 = sand.u32 %s28, 1
        %s161 = smul.addr %s160, 8
        %s162 = scalar_lea.vmem [#allocation5], %s161
        %p163 = pneg %p41
        %p164 = pneg %p38
        %p165 = pneg %p62
        %p166 = pneg %p59
        %p167 = pneg %p88
        %p168 = pneg %p85
        %s169 = sand.u32 %s75, 1
        %s170 = scalar_lea.sflag [#allocation7], %s169
        %s171 = sand.u32 %s75, 1
        %s172 = smul.addr %s171, 8
        %s173 = scalar_lea.vmem [#allocation10], %s172
        %vm174 = vcmask 179200
        %175 = vst.msk [vmem:[#allocation2] sm:$0xff] %vm174, 0.0
        %176 = vst.msk [vmem:[#allocation2 + $0x8] sm:$0xff] %vm174, 0.0
        %vm177 = vcmask 177152
        %178 = vst.msk [vmem:[#allocation2 + $0x10] sm:$0x3f] %vm177, 0.0
        %179 = vst.msk [vmem:[#allocation3] sm:$0xff] %vm174, 0.0
        %180 = vst.msk [vmem:[#allocation3 + $0x8] sm:$0xff] %vm174, 0.0
        %181 = vst.msk [vmem:[#allocation3 + $0x10] sm:$0x3f] %vm177, 0.0
        %v182 = vld [vmem:[%s148] sm:$0xff]
        %v184 = vcombine.high %v182, %v182
        %vm186 = vcmask 1043456
        %v187 = vsel %vm186, %v182, 0.0
        %v188 = vrot.slane %v187, 4
        %v189 = vadd.f32 %v187, %v188
        %v190 = vrot.slane %v189, 2
        %v191 = vadd.f32 %v189, %v190
        %v192 = vrot.slane %v191, 1
        %v193 = vadd.f32 %v191, %v192
        %v194 = vsel %vm186, %v184, 0.0
        %v195 = vrot.slane %v194, 4
        %v196 = vadd.f32 %v194, %v195
        %v197 = vrot.slane %v196, 2
        %v198 = vadd.f32 %v196, %v197
        %v199 = vrot.slane %v198, 1
        %v200 = vadd.f32 %v198, %v199
        %v201 = vadd.f32 %v193, 0.0
        %v202 = vadd.f32 %v200, 0.0
        %v203 = vsel %vm186, %v182, -inf
        %v204 = vrot.slane %v203, 4
        %v205 = vmax.f32 %v203, %v204
        %v206 = vrot.slane %v205, 2
        %v207 = vmax.f32 %v205, %v206
        %v208 = vrot.slane %v207, 1
        %v209 = vmax.f32 %v207, %v208
        %v210 = vsel %vm186, %v184, -inf
        %v211 = vrot.slane %v210, 4
        %v212 = vmax.f32 %v210, %v211
        %v213 = vrot.slane %v212, 2
        %v214 = vmax.f32 %v212, %v213
        %v215 = vrot.slane %v214, 1
        %v216 = vmax.f32 %v214, %v215
        %v217 = vmul.f32 %v201, 0.25
        %v218 = vmul.f32 %v202, 0.25
        %220 = vrot.lane.b32.xlu0 %v217, 3
        %v221 = vpop.permute.xlu0 %220
        %vm223 = vcmask 147480
        %224 = vst.msk [vmem:[#allocation2 + $0x3] sm:$0x1] %vm223, %v221
        %226 = vrot.lane.b32.xlu0 %v209, 3
        %v227 = vpop.permute.xlu0 %226
        %229 = vst.msk [vmem:[#allocation3 + $0x3] sm:$0x1] %vm223, %v227
        %230 = vrot.lane.b32.xlu0 %v217, 115
        %v231 = vpop.permute.xlu0 %230
        %233 = vst.msk [vmem:[#allocation2 + $0x4] sm:$0x1] %vm223, %v231
        %234 = vrot.lane.b32.xlu0 %v209, 115
        %v235 = vpop.permute.xlu0 %234
        %237 = vst.msk [vmem:[#allocation3 + $0x4] sm:$0x1] %vm223, %v235
        %238 = vrot.lane.b32.xlu0 %v217, 99
        %v239 = vpop.permute.xlu0 %238
        %241 = vst.msk [vmem:[#allocation2 + $0x5] sm:$0x1] %vm223, %v239
        %242 = vrot.lane.b32.xlu0 %v209, 99
        %v243 = vpop.permute.xlu0 %242
        %245 = vst.msk [vmem:[#allocation3 + $0x5] sm:$0x1] %vm223, %v243
        %246 = vrot.lane.b32.xlu0 %v217, 83
        %v247 = vpop.permute.xlu0 %246
        %249 = vst.msk [vmem:[#allocation2 + $0x6] sm:$0x1] %vm223, %v247
        %250 = vrot.lane.b32.xlu0 %v209, 83
        %v251 = vpop.permute.xlu0 %250
        %253 = vst.msk [vmem:[#allocation3 + $0x6] sm:$0x1] %vm223, %v251
        %254 = vrot.lane.b32.xlu0 %v217, 67
        %v255 = vpop.permute.xlu0 %254
        %257 = vst.msk [vmem:[#allocation2 + $0x7] sm:$0x1] %vm223, %v255
        %258 = vrot.lane.b32.xlu0 %v209, 67
        %v259 = vpop.permute.xlu0 %258
        %261 = vst.msk [vmem:[#allocation3 + $0x7] sm:$0x1] %vm223, %v259
        %262 = vrot.lane.b32.xlu0 %v217, 51
        %v263 = vpop.permute.xlu0 %262
        %265 = vst.msk [vmem:[#allocation2 + $0x8] sm:$0x1] %vm223, %v263
        %266 = vrot.lane.b32.xlu0 %v209, 51
        %v267 = vpop.permute.xlu0 %266
        %269 = vst.msk [vmem:[#allocation3 + $0x8] sm:$0x1] %vm223, %v267
        %270 = vrot.lane.b32.xlu0 %v217, 35
        %v271 = vpop.permute.xlu0 %270
        %273 = vst.msk [vmem:[#allocation2 + $0x9] sm:$0x1] %vm223, %v271
        %274 = vrot.lane.b32.xlu0 %v209, 35
        %v275 = vpop.permute.xlu0 %274
        %277 = vst.msk [vmem:[#allocation3 + $0x9] sm:$0x1] %vm223, %v275
        %278 = vrot.lane.b32.xlu0 %v217, 19
        %v279 = vpop.permute.xlu0 %278
        %281 = vst.msk [vmem:[#allocation2 + $0xa] sm:$0x1] %vm223, %v279
        %282 = vrot.lane.b32.xlu0 %v209, 19
        %v283 = vpop.permute.xlu0 %282
        %285 = vst.msk [vmem:[#allocation3 + $0xa] sm:$0x1] %vm223, %v283
        %287 = vrot.lane.b32.xlu0 %v218, 3
        %v288 = vpop.permute.xlu0 %287
        %290 = vst.msk [vmem:[#allocation2 + $0xb] sm:$0x1] %vm223, %v288
        %292 = vrot.lane.b32.xlu0 %v216, 3
        %v293 = vpop.permute.xlu0 %292
        %295 = vst.msk [vmem:[#allocation3 + $0xb] sm:$0x1] %vm223, %v293
        %296 = vrot.lane.b32.xlu0 %v218, 115
        %v297 = vpop.permute.xlu0 %296
        %299 = vst.msk [vmem:[#allocation2 + $0xc] sm:$0x1] %vm223, %v297
        %300 = vrot.lane.b32.xlu0 %v216, 115
        %v301 = vpop.permute.xlu0 %300
        %303 = vst.msk [vmem:[#allocation3 + $0xc] sm:$0x1] %vm223, %v301
        %304 = vrot.lane.b32.xlu0 %v218, 99
        %v305 = vpop.permute.xlu0 %304
        %307 = vst.msk [vmem:[#allocation2 + $0xd] sm:$0x1] %vm223, %v305
        %308 = vrot.lane.b32.xlu0 %v216, 99
        %v309 = vpop.permute.xlu0 %308
        %311 = vst.msk [vmem:[#allocation3 + $0xd] sm:$0x1] %vm223, %v309
        %312 = vrot.lane.b32.xlu0 %v218, 83
        %v313 = vpop.permute.xlu0 %312
        %315 = vst.msk [vmem:[#allocation2 + $0xe] sm:$0x1] %vm223, %v313
        %316 = vrot.lane.b32.xlu0 %v216, 83
        %v317 = vpop.permute.xlu0 %316
        %319 = vst.msk [vmem:[#allocation3 + $0xe] sm:$0x1] %vm223, %v317
        %320 = vrot.lane.b32.xlu0 %v218, 67
        %v321 = vpop.permute.xlu0 %320
        %323 = vst.msk [vmem:[#allocation2 + $0xf] sm:$0x1] %vm223, %v321
        %324 = vrot.lane.b32.xlu0 %v216, 67
        %v325 = vpop.permute.xlu0 %324
        %327 = vst.msk [vmem:[#allocation3 + $0xf] sm:$0x1] %vm223, %v325
        %328 = vrot.lane.b32.xlu0 %v218, 51
        %v329 = vpop.permute.xlu0 %328
        %331 = vst.msk [vmem:[#allocation2 + $0x10] sm:$0x1] %vm223, %v329
        %332 = vrot.lane.b32.xlu0 %v216, 51
        %v333 = vpop.permute.xlu0 %332
        %335 = vst.msk [vmem:[#allocation3 + $0x10] sm:$0x1] %vm223, %v333
        %336 = vrot.lane.b32.xlu0 %v218, 35
        %v337 = vpop.permute.xlu0 %336
        %339 = vst.msk [vmem:[#allocation2 + $0x11] sm:$0x1] %vm223, %v337
        %340 = vrot.lane.b32.xlu0 %v216, 35
        %v341 = vpop.permute.xlu0 %340
        %343 = vst.msk [vmem:[#allocation3 + $0x11] sm:$0x1] %vm223, %v341
        %344 = vrot.lane.b32.xlu0 %v218, 19
        %v345 = vpop.permute.xlu0 %344
        %347 = vst.msk [vmem:[#allocation2 + $0x12] sm:$0x1] %vm223, %v345
        %348 = vrot.lane.b32.xlu0 %v216, 19
        %v349 = vpop.permute.xlu0 %348
        %351 = vst.msk [vmem:[#allocation3 + $0x12] sm:$0x1] %vm223, %v349
        %v352 = vld [vmem:[#allocation2] sm:$0xff]
        %v353 = vld [vmem:[#allocation2 + $0x8] sm:$0xff]
        %v354 = vld [vmem:[#allocation2 + $0x10] sm:$0x3f]
        %v355 = vld [vmem:[#allocation3] sm:$0xff]
        %v356 = vld [vmem:[#allocation3 + $0x8] sm:$0xff]
        %v357 = vld [vmem:[#allocation3 + $0x10] sm:$0x3f]
        %s358 = sld [smem:[#allocation9]]
        %s359 = sld [smem:[#allocation9 + $0x31]]
        %v360 = vstv %s358
        %v361 = vmul.f32 %v352, %v360
        %v362 = vmul.f32 %v353, %v360
        %v363 = vadd.f32 %v361, 0.0
        %v364 = vadd.f32 %v362, 0.0
        %v365 = vstv %s359
        %v366 = vmul.f32 %v355, %v365
        %v367 = vmul.f32 %v356, %v365
        %v368 = vadd.f32 %v366, 0.0
        %v369 = vadd.f32 %v367, 0.0
        %s370 = sld [smem:[#allocation9 + $0x7]]
        %s371 = sld [smem:[#allocation9 + $0x38]]
        %v372 = vstv %s370
        %v373 = vmul.f32 %v352, %v372
        %v374 = vmul.f32 %v353, %v372
        %v375 = vmul.f32 %v354, %v372
        %v376 = vadd.f32 %v373, 0.0
        %v377 = vadd.f32 %v374, 0.0
        %v378 = vadd.f32 %v375, 0.0
        %v379 = vstv %s371
        %v380 = vmul.f32 %v355, %v379
        %v381 = vmul.f32 %v356, %v379
        %v382 = vmul.f32 %v357, %v379
        %v383 = vadd.f32 %v380, 0.0
        %v384 = vadd.f32 %v381, 0.0
        %v385 = vadd.f32 %v382, 0.0
        %s386 = sld [smem:[#allocation9 + $0xe]]
        %s387 = sld [smem:[#allocation9 + $0x3f]]
        %v388 = vstv %s386
        %v389 = vmul.f32 %v352, %v388
        %v390 = vmul.f32 %v353, %v388
        %v391 = vmul.f32 %v354, %v388
        %vm395 = vcmask 1045504
        %v396 = vrot.slane %v389, 2
        %v397 = vrot.slane %v390, 2
        %v398 = vsel %vm395, %v396, %v397
        %v399 = vrot.slane %v391, 2
        %v400 = vsel %vm395, %v397, %v399
        %v403 = vadd.f32 %v363, %v398
        %v404 = vadd.f32 %v364, %v400
        %v405 = vstv %s387
        %v406 = vmul.f32 %v355, %v405
        %v407 = vmul.f32 %v356, %v405
        %v408 = vmul.f32 %v357, %v405
        %v412 = vrot.slane %v406, 2
        %v413 = vrot.slane %v407, 2
        %v414 = vsel %vm395, %v412, %v413
        %v415 = vrot.slane %v408, 2
        %v416 = vsel %vm395, %v413, %v415
        %v419 = vadd.f32 %v368, %v414
        %v420 = vadd.f32 %v369, %v416
        %s421 = sld [smem:[#allocation9 + $0x15]]
        %s422 = sld [smem:[#allocation9 + $0x46]]
        %v423 = vstv %s421
        %v424 = vmul.f32 %v352, %v423
        %v425 = vmul.f32 %v353, %v423
        %v426 = vmul.f32 %v354, %v423
        %v430 = vrot.slane %v424, 2
        %v431 = vrot.slane %v425, 2
        %v432 = vsel %vm395, %v430, %v431
        %v433 = vrot.slane %v426, 2
        %v434 = vsel %vm395, %v431, %v433
        %v438 = vadd.f32 %v376, %v432
        %v439 = vadd.f32 %v377, %v434
        %v440 = vadd.f32 %v378, %v433
        %v441 = vstv %s422
        %v442 = vmul.f32 %v355, %v441
        %v443 = vmul.f32 %v356, %v441
        %v444 = vmul.f32 %v357, %v441
        %v448 = vrot.slane %v442, 2
        %v449 = vrot.slane %v443, 2
        %v450 = vsel %vm395, %v448, %v449
        %v451 = vrot.slane %v444, 2
        %v452 = vsel %vm395, %v449, %v451
        %v456 = vadd.f32 %v383, %v450
        %v457 = vadd.f32 %v384, %v452
        %v458 = vadd.f32 %v385, %v451
        %s459 = sld [smem:[#allocation9 + $0x1c]]
        %s460 = sld [smem:[#allocation9 + $0x4d]]
        %v461 = vstv %s459
        %v462 = vmul.f32 %v352, %v461
        %v463 = vmul.f32 %v353, %v461
        %v464 = vmul.f32 %v354, %v461
        %v468 = vrot.slane %v462, 4
        %v469 = vrot.slane %v463, 4
        %v470 = vsel %vm186, %v468, %v469
        %v471 = vrot.slane %v464, 4
        %v472 = vsel %vm186, %v469, %v471
        %v475 = vadd.f32 %v403, %v470
        %v476 = vadd.f32 %v404, %v472
        %v477 = vstv %s460
        %v478 = vmul.f32 %v355, %v477
        %v479 = vmul.f32 %v356, %v477
        %v480 = vmul.f32 %v357, %v477
        %v484 = vrot.slane %v478, 4
        %v485 = vrot.slane %v479, 4
        %v486 = vsel %vm186, %v484, %v485
        %v487 = vrot.slane %v480, 4
        %v488 = vsel %vm186, %v485, %v487
        %v491 = vadd.f32 %v419, %v486
        %v492 = vadd.f32 %v420, %v488
        %s493 = sld [smem:[#allocation9 + $0x23]]
        %s494 = sld [smem:[#allocation9 + $0x54]]
        %v495 = vstv %s493
        %v496 = vmul.f32 %v352, %v495
        %v497 = vmul.f32 %v353, %v495
        %v498 = vmul.f32 %v354, %v495
        %v502 = vrot.slane %v496, 4
        %v503 = vrot.slane %v497, 4
        %v504 = vsel %vm186, %v502, %v503
        %v505 = vrot.slane %v498, 4
        %v506 = vsel %vm186, %v503, %v505
        %v510 = vadd.f32 %v438, %v504
        %v511 = vadd.f32 %v439, %v506
        %v512 = vadd.f32 %v440, %v505
        %v513 = vstv %s494
        %v514 = vmul.f32 %v355, %v513
        %v515 = vmul.f32 %v356, %v513
        %v516 = vmul.f32 %v357, %v513
        %v520 = vrot.slane %v514, 4
        %v521 = vrot.slane %v515, 4
        %v522 = vsel %vm186, %v520, %v521
        %v523 = vrot.slane %v516, 4
        %v524 = vsel %vm186, %v521, %v523
        %v528 = vadd.f32 %v456, %v522
        %v529 = vadd.f32 %v457, %v524
        %v530 = vadd.f32 %v458, %v523
        %s531 = sld [smem:[#allocation9 + $0x2a]]
        %s532 = sld [smem:[#allocation9 + $0x5b]]
        %v533 = vstv %s531
        %v534 = vmul.f32 %v352, %v533
        %v535 = vmul.f32 %v353, %v533
        %v536 = vmul.f32 %v354, %v533
        %vm540 = vcmask 1041408
        %v541 = vrot.slane %v534, 6
        %v542 = vrot.slane %v535, 6
        %v543 = vsel %vm540, %v541, %v542
        %v544 = vrot.slane %v536, 6
        %v545 = vsel %vm540, %v542, %v544
        %v548 = vadd.f32 %v475, %v543
        %v549 = vadd.f32 %v476, %v545
        %v550 = vstv %s532
        %v551 = vmul.f32 %v355, %v550
        %v552 = vmul.f32 %v356, %v550
        %v553 = vmul.f32 %v357, %v550
        %v557 = vrot.slane %v551, 6
        %v558 = vrot.slane %v552, 6
        %v559 = vsel %vm540, %v557, %v558
        %v560 = vrot.slane %v553, 6
        %v561 = vsel %vm540, %v558, %v560
        %v564 = vadd.f32 %v491, %v559
        %v565 = vadd.f32 %v492, %v561
        %s566 = sld [smem:[#allocation9 + $0x1]]
        %s567 = sld [smem:[#allocation9 + $0x32]]
        %v568 = vstv %s566
        %v569 = vmul.f32 %v352, %v568
        %v570 = vmul.f32 %v353, %v568
        %vm573 = vcmask 1040384
        %v574 = vrot.slane %v569, 7
        %v575 = vrot.slane %v570, 7
        %v576 = vsel %vm573, %v574, %v575
        %577 = vrot.lane.b32.xlu0 %v574, 127
        %v578 = vpop.permute.xlu0 %577
        %579 = vrot.lane.b32.xlu0 %v576, 127
        %v580 = vpop.permute.xlu0 %579
        %581 = vrot.lane.b32.xlu0 %v575, 127
        %v582 = vpop.permute.xlu0 %581
        %v586 = vadd.f32 %v510, %v578
        %v587 = vadd.f32 %v511, %v580
        %v588 = vadd.f32 %v512, %v582
        %v589 = vstv %s567
        %v590 = vmul.f32 %v355, %v589
        %v591 = vmul.f32 %v356, %v589
        %v594 = vrot.slane %v590, 7
        %v595 = vrot.slane %v591, 7
        %v596 = vsel %vm573, %v594, %v595
        %597 = vrot.lane.b32.xlu0 %v594, 127
        %v598 = vpop.permute.xlu0 %597
        %599 = vrot.lane.b32.xlu0 %v596, 127
        %v600 = vpop.permute.xlu0 %599
        %601 = vrot.lane.b32.xlu0 %v595, 127
        %v602 = vpop.permute.xlu0 %601
        %v606 = vadd.f32 %v528, %v598
        %v607 = vadd.f32 %v529, %v600
        %v608 = vadd.f32 %v530, %v602
        %s609 = sld [smem:[#allocation9 + $0x8]]
        %s610 = sld [smem:[#allocation9 + $0x39]]
        %v611 = vstv %s609
        %v612 = vmul.f32 %v352, %v611
        %v613 = vmul.f32 %v353, %v611
        %v614 = vmul.f32 %v354, %v611
        %vm618 = vcmask 1046528
        %v619 = vrot.slane %v612, 1
        %v620 = vrot.slane %v613, 1
        %v621 = vsel %vm618, %v619, %v620
        %v622 = vrot.slane %v614, 1
        %v623 = vsel %vm618, %v620, %v622
        %624 = vrot.lane.b32.xlu0 %v621, 127
        %v625 = vpop.permute.xlu0 %624
        %626 = vrot.lane.b32.xlu0 %v623, 127
        %v627 = vpop.permute.xlu0 %626
        %v630 = vadd.f32 %v548, %v625
        %v631 = vadd.f32 %v549, %v627
        %v632 = vstv %s610
        %v633 = vmul.f32 %v355, %v632
        %v634 = vmul.f32 %v356, %v632
        %v635 = vmul.f32 %v357, %v632
        %v639 = vrot.slane %v633, 1
        %v640 = vrot.slane %v634, 1
        %v641 = vsel %vm618, %v639, %v640
        %v642 = vrot.slane %v635, 1
        %v643 = vsel %vm618, %v640, %v642
        %644 = vrot.lane.b32.xlu0 %v641, 127
        %v645 = vpop.permute.xlu0 %644
        %646 = vrot.lane.b32.xlu0 %v643, 127
        %v647 = vpop.permute.xlu0 %646
        %v650 = vadd.f32 %v564, %v645
        %v651 = vadd.f32 %v565, %v647
        %s652 = sld [smem:[#allocation9 + $0xf]]
        %s653 = sld [smem:[#allocation9 + $0x40]]
        %v654 = vstv %s652
        %v655 = vmul.f32 %v352, %v654
        %v656 = vmul.f32 %v353, %v654
        %v657 = vmul.f32 %v354, %v654
        %v661 = vrot.slane %v655, 1
        %v662 = vrot.slane %v656, 1
        %v663 = vsel %vm618, %v661, %v662
        %v664 = vrot.slane %v657, 1
        %v665 = vsel %vm618, %v662, %v664
        %666 = vrot.lane.b32.xlu0 %v663, 127
        %v667 = vpop.permute.xlu0 %666
        %668 = vrot.lane.b32.xlu0 %v665, 127
        %v669 = vpop.permute.xlu0 %668
        %670 = vrot.lane.b32.xlu0 %v664, 127
        %v671 = vpop.permute.xlu0 %670
        %v675 = vadd.f32 %v586, %v667
        %v676 = vadd.f32 %v587, %v669
        %v677 = vadd.f32 %v588, %v671
        %v678 = vstv %s653
        %v679 = vmul.f32 %v355, %v678
        %v680 = vmul.f32 %v356, %v678
        %v681 = vmul.f32 %v357, %v678
        %v685 = vrot.slane %v679, 1
        %v686 = vrot.slane %v680, 1
        %v687 = vsel %vm618, %v685, %v686
        %v688 = vrot.slane %v681, 1
        %v689 = vsel %vm618, %v686, %v688
        %690 = vrot.lane.b32.xlu0 %v687, 127
        %v691 = vpop.permute.xlu0 %690
        %692 = vrot.lane.b32.xlu0 %v689, 127
        %v693 = vpop.permute.xlu0 %692
        %694 = vrot.lane.b32.xlu0 %v688, 127
        %v695 = vpop.permute.xlu0 %694
        %v699 = vadd.f32 %v606, %v691
        %v700 = vadd.f32 %v607, %v693
        %v701 = vadd.f32 %v608, %v695
        %s702 = sld [smem:[#allocation9 + $0x16]]
        %s703 = sld [smem:[#allocation9 + $0x47]]
        %v704 = vstv %s702
        %v705 = vmul.f32 %v352, %v704
        %v706 = vmul.f32 %v353, %v704
        %v707 = vmul.f32 %v354, %v704
        %vm711 = vcmask 1044480
        %v712 = vrot.slane %v705, 3
        %v713 = vrot.slane %v706, 3
        %v714 = vsel %vm711, %v712, %v713
        %v715 = vrot.slane %v707, 3
        %v716 = vsel %vm711, %v713, %v715
        %717 = vrot.lane.b32.xlu0 %v714, 127
        %v718 = vpop.permute.xlu0 %717
        %719 = vrot.lane.b32.xlu0 %v716, 127
        %v720 = vpop.permute.xlu0 %719
        %v723 = vadd.f32 %v630, %v718
        %v724 = vadd.f32 %v631, %v720
        %v725 = vstv %s703
        %v726 = vmul.f32 %v355, %v725
        %v727 = vmul.f32 %v356, %v725
        %v728 = vmul.f32 %v357, %v725
        %v732 = vrot.slane %v726, 3
        %v733 = vrot.slane %v727, 3
        %v734 = vsel %vm711, %v732, %v733
        %v735 = vrot.slane %v728, 3
        %v736 = vsel %vm711, %v733, %v735
        %737 = vrot.lane.b32.xlu0 %v734, 127
        %v738 = vpop.permute.xlu0 %737
        %739 = vrot.lane.b32.xlu0 %v736, 127
        %v740 = vpop.permute.xlu0 %739
        %v743 = vadd.f32 %v650, %v738
        %v744 = vadd.f32 %v651, %v740
        %s745 = sld [smem:[#allocation9 + $0x1d]]
        %s746 = sld [smem:[#allocation9 + $0x4e]]
        %v747 = vstv %s745
        %v748 = vmul.f32 %v352, %v747
        %v749 = vmul.f32 %v353, %v747
        %v750 = vmul.f32 %v354, %v747
        %v754 = vrot.slane %v748, 3
        %v755 = vrot.slane %v749, 3
        %v756 = vsel %vm711, %v754, %v755
        %v757 = vrot.slane %v750, 3
        %v758 = vsel %vm711, %v755, %v757
        %759 = vrot.lane.b32.xlu0 %v756, 127
        %v760 = vpop.permute.xlu0 %759
        %761 = vrot.lane.b32.xlu0 %v758, 127
        %v762 = vpop.permute.xlu0 %761
        %763 = vrot.lane.b32.xlu0 %v757, 127
        %v764 = vpop.permute.xlu0 %763
        %v768 = vadd.f32 %v675, %v760
        %v769 = vadd.f32 %v676, %v762
        %v770 = vadd.f32 %v677, %v764
        %v771 = vstv %s746
        %v772 = vmul.f32 %v355, %v771
        %v773 = vmul.f32 %v356, %v771
        %v774 = vmul.f32 %v357, %v771
        %v778 = vrot.slane %v772, 3
        %v779 = vrot.slane %v773, 3
        %v780 = vsel %vm711, %v778, %v779
        %v781 = vrot.slane %v774, 3
        %v782 = vsel %vm711, %v779, %v781
        %783 = vrot.lane.b32.xlu0 %v780, 127
        %v784 = vpop.permute.xlu0 %783
        %785 = vrot.lane.b32.xlu0 %v782, 127
        %v786 = vpop.permute.xlu0 %785
        %787 = vrot.lane.b32.xlu0 %v781, 127
        %v788 = vpop.permute.xlu0 %787
        %v792 = vadd.f32 %v699, %v784
        %v793 = vadd.f32 %v700, %v786
        %v794 = vadd.f32 %v701, %v788
        %s795 = sld [smem:[#allocation9 + $0x24]]
        %s796 = sld [smem:[#allocation9 + $0x55]]
        %v797 = vstv %s795
        %v798 = vmul.f32 %v352, %v797
        %v799 = vmul.f32 %v353, %v797
        %v800 = vmul.f32 %v354, %v797
        %vm804 = vcmask 1042432
        %v805 = vrot.slane %v798, 5
        %v806 = vrot.slane %v799, 5
        %v807 = vsel %vm804, %v805, %v806
        %v808 = vrot.slane %v800, 5
        %v809 = vsel %vm804, %v806, %v808
        %810 = vrot.lane.b32.xlu0 %v807, 127
        %v811 = vpop.permute.xlu0 %810
        %812 = vrot.lane.b32.xlu0 %v809, 127
        %v813 = vpop.permute.xlu0 %812
        %v816 = vadd.f32 %v723, %v811
        %v817 = vadd.f32 %v724, %v813
        %v818 = vstv %s796
        %v819 = vmul.f32 %v355, %v818
        %v820 = vmul.f32 %v356, %v818
        %v821 = vmul.f32 %v357, %v818
        %v825 = vrot.slane %v819, 5
        %v826 = vrot.slane %v820, 5
        %v827 = vsel %vm804, %v825, %v826
        %v828 = vrot.slane %v821, 5
        %v829 = vsel %vm804, %v826, %v828
        %830 = vrot.lane.b32.xlu0 %v827, 127
        %v831 = vpop.permute.xlu0 %830
        %832 = vrot.lane.b32.xlu0 %v829, 127
        %v833 = vpop.permute.xlu0 %832
        %v836 = vadd.f32 %v743, %v831
        %v837 = vadd.f32 %v744, %v833
        %s838 = sld [smem:[#allocation9 + $0x2b]]
        %s839 = sld [smem:[#allocation9 + $0x5c]]
        %v840 = vstv %s838
        %v841 = vmul.f32 %v352, %v840
        %v842 = vmul.f32 %v353, %v840
        %v843 = vmul.f32 %v354, %v840
        %v847 = vrot.slane %v841, 5
        %v848 = vrot.slane %v842, 5
        %v849 = vsel %vm804, %v847, %v848
        %v850 = vrot.slane %v843, 5
        %v851 = vsel %vm804, %v848, %v850
        %852 = vrot.lane.b32.xlu0 %v849, 127
        %v853 = vpop.permute.xlu0 %852
        %854 = vrot.lane.b32.xlu0 %v851, 127
        %v855 = vpop.permute.xlu0 %854
        %856 = vrot.lane.b32.xlu0 %v850, 127
        %v857 = vpop.permute.xlu0 %856
        %v861 = vadd.f32 %v768, %v853
        %v862 = vadd.f32 %v769, %v855
        %v863 = vadd.f32 %v770, %v857
        %v864 = vstv %s839
        %v865 = vmul.f32 %v355, %v864
        %v866 = vmul.f32 %v356, %v864
        %v867 = vmul.f32 %v357, %v864
        %v871 = vrot.slane %v865, 5
        %v872 = vrot.slane %v866, 5
        %v873 = vsel %vm804, %v871, %v872
        %v874 = vrot.slane %v867, 5
        %v875 = vsel %vm804, %v872, %v874
        %876 = vrot.lane.b32.xlu0 %v873, 127
        %v877 = vpop.permute.xlu0 %876
        %878 = vrot.lane.b32.xlu0 %v875, 127
        %v879 = vpop.permute.xlu0 %878
        %880 = vrot.lane.b32.xlu0 %v874, 127
        %v881 = vpop.permute.xlu0 %880
        %v885 = vadd.f32 %v792, %v877
        %v886 = vadd.f32 %v793, %v879
        %v887 = vadd.f32 %v794, %v881
        %s888 = sld [smem:[#allocation9 + $0x2]]
        %s889 = sld [smem:[#allocation9 + $0x33]]
        %v890 = vstv %s888
        %v891 = vmul.f32 %v352, %v890
        %v892 = vmul.f32 %v353, %v890
        %895 = vrot.lane.b32.xlu0 %v891, 126
        %v896 = vpop.permute.xlu0 %895
        %897 = vrot.lane.b32.xlu0 %v892, 126
        %v898 = vpop.permute.xlu0 %897
        %v901 = vadd.f32 %v816, %v896
        %v902 = vadd.f32 %v817, %v898
        %v903 = vstv %s889
        %v904 = vmul.f32 %v355, %v903
        %v905 = vmul.f32 %v356, %v903
        %908 = vrot.lane.b32.xlu0 %v904, 126
        %v909 = vpop.permute.xlu0 %908
        %910 = vrot.lane.b32.xlu0 %v905, 126
        %v911 = vpop.permute.xlu0 %910
        %v914 = vadd.f32 %v836, %v909
        %v915 = vadd.f32 %v837, %v911
        %s916 = sld [smem:[#allocation9 + $0x9]]
        %s917 = sld [smem:[#allocation9 + $0x3a]]
        %v918 = vstv %s916
        %v919 = vmul.f32 %v352, %v918
        %v920 = vmul.f32 %v353, %v918
        %v921 = vmul.f32 %v354, %v918
        %925 = vrot.lane.b32.xlu0 %v919, 126
        %v926 = vpop.permute.xlu0 %925
        %927 = vrot.lane.b32.xlu0 %v920, 126
        %v928 = vpop.permute.xlu0 %927
        %929 = vrot.lane.b32.xlu0 %v921, 126
        %v930 = vpop.permute.xlu0 %929
        %v934 = vadd.f32 %v861, %v926
        %v935 = vadd.f32 %v862, %v928
        %v936 = vadd.f32 %v863, %v930
        %v937 = vstv %s917
        %v938 = vmul.f32 %v355, %v937
        %v939 = vmul.f32 %v356, %v937
        %v940 = vmul.f32 %v357, %v937
        %944 = vrot.lane.b32.xlu0 %v938, 126
        %v945 = vpop.permute.xlu0 %944
        %946 = vrot.lane.b32.xlu0 %v939, 126
        %v947 = vpop.permute.xlu0 %946
        %948 = vrot.lane.b32.xlu0 %v940, 126
        %v949 = vpop.permute.xlu0 %948
        %v953 = vadd.f32 %v885, %v945
        %v954 = vadd.f32 %v886, %v947
        %v955 = vadd.f32 %v887, %v949
        %s956 = sld [smem:[#allocation9 + $0x10]]
        %s957 = sld [smem:[#allocation9 + $0x41]]
        %v958 = vstv %s956
        %v959 = vmul.f32 %v352, %v958
        %v960 = vmul.f32 %v353, %v958
        %v961 = vmul.f32 %v354, %v958
        %v965 = vrot.slane %v959, 2
        %v966 = vrot.slane %v960, 2
        %v967 = vsel %vm395, %v965, %v966
        %v968 = vrot.slane %v961, 2
        %v969 = vsel %vm395, %v966, %v968
        %970 = vrot.lane.b32.xlu0 %v967, 126
        %v971 = vpop.permute.xlu0 %970
        %972 = vrot.lane.b32.xlu0 %v969, 126
        %v973 = vpop.permute.xlu0 %972
        %v976 = vadd.f32 %v901, %v971
        %v977 = vadd.f32 %v902, %v973
        %v978 = vstv %s957
        %v979 = vmul.f32 %v355, %v978
        %v980 = vmul.f32 %v356, %v978
        %v981 = vmul.f32 %v357, %v978
        %v985 = vrot.slane %v979, 2
        %v986 = vrot.slane %v980, 2
        %v987 = vsel %vm395, %v985, %v986
        %v988 = vrot.slane %v981, 2
        %v989 = vsel %vm395, %v986, %v988
        %990 = vrot.lane.b32.xlu0 %v987, 126
        %v991 = vpop.permute.xlu0 %990
        %992 = vrot.lane.b32.xlu0 %v989, 126
        %v993 = vpop.permute.xlu0 %992
        %v996 = vadd.f32 %v914, %v991
        %v997 = vadd.f32 %v915, %v993
        %s998 = sld [smem:[#allocation9 + $0x17]]
        %s999 = sld [smem:[#allocation9 + $0x48]]
        %v1000 = vstv %s998
        %v1001 = vmul.f32 %v352, %v1000
        %v1002 = vmul.f32 %v353, %v1000
        %v1003 = vmul.f32 %v354, %v1000
        %v1007 = vrot.slane %v1001, 2
        %v1008 = vrot.slane %v1002, 2
        %v1009 = vsel %vm395, %v1007, %v1008
        %v1010 = vrot.slane %v1003, 2
        %v1011 = vsel %vm395, %v1008, %v1010
        %1012 = vrot.lane.b32.xlu0 %v1009, 126
        %v1013 = vpop.permute.xlu0 %1012
        %1014 = vrot.lane.b32.xlu0 %v1011, 126
        %v1015 = vpop.permute.xlu0 %1014
        %1016 = vrot.lane.b32.xlu0 %v1010, 126
        %v1017 = vpop.permute.xlu0 %1016
        %v1021 = vadd.f32 %v934, %v1013
        %v1022 = vadd.f32 %v935, %v1015
        %v1023 = vadd.f32 %v936, %v1017
        %v1024 = vstv %s999
        %v1025 = vmul.f32 %v355, %v1024
        %v1026 = vmul.f32 %v356, %v1024
        %v1027 = vmul.f32 %v357, %v1024
        %v1031 = vrot.slane %v1025, 2
        %v1032 = vrot.slane %v1026, 2
        %v1033 = vsel %vm395, %v1031, %v1032
        %v1034 = vrot.slane %v1027, 2
        %v1035 = vsel %vm395, %v1032, %v1034
        %1036 = vrot.lane.b32.xlu0 %v1033, 126
        %v1037 = vpop.permute.xlu0 %1036
        %1038 = vrot.lane.b32.xlu0 %v1035, 126
        %v1039 = vpop.permute.xlu0 %1038
        %1040 = vrot.lane.b32.xlu0 %v1034, 126
        %v1041 = vpop.permute.xlu0 %1040
        %v1045 = vadd.f32 %v953, %v1037
        %v1046 = vadd.f32 %v954, %v1039
        %v1047 = vadd.f32 %v955, %v1041
        %s1048 = sld [smem:[#allocation9 + $0x1e]]
        %s1049 = sld [smem:[#allocation9 + $0x4f]]
        %v1050 = vstv %s1048
        %v1051 = vmul.f32 %v352, %v1050
        %v1052 = vmul.f32 %v353, %v1050
        %v1053 = vmul.f32 %v354, %v1050
        %v1057 = vrot.slane %v1051, 4
        %v1058 = vrot.slane %v1052, 4
        %v1059 = vsel %vm186, %v1057, %v1058
        %v1060 = vrot.slane %v1053, 4
        %v1061 = vsel %vm186, %v1058, %v1060
        %1062 = vrot.lane.b32.xlu0 %v1059, 126
        %v1063 = vpop.permute.xlu0 %1062
        %1064 = vrot.lane.b32.xlu0 %v1061, 126
        %v1065 = vpop.permute.xlu0 %1064
        %v1068 = vadd.f32 %v976, %v1063
        %v1069 = vadd.f32 %v977, %v1065
        %v1070 = vstv %s1049
        %v1071 = vmul.f32 %v355, %v1070
        %v1072 = vmul.f32 %v356, %v1070
        %v1073 = vmul.f32 %v357, %v1070
        %v1077 = vrot.slane %v1071, 4
        %v1078 = vrot.slane %v1072, 4
        %v1079 = vsel %vm186, %v1077, %v1078
        %v1080 = vrot.slane %v1073, 4
        %v1081 = vsel %vm186, %v1078, %v1080
        %1082 = vrot.lane.b32.xlu0 %v1079, 126
        %v1083 = vpop.permute.xlu0 %1082
        %1084 = vrot.lane.b32.xlu0 %v1081, 126
        %v1085 = vpop.permute.xlu0 %1084
        %v1088 = vadd.f32 %v996, %v1083
        %v1089 = vadd.f32 %v997, %v1085
        %s1090 = sld [smem:[#allocation9 + $0x25]]
        %s1091 = sld [smem:[#allocation9 + $0x56]]
        %v1092 = vstv %s1090
        %v1093 = vmul.f32 %v352, %v1092
        %v1094 = vmul.f32 %v353, %v1092
        %v1095 = vmul.f32 %v354, %v1092
        %v1099 = vrot.slane %v1093, 4
        %v1100 = vrot.slane %v1094, 4
        %v1101 = vsel %vm186, %v1099, %v1100
        %v1102 = vrot.slane %v1095, 4
        %v1103 = vsel %vm186, %v1100, %v1102
        %1104 = vrot.lane.b32.xlu0 %v1101, 126
        %v1105 = vpop.permute.xlu0 %1104
        %1106 = vrot.lane.b32.xlu0 %v1103, 126
        %v1107 = vpop.permute.xlu0 %1106
        %1108 = vrot.lane.b32.xlu0 %v1102, 126
        %v1109 = vpop.permute.xlu0 %1108
        %v1113 = vadd.f32 %v1021, %v1105
        %v1114 = vadd.f32 %v1022, %v1107
        %v1115 = vadd.f32 %v1023, %v1109
        %v1116 = vstv %s1091
        %v1117 = vmul.f32 %v355, %v1116
        %v1118 = vmul.f32 %v356, %v1116
        %v1119 = vmul.f32 %v357, %v1116
        %v1123 = vrot.slane %v1117, 4
        %v1124 = vrot.slane %v1118, 4
        %v1125 = vsel %vm186, %v1123, %v1124
        %v1126 = vrot.slane %v1119, 4
        %v1127 = vsel %vm186, %v1124, %v1126
        %1128 = vrot.lane.b32.xlu0 %v1125, 126
        %v1129 = vpop.permute.xlu0 %1128
        %1130 = vrot.lane.b32.xlu0 %v1127, 126
        %v1131 = vpop.permute.xlu0 %1130
        %1132 = vrot.lane.b32.xlu0 %v1126, 126
        %v1133 = vpop.permute.xlu0 %1132
        %v1137 = vadd.f32 %v1045, %v1129
        %v1138 = vadd.f32 %v1046, %v1131
        %v1139 = vadd.f32 %v1047, %v1133
        %s1140 = sld [smem:[#allocation9 + $0x2c]]
        %s1141 = sld [smem:[#allocation9 + $0x5d]]
        %v1142 = vstv %s1140
        %v1143 = vmul.f32 %v352, %v1142
        %v1144 = vmul.f32 %v353, %v1142
        %v1145 = vmul.f32 %v354, %v1142
        %v1149 = vrot.slane %v1143, 6
        %v1150 = vrot.slane %v1144, 6
        %v1151 = vsel %vm540, %v1149, %v1150
        %v1152 = vrot.slane %v1145, 6
        %v1153 = vsel %vm540, %v1150, %v1152
        %1154 = vrot.lane.b32.xlu0 %v1151, 126
        %v1155 = vpop.permute.xlu0 %1154
        %1156 = vrot.lane.b32.xlu0 %v1153, 126
        %v1157 = vpop.permute.xlu0 %1156
        %v1160 = vadd.f32 %v1068, %v1155
        %v1161 = vadd.f32 %v1069, %v1157
        %v1162 = vstv %s1141
        %v1163 = vmul.f32 %v355, %v1162
        %v1164 = vmul.f32 %v356, %v1162
        %v1165 = vmul.f32 %v357, %v1162
        %v1169 = vrot.slane %v1163, 6
        %v1170 = vrot.slane %v1164, 6
        %v1171 = vsel %vm540, %v1169, %v1170
        %v1172 = vrot.slane %v1165, 6
        %v1173 = vsel %vm540, %v1170, %v1172
        %1174 = vrot.lane.b32.xlu0 %v1171, 126
        %v1175 = vpop.permute.xlu0 %1174
        %1176 = vrot.lane.b32.xlu0 %v1173, 126
        %v1177 = vpop.permute.xlu0 %1176
        %v1180 = vadd.f32 %v1088, %v1175
        %v1181 = vadd.f32 %v1089, %v1177
        %s1182 = sld [smem:[#allocation9 + $0x3]]
        %s1183 = sld [smem:[#allocation9 + $0x34]]
        %v1184 = vstv %s1182
        %v1185 = vmul.f32 %v352, %v1184
        %v1186 = vmul.f32 %v353, %v1184
        %v1189 = vrot.slane %v1185, 7
        %v1190 = vrot.slane %v1186, 7
        %v1191 = vsel %vm573, %v1189, %v1190
        %1192 = vrot.lane.b32.xlu0 %v1189, 125
        %v1193 = vpop.permute.xlu0 %1192
        %1194 = vrot.lane.b32.xlu0 %v1191, 125
        %v1195 = vpop.permute.xlu0 %1194
        %1196 = vrot.lane.b32.xlu0 %v1190, 125
        %v1197 = vpop.permute.xlu0 %1196
        %v1201 = vadd.f32 %v1113, %v1193
        %v1202 = vadd.f32 %v1114, %v1195
        %v1203 = vadd.f32 %v1115, %v1197
        %v1204 = vstv %s1183
        %v1205 = vmul.f32 %v355, %v1204
        %v1206 = vmul.f32 %v356, %v1204
        %v1209 = vrot.slane %v1205, 7
        %v1210 = vrot.slane %v1206, 7
        %v1211 = vsel %vm573, %v1209, %v1210
        %1212 = vrot.lane.b32.xlu0 %v1209, 125
        %v1213 = vpop.permute.xlu0 %1212
        %1214 = vrot.lane.b32.xlu0 %v1211, 125
        %v1215 = vpop.permute.xlu0 %1214
        %1216 = vrot.lane.b32.xlu0 %v1210, 125
        %v1217 = vpop.permute.xlu0 %1216
        %v1221 = vadd.f32 %v1137, %v1213
        %v1222 = vadd.f32 %v1138, %v1215
        %v1223 = vadd.f32 %v1139, %v1217
        %s1224 = sld [smem:[#allocation9 + $0xa]]
        %s1225 = sld [smem:[#allocation9 + $0x3b]]
        %v1226 = vstv %s1224
        %v1227 = vmul.f32 %v352, %v1226
        %v1228 = vmul.f32 %v353, %v1226
        %v1229 = vmul.f32 %v354, %v1226
        %v1233 = vrot.slane %v1227, 1
        %v1234 = vrot.slane %v1228, 1
        %v1235 = vsel %vm618, %v1233, %v1234
        %v1236 = vrot.slane %v1229, 1
        %v1237 = vsel %vm618, %v1234, %v1236
        %1238 = vrot.lane.b32.xlu0 %v1235, 125
        %v1239 = vpop.permute.xlu0 %1238
        %1240 = vrot.lane.b32.xlu0 %v1237, 125
        %v1241 = vpop.permute.xlu0 %1240
        %v1244 = vadd.f32 %v1160, %v1239
        %v1245 = vadd.f32 %v1161, %v1241
        %v1246 = vstv %s1225
        %v1247 = vmul.f32 %v355, %v1246
        %v1248 = vmul.f32 %v356, %v1246
        %v1249 = vmul.f32 %v357, %v1246
        %v1253 = vrot.slane %v1247, 1
        %v1254 = vrot.slane %v1248, 1
        %v1255 = vsel %vm618, %v1253, %v1254
        %v1256 = vrot.slane %v1249, 1
        %v1257 = vsel %vm618, %v1254, %v1256
        %1258 = vrot.lane.b32.xlu0 %v1255, 125
        %v1259 = vpop.permute.xlu0 %1258
        %1260 = vrot.lane.b32.xlu0 %v1257, 125
        %v1261 = vpop.permute.xlu0 %1260
        %v1264 = vadd.f32 %v1180, %v1259
        %v1265 = vadd.f32 %v1181, %v1261
        %s1266 = sld [smem:[#allocation9 + $0x11]]
        %s1267 = sld [smem:[#allocation9 + $0x42]]
        %v1268 = vstv %s1266
        %v1269 = vmul.f32 %v352, %v1268
        %v1270 = vmul.f32 %v353, %v1268
        %v1271 = vmul.f32 %v354, %v1268
        %v1275 = vrot.slane %v1269, 1
        %v1276 = vrot.slane %v1270, 1
        %v1277 = vsel %vm618, %v1275, %v1276
        %v1278 = vrot.slane %v1271, 1
        %v1279 = vsel %vm618, %v1276, %v1278
        %1280 = vrot.lane.b32.xlu0 %v1277, 125
        %v1281 = vpop.permute.xlu0 %1280
        %1282 = vrot.lane.b32.xlu0 %v1279, 125
        %v1283 = vpop.permute.xlu0 %1282
        %1284 = vrot.lane.b32.xlu0 %v1278, 125
        %v1285 = vpop.permute.xlu0 %1284
        %v1289 = vadd.f32 %v1201, %v1281
        %v1290 = vadd.f32 %v1202, %v1283
        %v1291 = vadd.f32 %v1203, %v1285
        %v1292 = vstv %s1267
        %v1293 = vmul.f32 %v355, %v1292
        %v1294 = vmul.f32 %v356, %v1292
        %v1295 = vmul.f32 %v357, %v1292
        %v1299 = vrot.slane %v1293, 1
        %v1300 = vrot.slane %v1294, 1
        %v1301 = vsel %vm618, %v1299, %v1300
        %v1302 = vrot.slane %v1295, 1
        %v1303 = vsel %vm618, %v1300, %v1302
        %1304 = vrot.lane.b32.xlu0 %v1301, 125
        %v1305 = vpop.permute.xlu0 %1304
        %1306 = vrot.lane.b32.xlu0 %v1303, 125
        %v1307 = vpop.permute.xlu0 %1306
        %1308 = vrot.lane.b32.xlu0 %v1302, 125
        %v1309 = vpop.permute.xlu0 %1308
        %v1313 = vadd.f32 %v1221, %v1305
        %v1314 = vadd.f32 %v1222, %v1307
        %v1315 = vadd.f32 %v1223, %v1309
        %s1316 = sld [smem:[#allocation9 + $0x18]]
        %s1317 = sld [smem:[#allocation9 + $0x49]]
        %v1318 = vstv %s1316
        %v1319 = vmul.f32 %v352, %v1318
        %v1320 = vmul.f32 %v353, %v1318
        %v1321 = vmul.f32 %v354, %v1318
        %v1325 = vrot.slane %v1319, 3
        %v1326 = vrot.slane %v1320, 3
        %v1327 = vsel %vm711, %v1325, %v1326
        %v1328 = vrot.slane %v1321, 3
        %v1329 = vsel %vm711, %v1326, %v1328
        %1330 = vrot.lane.b32.xlu0 %v1327, 125
        %v1331 = vpop.permute.xlu0 %1330
        %1332 = vrot.lane.b32.xlu0 %v1329, 125
        %v1333 = vpop.permute.xlu0 %1332
        %v1336 = vadd.f32 %v1244, %v1331
        %v1337 = vadd.f32 %v1245, %v1333
        %v1338 = vstv %s1317
        %v1339 = vmul.f32 %v355, %v1338
        %v1340 = vmul.f32 %v356, %v1338
        %v1341 = vmul.f32 %v357, %v1338
        %v1345 = vrot.slane %v1339, 3
        %v1346 = vrot.slane %v1340, 3
        %v1347 = vsel %vm711, %v1345, %v1346
        %v1348 = vrot.slane %v1341, 3
        %v1349 = vsel %vm711, %v1346, %v1348
        %1350 = vrot.lane.b32.xlu0 %v1347, 125
        %v1351 = vpop.permute.xlu0 %1350
        %1352 = vrot.lane.b32.xlu0 %v1349, 125
        %v1353 = vpop.permute.xlu0 %1352
        %v1356 = vadd.f32 %v1264, %v1351
        %v1357 = vadd.f32 %v1265, %v1353
        %s1358 = sld [smem:[#allocation9 + $0x1f]]
        %s1359 = sld [smem:[#allocation9 + $0x50]]
        %v1360 = vstv %s1358
        %v1361 = vmul.f32 %v352, %v1360
        %v1362 = vmul.f32 %v353, %v1360
        %v1363 = vmul.f32 %v354, %v1360
        %v1367 = vrot.slane %v1361, 3
        %v1368 = vrot.slane %v1362, 3
        %v1369 = vsel %vm711, %v1367, %v1368
        %v1370 = vrot.slane %v1363, 3
        %v1371 = vsel %vm711, %v1368, %v1370
        %1372 = vrot.lane.b32.xlu0 %v1369, 125
        %v1373 = vpop.permute.xlu0 %1372
        %1374 = vrot.lane.b32.xlu0 %v1371, 125
        %v1375 = vpop.permute.xlu0 %1374
        %1376 = vrot.lane.b32.xlu0 %v1370, 125
        %v1377 = vpop.permute.xlu0 %1376
        %v1381 = vadd.f32 %v1289, %v1373
        %v1382 = vadd.f32 %v1290, %v1375
        %v1383 = vadd.f32 %v1291, %v1377
        %v1384 = vstv %s1359
        %v1385 = vmul.f32 %v355, %v1384
        %v1386 = vmul.f32 %v356, %v1384
        %v1387 = vmul.f32 %v357, %v1384
        %v1391 = vrot.slane %v1385, 3
        %v1392 = vrot.slane %v1386, 3
        %v1393 = vsel %vm711, %v1391, %v1392
        %v1394 = vrot.slane %v1387, 3
        %v1395 = vsel %vm711, %v1392, %v1394
        %1396 = vrot.lane.b32.xlu0 %v1393, 125
        %v1397 = vpop.permute.xlu0 %1396
        %1398 = vrot.lane.b32.xlu0 %v1395, 125
        %v1399 = vpop.permute.xlu0 %1398
        %1400 = vrot.lane.b32.xlu0 %v1394, 125
        %v1401 = vpop.permute.xlu0 %1400
        %v1405 = vadd.f32 %v1313, %v1397
        %v1406 = vadd.f32 %v1314, %v1399
        %v1407 = vadd.f32 %v1315, %v1401
        %s1408 = sld [smem:[#allocation9 + $0x26]]
        %s1409 = sld [smem:[#allocation9 + $0x57]]
        %v1410 = vstv %s1408
        %v1411 = vmul.f32 %v352, %v1410
        %v1412 = vmul.f32 %v353, %v1410
        %v1413 = vmul.f32 %v354, %v1410
        %v1417 = vrot.slane %v1411, 5
        %v1418 = vrot.slane %v1412, 5
        %v1419 = vsel %vm804, %v1417, %v1418
        %v1420 = vrot.slane %v1413, 5
        %v1421 = vsel %vm804, %v1418, %v1420
        %1422 = vrot.lane.b32.xlu0 %v1419, 125
        %v1423 = vpop.permute.xlu0 %1422
        %1424 = vrot.lane.b32.xlu0 %v1421, 125
        %v1425 = vpop.permute.xlu0 %1424
        %v1428 = vadd.f32 %v1336, %v1423
        %v1429 = vadd.f32 %v1337, %v1425
        %v1430 = vstv %s1409
        %v1431 = vmul.f32 %v355, %v1430
        %v1432 = vmul.f32 %v356, %v1430
        %v1433 = vmul.f32 %v357, %v1430
        %v1437 = vrot.slane %v1431, 5
        %v1438 = vrot.slane %v1432, 5
        %v1439 = vsel %vm804, %v1437, %v1438
        %v1440 = vrot.slane %v1433, 5
        %v1441 = vsel %vm804, %v1438, %v1440
        %1442 = vrot.lane.b32.xlu0 %v1439, 125
        %v1443 = vpop.permute.xlu0 %1442
        %1444 = vrot.lane.b32.xlu0 %v1441, 125
        %v1445 = vpop.permute.xlu0 %1444
        %v1448 = vadd.f32 %v1356, %v1443
        %v1449 = vadd.f32 %v1357, %v1445
        %s1450 = sld [smem:[#allocation9 + $0x2d]]
        %s1451 = sld [smem:[#allocation9 + $0x5e]]
        %v1452 = vstv %s1450
        %v1453 = vmul.f32 %v352, %v1452
        %v1454 = vmul.f32 %v353, %v1452
        %v1455 = vmul.f32 %v354, %v1452
        %v1459 = vrot.slane %v1453, 5
        %v1460 = vrot.slane %v1454, 5
        %v1461 = vsel %vm804, %v1459, %v1460
        %v1462 = vrot.slane %v1455, 5
        %v1463 = vsel %vm804, %v1460, %v1462
        %1464 = vrot.lane.b32.xlu0 %v1461, 125
        %v1465 = vpop.permute.xlu0 %1464
        %1466 = vrot.lane.b32.xlu0 %v1463, 125
        %v1467 = vpop.permute.xlu0 %1466
        %1468 = vrot.lane.b32.xlu0 %v1462, 125
        %v1469 = vpop.permute.xlu0 %1468
        %v1473 = vadd.f32 %v1381, %v1465
        %v1474 = vadd.f32 %v1382, %v1467
        %v1475 = vadd.f32 %v1383, %v1469
        %v1476 = vstv %s1451
        %v1477 = vmul.f32 %v355, %v1476
        %v1478 = vmul.f32 %v356, %v1476
        %v1479 = vmul.f32 %v357, %v1476
        %v1483 = vrot.slane %v1477, 5
        %v1484 = vrot.slane %v1478, 5
        %v1485 = vsel %vm804, %v1483, %v1484
        %v1486 = vrot.slane %v1479, 5
        %v1487 = vsel %vm804, %v1484, %v1486
        %1488 = vrot.lane.b32.xlu0 %v1485, 125
        %v1489 = vpop.permute.xlu0 %1488
        %1490 = vrot.lane.b32.xlu0 %v1487, 125
        %v1491 = vpop.permute.xlu0 %1490
        %1492 = vrot.lane.b32.xlu0 %v1486, 125
        %v1493 = vpop.permute.xlu0 %1492
        %v1497 = vadd.f32 %v1405, %v1489
        %v1498 = vadd.f32 %v1406, %v1491
        %v1499 = vadd.f32 %v1407, %v1493
        %s1500 = sld [smem:[#allocation9 + $0x4]]
        %s1501 = sld [smem:[#allocation9 + $0x35]]
        %v1502 = vstv %s1500
        %v1503 = vmul.f32 %v352, %v1502
        %v1504 = vmul.f32 %v353, %v1502
        %1507 = vrot.lane.b32.xlu0 %v1503, 124
        %v1508 = vpop.permute.xlu0 %1507
        %1509 = vrot.lane.b32.xlu0 %v1504, 124
        %v1510 = vpop.permute.xlu0 %1509
        %v1513 = vadd.f32 %v1428, %v1508
        %v1514 = vadd.f32 %v1429, %v1510
        %v1515 = vstv %s1501
        %v1516 = vmul.f32 %v355, %v1515
        %v1517 = vmul.f32 %v356, %v1515
        %1520 = vrot.lane.b32.xlu0 %v1516, 124
        %v1521 = vpop.permute.xlu0 %1520
        %1522 = vrot.lane.b32.xlu0 %v1517, 124
        %v1523 = vpop.permute.xlu0 %1522
        %v1526 = vadd.f32 %v1448, %v1521
        %v1527 = vadd.f32 %v1449, %v1523
        %s1528 = sld [smem:[#allocation9 + $0xb]]
        %s1529 = sld [smem:[#allocation9 + $0x3c]]
        %v1530 = vstv %s1528
        %v1531 = vmul.f32 %v352, %v1530
        %v1532 = vmul.f32 %v353, %v1530
        %v1533 = vmul.f32 %v354, %v1530
        %1537 = vrot.lane.b32.xlu0 %v1531, 124
        %v1538 = vpop.permute.xlu0 %1537
        %1539 = vrot.lane.b32.xlu0 %v1532, 124
        %v1540 = vpop.permute.xlu0 %1539
        %1541 = vrot.lane.b32.xlu0 %v1533, 124
        %v1542 = vpop.permute.xlu0 %1541
        %v1546 = vadd.f32 %v1473, %v1538
        %v1547 = vadd.f32 %v1474, %v1540
        %v1548 = vadd.f32 %v1475, %v1542
        %v1549 = vstv %s1529
        %v1550 = vmul.f32 %v355, %v1549
        %v1551 = vmul.f32 %v356, %v1549
        %v1552 = vmul.f32 %v357, %v1549
        %1556 = vrot.lane.b32.xlu0 %v1550, 124
        %v1557 = vpop.permute.xlu0 %1556
        %1558 = vrot.lane.b32.xlu0 %v1551, 124
        %v1559 = vpop.permute.xlu0 %1558
        %1560 = vrot.lane.b32.xlu0 %v1552, 124
        %v1561 = vpop.permute.xlu0 %1560
        %v1565 = vadd.f32 %v1497, %v1557
        %v1566 = vadd.f32 %v1498, %v1559
        %v1567 = vadd.f32 %v1499, %v1561
        %s1568 = sld [smem:[#allocation9 + $0x12]]
        %s1569 = sld [smem:[#allocation9 + $0x43]]
        %v1570 = vstv %s1568
        %v1571 = vmul.f32 %v352, %v1570
        %v1572 = vmul.f32 %v353, %v1570
        %v1573 = vmul.f32 %v354, %v1570
        %v1577 = vrot.slane %v1571, 2
        %v1578 = vrot.slane %v1572, 2
        %v1579 = vsel %vm395, %v1577, %v1578
        %v1580 = vrot.slane %v1573, 2
        %v1581 = vsel %vm395, %v1578, %v1580
        %1582 = vrot.lane.b32.xlu0 %v1579, 124
        %v1583 = vpop.permute.xlu0 %1582
        %1584 = vrot.lane.b32.xlu0 %v1581, 124
        %v1585 = vpop.permute.xlu0 %1584
        %v1588 = vadd.f32 %v1513, %v1583
        %v1589 = vadd.f32 %v1514, %v1585
        %v1590 = vstv %s1569
        %v1591 = vmul.f32 %v355, %v1590
        %v1592 = vmul.f32 %v356, %v1590
        %v1593 = vmul.f32 %v357, %v1590
        %v1597 = vrot.slane %v1591, 2
        %v1598 = vrot.slane %v1592, 2
        %v1599 = vsel %vm395, %v1597, %v1598
        %v1600 = vrot.slane %v1593, 2
        %v1601 = vsel %vm395, %v1598, %v1600
        %1602 = vrot.lane.b32.xlu0 %v1599, 124
        %v1603 = vpop.permute.xlu0 %1602
        %1604 = vrot.lane.b32.xlu0 %v1601, 124
        %v1605 = vpop.permute.xlu0 %1604
        %v1608 = vadd.f32 %v1526, %v1603
        %v1609 = vadd.f32 %v1527, %v1605
        %s1610 = sld [smem:[#allocation9 + $0x19]]
        %s1611 = sld [smem:[#allocation9 + $0x4a]]
        %v1612 = vstv %s1610
        %v1613 = vmul.f32 %v352, %v1612
        %v1614 = vmul.f32 %v353, %v1612
        %v1615 = vmul.f32 %v354, %v1612
        %v1619 = vrot.slane %v1613, 2
        %v1620 = vrot.slane %v1614, 2
        %v1621 = vsel %vm395, %v1619, %v1620
        %v1622 = vrot.slane %v1615, 2
        %v1623 = vsel %vm395, %v1620, %v1622
        %1624 = vrot.lane.b32.xlu0 %v1621, 124
        %v1625 = vpop.permute.xlu0 %1624
        %1626 = vrot.lane.b32.xlu0 %v1623, 124
        %v1627 = vpop.permute.xlu0 %1626
        %1628 = vrot.lane.b32.xlu0 %v1622, 124
        %v1629 = vpop.permute.xlu0 %1628
        %v1633 = vadd.f32 %v1546, %v1625
        %v1634 = vadd.f32 %v1547, %v1627
        %v1635 = vadd.f32 %v1548, %v1629
        %v1636 = vstv %s1611
        %v1637 = vmul.f32 %v355, %v1636
        %v1638 = vmul.f32 %v356, %v1636
        %v1639 = vmul.f32 %v357, %v1636
        %v1643 = vrot.slane %v1637, 2
        %v1644 = vrot.slane %v1638, 2
        %v1645 = vsel %vm395, %v1643, %v1644
        %v1646 = vrot.slane %v1639, 2
        %v1647 = vsel %vm395, %v1644, %v1646
        %1648 = vrot.lane.b32.xlu0 %v1645, 124
        %v1649 = vpop.permute.xlu0 %1648
        %1650 = vrot.lane.b32.xlu0 %v1647, 124
        %v1651 = vpop.permute.xlu0 %1650
        %1652 = vrot.lane.b32.xlu0 %v1646, 124
        %v1653 = vpop.permute.xlu0 %1652
        %v1657 = vadd.f32 %v1565, %v1649
        %v1658 = vadd.f32 %v1566, %v1651
        %v1659 = vadd.f32 %v1567, %v1653
        %s1660 = sld [smem:[#allocation9 + $0x20]]
        %s1661 = sld [smem:[#allocation9 + $0x51]]
        %v1662 = vstv %s1660
        %v1663 = vmul.f32 %v352, %v1662
        %v1664 = vmul.f32 %v353, %v1662
        %v1665 = vmul.f32 %v354, %v1662
        %v1669 = vrot.slane %v1663, 4
        %v1670 = vrot.slane %v1664, 4
        %v1671 = vsel %vm186, %v1669, %v1670
        %v1672 = vrot.slane %v1665, 4
        %v1673 = vsel %vm186, %v1670, %v1672
        %1674 = vrot.lane.b32.xlu0 %v1671, 124
        %v1675 = vpop.permute.xlu0 %1674
        %1676 = vrot.lane.b32.xlu0 %v1673, 124
        %v1677 = vpop.permute.xlu0 %1676
        %v1680 = vadd.f32 %v1588, %v1675
        %v1681 = vadd.f32 %v1589, %v1677
        %v1682 = vstv %s1661
        %v1683 = vmul.f32 %v355, %v1682
        %v1684 = vmul.f32 %v356, %v1682
        %v1685 = vmul.f32 %v357, %v1682
        %v1689 = vrot.slane %v1683, 4
        %v1690 = vrot.slane %v1684, 4
        %v1691 = vsel %vm186, %v1689, %v1690
        %v1692 = vrot.slane %v1685, 4
        %v1693 = vsel %vm186, %v1690, %v1692
        %1694 = vrot.lane.b32.xlu0 %v1691, 124
        %v1695 = vpop.permute.xlu0 %1694
        %1696 = vrot.lane.b32.xlu0 %v1693, 124
        %v1697 = vpop.permute.xlu0 %1696
        %v1700 = vadd.f32 %v1608, %v1695
        %v1701 = vadd.f32 %v1609, %v1697
        %s1702 = sld [smem:[#allocation9 + $0x27]]
        %s1703 = sld [smem:[#allocation9 + $0x58]]
        %v1704 = vstv %s1702
        %v1705 = vmul.f32 %v352, %v1704
        %v1706 = vmul.f32 %v353, %v1704
        %v1707 = vmul.f32 %v354, %v1704
        %v1711 = vrot.slane %v1705, 4
        %v1712 = vrot.slane %v1706, 4
        %v1713 = vsel %vm186, %v1711, %v1712
        %v1714 = vrot.slane %v1707, 4
        %v1715 = vsel %vm186, %v1712, %v1714
        %1716 = vrot.lane.b32.xlu0 %v1713, 124
        %v1717 = vpop.permute.xlu0 %1716
        %1718 = vrot.lane.b32.xlu0 %v1715, 124
        %v1719 = vpop.permute.xlu0 %1718
        %1720 = vrot.lane.b32.xlu0 %v1714, 124
        %v1721 = vpop.permute.xlu0 %1720
        %v1725 = vadd.f32 %v1633, %v1717
        %v1726 = vadd.f32 %v1634, %v1719
        %v1727 = vadd.f32 %v1635, %v1721
        %v1728 = vstv %s1703
        %v1729 = vmul.f32 %v355, %v1728
        %v1730 = vmul.f32 %v356, %v1728
        %v1731 = vmul.f32 %v357, %v1728
        %v1735 = vrot.slane %v1729, 4
        %v1736 = vrot.slane %v1730, 4
        %v1737 = vsel %vm186, %v1735, %v1736
        %v1738 = vrot.slane %v1731, 4
        %v1739 = vsel %vm186, %v1736, %v1738
        %1740 = vrot.lane.b32.xlu0 %v1737, 124
        %v1741 = vpop.permute.xlu0 %1740
        %1742 = vrot.lane.b32.xlu0 %v1739, 124
        %v1743 = vpop.permute.xlu0 %1742
        %1744 = vrot.lane.b32.xlu0 %v1738, 124
        %v1745 = vpop.permute.xlu0 %1744
        %v1749 = vadd.f32 %v1657, %v1741
        %v1750 = vadd.f32 %v1658, %v1743
        %v1751 = vadd.f32 %v1659, %v1745
        %s1752 = sld [smem:[#allocation9 + $0x2e]]
        %s1753 = sld [smem:[#allocation9 + $0x5f]]
        %v1754 = vstv %s1752
        %v1755 = vmul.f32 %v352, %v1754
        %v1756 = vmul.f32 %v353, %v1754
        %v1757 = vmul.f32 %v354, %v1754
        %v1761 = vrot.slane %v1755, 6
        %v1762 = vrot.slane %v1756, 6
        %v1763 = vsel %vm540, %v1761, %v1762
        %v1764 = vrot.slane %v1757, 6
        %v1765 = vsel %vm540, %v1762, %v1764
        %1766 = vrot.lane.b32.xlu0 %v1763, 124
        %v1767 = vpop.permute.xlu0 %1766
        %1768 = vrot.lane.b32.xlu0 %v1765, 124
        %v1769 = vpop.permute.xlu0 %1768
        %v1772 = vadd.f32 %v1680, %v1767
        %v1773 = vadd.f32 %v1681, %v1769
        %v1774 = vstv %s1753
        %v1775 = vmul.f32 %v355, %v1774
        %v1776 = vmul.f32 %v356, %v1774
        %v1777 = vmul.f32 %v357, %v1774
        %v1781 = vrot.slane %v1775, 6
        %v1782 = vrot.slane %v1776, 6
        %v1783 = vsel %vm540, %v1781, %v1782
        %v1784 = vrot.slane %v1777, 6
        %v1785 = vsel %vm540, %v1782, %v1784
        %1786 = vrot.lane.b32.xlu0 %v1783, 124
        %v1787 = vpop.permute.xlu0 %1786
        %1788 = vrot.lane.b32.xlu0 %v1785, 124
        %v1789 = vpop.permute.xlu0 %1788
        %v1792 = vadd.f32 %v1700, %v1787
        %v1793 = vadd.f32 %v1701, %v1789
        %s1794 = sld [smem:[#allocation9 + $0x5]]
        %s1795 = sld [smem:[#allocation9 + $0x36]]
        %v1796 = vstv %s1794
        %v1797 = vmul.f32 %v352, %v1796
        %v1798 = vmul.f32 %v353, %v1796
        %v1801 = vrot.slane %v1797, 7
        %v1802 = vrot.slane %v1798, 7
        %v1803 = vsel %vm573, %v1801, %v1802
        %1804 = vrot.lane.b32.xlu0 %v1801, 123
        %v1805 = vpop.permute.xlu0 %1804
        %1806 = vrot.lane.b32.xlu0 %v1803, 123
        %v1807 = vpop.permute.xlu0 %1806
        %1808 = vrot.lane.b32.xlu0 %v1802, 123
        %v1809 = vpop.permute.xlu0 %1808
        %v1813 = vadd.f32 %v1725, %v1805
        %v1814 = vadd.f32 %v1726, %v1807
        %v1815 = vadd.f32 %v1727, %v1809
        %v1816 = vstv %s1795
        %v1817 = vmul.f32 %v355, %v1816
        %v1818 = vmul.f32 %v356, %v1816
        %v1821 = vrot.slane %v1817, 7
        %v1822 = vrot.slane %v1818, 7
        %v1823 = vsel %vm573, %v1821, %v1822
        %1824 = vrot.lane.b32.xlu0 %v1821, 123
        %v1825 = vpop.permute.xlu0 %1824
        %1826 = vrot.lane.b32.xlu0 %v1823, 123
        %v1827 = vpop.permute.xlu0 %1826
        %1828 = vrot.lane.b32.xlu0 %v1822, 123
        %v1829 = vpop.permute.xlu0 %1828
        %v1833 = vadd.f32 %v1749, %v1825
        %v1834 = vadd.f32 %v1750, %v1827
        %v1835 = vadd.f32 %v1751, %v1829
        %s1836 = sld [smem:[#allocation9 + $0xc]]
        %s1837 = sld [smem:[#allocation9 + $0x3d]]
        %v1838 = vstv %s1836
        %v1839 = vmul.f32 %v352, %v1838
        %v1840 = vmul.f32 %v353, %v1838
        %v1841 = vmul.f32 %v354, %v1838
        %v1845 = vrot.slane %v1839, 1
        %v1846 = vrot.slane %v1840, 1
        %v1847 = vsel %vm618, %v1845, %v1846
        %v1848 = vrot.slane %v1841, 1
        %v1849 = vsel %vm618, %v1846, %v1848
        %1850 = vrot.lane.b32.xlu0 %v1847, 123
        %v1851 = vpop.permute.xlu0 %1850
        %1852 = vrot.lane.b32.xlu0 %v1849, 123
        %v1853 = vpop.permute.xlu0 %1852
        %v1856 = vadd.f32 %v1772, %v1851
        %v1857 = vadd.f32 %v1773, %v1853
        %v1858 = vstv %s1837
        %v1859 = vmul.f32 %v355, %v1858
        %v1860 = vmul.f32 %v356, %v1858
        %v1861 = vmul.f32 %v357, %v1858
        %v1865 = vrot.slane %v1859, 1
        %v1866 = vrot.slane %v1860, 1
        %v1867 = vsel %vm618, %v1865, %v1866
        %v1868 = vrot.slane %v1861, 1
        %v1869 = vsel %vm618, %v1866, %v1868
        %1870 = vrot.lane.b32.xlu0 %v1867, 123
        %v1871 = vpop.permute.xlu0 %1870
        %1872 = vrot.lane.b32.xlu0 %v1869, 123
        %v1873 = vpop.permute.xlu0 %1872
        %v1876 = vadd.f32 %v1792, %v1871
        %v1877 = vadd.f32 %v1793, %v1873
        %s1878 = sld [smem:[#allocation9 + $0x13]]
        %s1879 = sld [smem:[#allocation9 + $0x44]]
        %v1880 = vstv %s1878
        %v1881 = vmul.f32 %v352, %v1880
        %v1882 = vmul.f32 %v353, %v1880
        %v1883 = vmul.f32 %v354, %v1880
        %v1887 = vrot.slane %v1881, 1
        %v1888 = vrot.slane %v1882, 1
        %v1889 = vsel %vm618, %v1887, %v1888
        %v1890 = vrot.slane %v1883, 1
        %v1891 = vsel %vm618, %v1888, %v1890
        %1892 = vrot.lane.b32.xlu0 %v1889, 123
        %v1893 = vpop.permute.xlu0 %1892
        %1894 = vrot.lane.b32.xlu0 %v1891, 123
        %v1895 = vpop.permute.xlu0 %1894
        %1896 = vrot.lane.b32.xlu0 %v1890, 123
        %v1897 = vpop.permute.xlu0 %1896
        %v1901 = vadd.f32 %v1813, %v1893
        %v1902 = vadd.f32 %v1814, %v1895
        %v1903 = vadd.f32 %v1815, %v1897
        %v1904 = vstv %s1879
        %v1905 = vmul.f32 %v355, %v1904
        %v1906 = vmul.f32 %v356, %v1904
        %v1907 = vmul.f32 %v357, %v1904
        %v1911 = vrot.slane %v1905, 1
        %v1912 = vrot.slane %v1906, 1
        %v1913 = vsel %vm618, %v1911, %v1912
        %v1914 = vrot.slane %v1907, 1
        %v1915 = vsel %vm618, %v1912, %v1914
        %1916 = vrot.lane.b32.xlu0 %v1913, 123
        %v1917 = vpop.permute.xlu0 %1916
        %1918 = vrot.lane.b32.xlu0 %v1915, 123
        %v1919 = vpop.permute.xlu0 %1918
        %1920 = vrot.lane.b32.xlu0 %v1914, 123
        %v1921 = vpop.permute.xlu0 %1920
        %v1925 = vadd.f32 %v1833, %v1917
        %v1926 = vadd.f32 %v1834, %v1919
        %v1927 = vadd.f32 %v1835, %v1921
        %s1928 = sld [smem:[#allocation9 + $0x1a]]
        %s1929 = sld [smem:[#allocation9 + $0x4b]]
        %v1930 = vstv %s1928
        %v1931 = vmul.f32 %v352, %v1930
        %v1932 = vmul.f32 %v353, %v1930
        %v1933 = vmul.f32 %v354, %v1930
        %v1937 = vrot.slane %v1931, 3
        %v1938 = vrot.slane %v1932, 3
        %v1939 = vsel %vm711, %v1937, %v1938
        %v1940 = vrot.slane %v1933, 3
        %v1941 = vsel %vm711, %v1938, %v1940
        %1942 = vrot.lane.b32.xlu0 %v1939, 123
        %v1943 = vpop.permute.xlu0 %1942
        %1944 = vrot.lane.b32.xlu0 %v1941, 123
        %v1945 = vpop.permute.xlu0 %1944
        %v1948 = vadd.f32 %v1856, %v1943
        %v1949 = vadd.f32 %v1857, %v1945
        %v1950 = vstv %s1929
        %v1951 = vmul.f32 %v355, %v1950
        %v1952 = vmul.f32 %v356, %v1950
        %v1953 = vmul.f32 %v357, %v1950
        %v1957 = vrot.slane %v1951, 3
        %v1958 = vrot.slane %v1952, 3
        %v1959 = vsel %vm711, %v1957, %v1958
        %v1960 = vrot.slane %v1953, 3
        %v1961 = vsel %vm711, %v1958, %v1960
        %1962 = vrot.lane.b32.xlu0 %v1959, 123
        %v1963 = vpop.permute.xlu0 %1962
        %1964 = vrot.lane.b32.xlu0 %v1961, 123
        %v1965 = vpop.permute.xlu0 %1964
        %v1968 = vadd.f32 %v1876, %v1963
        %v1969 = vadd.f32 %v1877, %v1965
        %s1970 = sld [smem:[#allocation9 + $0x21]]
        %s1971 = sld [smem:[#allocation9 + $0x52]]
        %v1972 = vstv %s1970
        %v1973 = vmul.f32 %v352, %v1972
        %v1974 = vmul.f32 %v353, %v1972
        %v1975 = vmul.f32 %v354, %v1972
        %v1979 = vrot.slane %v1973, 3
        %v1980 = vrot.slane %v1974, 3
        %v1981 = vsel %vm711, %v1979, %v1980
        %v1982 = vrot.slane %v1975, 3
        %v1983 = vsel %vm711, %v1980, %v1982
        %1984 = vrot.lane.b32.xlu0 %v1981, 123
        %v1985 = vpop.permute.xlu0 %1984
        %1986 = vrot.lane.b32.xlu0 %v1983, 123
        %v1987 = vpop.permute.xlu0 %1986
        %1988 = vrot.lane.b32.xlu0 %v1982, 123
        %v1989 = vpop.permute.xlu0 %1988
        %v1993 = vadd.f32 %v1901, %v1985
        %v1994 = vadd.f32 %v1902, %v1987
        %v1995 = vadd.f32 %v1903, %v1989
        %v1996 = vstv %s1971
        %v1997 = vmul.f32 %v355, %v1996
        %v1998 = vmul.f32 %v356, %v1996
        %v1999 = vmul.f32 %v357, %v1996
        %v2003 = vrot.slane %v1997, 3
        %v2004 = vrot.slane %v1998, 3
        %v2005 = vsel %vm711, %v2003, %v2004
        %v2006 = vrot.slane %v1999, 3
        %v2007 = vsel %vm711, %v2004, %v2006
        %2008 = vrot.lane.b32.xlu0 %v2005, 123
        %v2009 = vpop.permute.xlu0 %2008
        %2010 = vrot.lane.b32.xlu0 %v2007, 123
        %v2011 = vpop.permute.xlu0 %2010
        %2012 = vrot.lane.b32.xlu0 %v2006, 123
        %v2013 = vpop.permute.xlu0 %2012
        %v2017 = vadd.f32 %v1925, %v2009
        %v2018 = vadd.f32 %v1926, %v2011
        %v2019 = vadd.f32 %v1927, %v2013
        %s2020 = sld [smem:[#allocation9 + $0x28]]
        %s2021 = sld [smem:[#allocation9 + $0x59]]
        %v2022 = vstv %s2020
        %v2023 = vmul.f32 %v352, %v2022
        %v2024 = vmul.f32 %v353, %v2022
        %v2025 = vmul.f32 %v354, %v2022
        %v2029 = vrot.slane %v2023, 5
        %v2030 = vrot.slane %v2024, 5
        %v2031 = vsel %vm804, %v2029, %v2030
        %v2032 = vrot.slane %v2025, 5
        %v2033 = vsel %vm804, %v2030, %v2032
        %2034 = vrot.lane.b32.xlu0 %v2031, 123
        %v2035 = vpop.permute.xlu0 %2034
        %2036 = vrot.lane.b32.xlu0 %v2033, 123
        %v2037 = vpop.permute.xlu0 %2036
        %v2040 = vadd.f32 %v1948, %v2035
        %v2041 = vadd.f32 %v1949, %v2037
        %v2042 = vstv %s2021
        %v2043 = vmul.f32 %v355, %v2042
        %v2044 = vmul.f32 %v356, %v2042
        %v2045 = vmul.f32 %v357, %v2042
        %v2049 = vrot.slane %v2043, 5
        %v2050 = vrot.slane %v2044, 5
        %v2051 = vsel %vm804, %v2049, %v2050
        %v2052 = vrot.slane %v2045, 5
        %v2053 = vsel %vm804, %v2050, %v2052
        %2054 = vrot.lane.b32.xlu0 %v2051, 123
        %v2055 = vpop.permute.xlu0 %2054
        %2056 = vrot.lane.b32.xlu0 %v2053, 123
        %v2057 = vpop.permute.xlu0 %2056
        %v2060 = vadd.f32 %v1968, %v2055
        %v2061 = vadd.f32 %v1969, %v2057
        %s2062 = sld [smem:[#allocation9 + $0x2f]]
        %s2063 = sld [smem:[#allocation9 + $0x60]]
        %v2064 = vstv %s2062
        %v2065 = vmul.f32 %v352, %v2064
        %v2066 = vmul.f32 %v353, %v2064
        %v2067 = vmul.f32 %v354, %v2064
        %v2071 = vrot.slane %v2065, 5
        %v2072 = vrot.slane %v2066, 5
        %v2073 = vsel %vm804, %v2071, %v2072
        %v2074 = vrot.slane %v2067, 5
        %v2075 = vsel %vm804, %v2072, %v2074
        %2076 = vrot.lane.b32.xlu0 %v2073, 123
        %v2077 = vpop.permute.xlu0 %2076
        %2078 = vrot.lane.b32.xlu0 %v2075, 123
        %v2079 = vpop.permute.xlu0 %2078
        %2080 = vrot.lane.b32.xlu0 %v2074, 123
        %v2081 = vpop.permute.xlu0 %2080
        %v2085 = vadd.f32 %v1993, %v2077
        %v2086 = vadd.f32 %v1994, %v2079
        %v2087 = vadd.f32 %v1995, %v2081
        %v2088 = vstv %s2063
        %v2089 = vmul.f32 %v355, %v2088
        %v2090 = vmul.f32 %v356, %v2088
        %v2091 = vmul.f32 %v357, %v2088
        %v2095 = vrot.slane %v2089, 5
        %v2096 = vrot.slane %v2090, 5
        %v2097 = vsel %vm804, %v2095, %v2096
        %v2098 = vrot.slane %v2091, 5
        %v2099 = vsel %vm804, %v2096, %v2098
        %2100 = vrot.lane.b32.xlu0 %v2097, 123
        %v2101 = vpop.permute.xlu0 %2100
        %2102 = vrot.lane.b32.xlu0 %v2099, 123
        %v2103 = vpop.permute.xlu0 %2102
        %2104 = vrot.lane.b32.xlu0 %v2098, 123
        %v2105 = vpop.permute.xlu0 %2104
        %v2109 = vadd.f32 %v2017, %v2101
        %v2110 = vadd.f32 %v2018, %v2103
        %v2111 = vadd.f32 %v2019, %v2105
        %s2112 = sld [smem:[#allocation9 + $0x6]]
        %s2113 = sld [smem:[#allocation9 + $0x37]]
        %v2114 = vstv %s2112
        %v2115 = vmul.f32 %v352, %v2114
        %v2116 = vmul.f32 %v353, %v2114
        %2119 = vrot.lane.b32.xlu0 %v2115, 122
        %v2120 = vpop.permute.xlu0 %2119
        %2121 = vrot.lane.b32.xlu0 %v2116, 122
        %v2122 = vpop.permute.xlu0 %2121
        %v2125 = vadd.f32 %v2040, %v2120
        %v2126 = vadd.f32 %v2041, %v2122
        %v2127 = vstv %s2113
        %v2128 = vmul.f32 %v355, %v2127
        %v2129 = vmul.f32 %v356, %v2127
        %2132 = vrot.lane.b32.xlu0 %v2128, 122
        %v2133 = vpop.permute.xlu0 %2132
        %2134 = vrot.lane.b32.xlu0 %v2129, 122
        %v2135 = vpop.permute.xlu0 %2134
        %v2138 = vadd.f32 %v2060, %v2133
        %v2139 = vadd.f32 %v2061, %v2135
        %s2140 = sld [smem:[#allocation9 + $0xd]]
        %s2141 = sld [smem:[#allocation9 + $0x3e]]
        %v2142 = vstv %s2140
        %v2143 = vmul.f32 %v352, %v2142
        %v2144 = vmul.f32 %v353, %v2142
        %v2145 = vmul.f32 %v354, %v2142
        %2149 = vrot.lane.b32.xlu0 %v2143, 122
        %v2150 = vpop.permute.xlu0 %2149
        %2151 = vrot.lane.b32.xlu0 %v2144, 122
        %v2152 = vpop.permute.xlu0 %2151
        %2153 = vrot.lane.b32.xlu0 %v2145, 122
        %v2154 = vpop.permute.xlu0 %2153
        %v2158 = vadd.f32 %v2085, %v2150
        %v2159 = vadd.f32 %v2086, %v2152
        %v2160 = vadd.f32 %v2087, %v2154
        %v2161 = vstv %s2141
        %v2162 = vmul.f32 %v355, %v2161
        %v2163 = vmul.f32 %v356, %v2161
        %v2164 = vmul.f32 %v357, %v2161
        %2168 = vrot.lane.b32.xlu0 %v2162, 122
        %v2169 = vpop.permute.xlu0 %2168
        %2170 = vrot.lane.b32.xlu0 %v2163, 122
        %v2171 = vpop.permute.xlu0 %2170
        %2172 = vrot.lane.b32.xlu0 %v2164, 122
        %v2173 = vpop.permute.xlu0 %2172
        %v2177 = vadd.f32 %v2109, %v2169
        %v2178 = vadd.f32 %v2110, %v2171
        %v2179 = vadd.f32 %v2111, %v2173
        %s2180 = sld [smem:[#allocation9 + $0x14]]
        %s2181 = sld [smem:[#allocation9 + $0x45]]
        %v2182 = vstv %s2180
        %v2183 = vmul.f32 %v352, %v2182
        %v2184 = vmul.f32 %v353, %v2182
        %v2185 = vmul.f32 %v354, %v2182
        %v2189 = vrot.slane %v2183, 2
        %v2190 = vrot.slane %v2184, 2
        %v2191 = vsel %vm395, %v2189, %v2190
        %v2192 = vrot.slane %v2185, 2
        %v2193 = vsel %vm395, %v2190, %v2192
        %2194 = vrot.lane.b32.xlu0 %v2191, 122
        %v2195 = vpop.permute.xlu0 %2194
        %2196 = vrot.lane.b32.xlu0 %v2193, 122
        %v2197 = vpop.permute.xlu0 %2196
        %v2200 = vadd.f32 %v2125, %v2195
        %v2201 = vadd.f32 %v2126, %v2197
        %v2202 = vstv %s2181
        %v2203 = vmul.f32 %v355, %v2202
        %v2204 = vmul.f32 %v356, %v2202
        %v2205 = vmul.f32 %v357, %v2202
        %v2209 = vrot.slane %v2203, 2
        %v2210 = vrot.slane %v2204, 2
        %v2211 = vsel %vm395, %v2209, %v2210
        %v2212 = vrot.slane %v2205, 2
        %v2213 = vsel %vm395, %v2210, %v2212
        %2214 = vrot.lane.b32.xlu0 %v2211, 122
        %v2215 = vpop.permute.xlu0 %2214
        %2216 = vrot.lane.b32.xlu0 %v2213, 122
        %v2217 = vpop.permute.xlu0 %2216
        %v2220 = vadd.f32 %v2138, %v2215
        %v2221 = vadd.f32 %v2139, %v2217
        %s2222 = sld [smem:[#allocation9 + $0x1b]]
        %s2223 = sld [smem:[#allocation9 + $0x4c]]
        %v2224 = vstv %s2222
        %v2225 = vmul.f32 %v352, %v2224
        %v2226 = vmul.f32 %v353, %v2224
        %v2227 = vmul.f32 %v354, %v2224
        %v2231 = vrot.slane %v2225, 2
        %v2232 = vrot.slane %v2226, 2
        %v2233 = vsel %vm395, %v2231, %v2232
        %v2234 = vrot.slane %v2227, 2
        %v2235 = vsel %vm395, %v2232, %v2234
        %2236 = vrot.lane.b32.xlu0 %v2233, 122
        %v2237 = vpop.permute.xlu0 %2236
        %2238 = vrot.lane.b32.xlu0 %v2235, 122
        %v2239 = vpop.permute.xlu0 %2238
        %2240 = vrot.lane.b32.xlu0 %v2234, 122
        %v2241 = vpop.permute.xlu0 %2240
        %v2245 = vadd.f32 %v2158, %v2237
        %v2246 = vadd.f32 %v2159, %v2239
        %v2247 = vadd.f32 %v2160, %v2241
        %v2248 = vstv %s2223
        %v2249 = vmul.f32 %v355, %v2248
        %v2250 = vmul.f32 %v356, %v2248
        %v2251 = vmul.f32 %v357, %v2248
        %v2255 = vrot.slane %v2249, 2
        %v2256 = vrot.slane %v2250, 2
        %v2257 = vsel %vm395, %v2255, %v2256
        %v2258 = vrot.slane %v2251, 2
        %v2259 = vsel %vm395, %v2256, %v2258
        %2260 = vrot.lane.b32.xlu0 %v2257, 122
        %v2261 = vpop.permute.xlu0 %2260
        %2262 = vrot.lane.b32.xlu0 %v2259, 122
        %v2263 = vpop.permute.xlu0 %2262
        %2264 = vrot.lane.b32.xlu0 %v2258, 122
        %v2265 = vpop.permute.xlu0 %2264
        %v2269 = vadd.f32 %v2177, %v2261
        %v2270 = vadd.f32 %v2178, %v2263
        %v2271 = vadd.f32 %v2179, %v2265
        %s2272 = sld [smem:[#allocation9 + $0x22]]
        %s2273 = sld [smem:[#allocation9 + $0x53]]
        %v2274 = vstv %s2272
        %v2275 = vmul.f32 %v352, %v2274
        %v2276 = vmul.f32 %v353, %v2274
        %v2277 = vmul.f32 %v354, %v2274
        %v2281 = vrot.slane %v2275, 4
        %v2282 = vrot.slane %v2276, 4
        %v2283 = vsel %vm186, %v2281, %v2282
        %v2284 = vrot.slane %v2277, 4
        %v2285 = vsel %vm186, %v2282, %v2284
        %2286 = vrot.lane.b32.xlu0 %v2283, 122
        %v2287 = vpop.permute.xlu0 %2286
        %2288 = vrot.lane.b32.xlu0 %v2285, 122
        %v2289 = vpop.permute.xlu0 %2288
        %v2292 = vadd.f32 %v2200, %v2287
        %v2293 = vadd.f32 %v2201, %v2289
        %v2294 = vstv %s2273
        %v2295 = vmul.f32 %v355, %v2294
        %v2296 = vmul.f32 %v356, %v2294
        %v2297 = vmul.f32 %v357, %v2294
        %v2301 = vrot.slane %v2295, 4
        %v2302 = vrot.slane %v2296, 4
        %v2303 = vsel %vm186, %v2301, %v2302
        %v2304 = vrot.slane %v2297, 4
        %v2305 = vsel %vm186, %v2302, %v2304
        %2306 = vrot.lane.b32.xlu0 %v2303, 122
        %v2307 = vpop.permute.xlu0 %2306
        %2308 = vrot.lane.b32.xlu0 %v2305, 122
        %v2309 = vpop.permute.xlu0 %2308
        %v2312 = vadd.f32 %v2220, %v2307
        %v2313 = vadd.f32 %v2221, %v2309
        %s2314 = sld [smem:[#allocation9 + $0x29]]
        %s2315 = sld [smem:[#allocation9 + $0x5a]]
        %v2316 = vstv %s2314
        %v2317 = vmul.f32 %v352, %v2316
        %v2318 = vmul.f32 %v353, %v2316
        %v2319 = vmul.f32 %v354, %v2316
        %v2323 = vrot.slane %v2317, 4
        %v2324 = vrot.slane %v2318, 4
        %v2325 = vsel %vm186, %v2323, %v2324
        %v2326 = vrot.slane %v2319, 4
        %v2327 = vsel %vm186, %v2324, %v2326
        %2328 = vrot.lane.b32.xlu0 %v2325, 122
        %v2329 = vpop.permute.xlu0 %2328
        %2330 = vrot.lane.b32.xlu0 %v2327, 122
        %v2331 = vpop.permute.xlu0 %2330
        %2332 = vrot.lane.b32.xlu0 %v2326, 122
        %v2333 = vpop.permute.xlu0 %2332
        %v2337 = vadd.f32 %v2245, %v2329
        %v2338 = vadd.f32 %v2246, %v2331
        %v2339 = vadd.f32 %v2247, %v2333
        %v2340 = vstv %s2315
        %v2341 = vmul.f32 %v355, %v2340
        %v2342 = vmul.f32 %v356, %v2340
        %v2343 = vmul.f32 %v357, %v2340
        %v2347 = vrot.slane %v2341, 4
        %v2348 = vrot.slane %v2342, 4
        %v2349 = vsel %vm186, %v2347, %v2348
        %v2350 = vrot.slane %v2343, 4
        %v2351 = vsel %vm186, %v2348, %v2350
        %2352 = vrot.lane.b32.xlu0 %v2349, 122
        %v2353 = vpop.permute.xlu0 %2352
        %2354 = vrot.lane.b32.xlu0 %v2351, 122
        %v2355 = vpop.permute.xlu0 %2354
        %2356 = vrot.lane.b32.xlu0 %v2350, 122
        %v2357 = vpop.permute.xlu0 %2356
        %v2361 = vadd.f32 %v2269, %v2353
        %v2362 = vadd.f32 %v2270, %v2355
        %v2363 = vadd.f32 %v2271, %v2357
        %s2364 = sld [smem:[#allocation9 + $0x30]]
        %s2365 = sld [smem:[#allocation9 + $0x61]]
        %v2366 = vstv %s2364
        %v2367 = vmul.f32 %v352, %v2366
        %v2368 = vmul.f32 %v353, %v2366
        %v2369 = vmul.f32 %v354, %v2366
        %v2373 = vrot.slane %v2367, 6
        %v2374 = vrot.slane %v2368, 6
        %v2375 = vsel %vm540, %v2373, %v2374
        %v2376 = vrot.slane %v2369, 6
        %v2377 = vsel %vm540, %v2374, %v2376
        %2378 = vrot.lane.b32.xlu0 %v2375, 122
        %v2379 = vpop.permute.xlu0 %2378
        %2380 = vrot.lane.b32.xlu0 %v2377, 122
        %v2381 = vpop.permute.xlu0 %2380
        %v2384 = vadd.f32 %v2292, %v2379
        %v2385 = vadd.f32 %v2293, %v2381
        %v2386 = vstv %s2365
        %v2387 = vmul.f32 %v355, %v2386
        %v2388 = vmul.f32 %v356, %v2386
        %v2389 = vmul.f32 %v357, %v2386
        %v2393 = vrot.slane %v2387, 6
        %v2394 = vrot.slane %v2388, 6
        %v2395 = vsel %vm540, %v2393, %v2394
        %v2396 = vrot.slane %v2389, 6
        %v2397 = vsel %vm540, %v2394, %v2396
        %2398 = vrot.lane.b32.xlu0 %v2395, 122
        %v2399 = vpop.permute.xlu0 %2398
        %2400 = vrot.lane.b32.xlu0 %v2397, 122
        %v2401 = vpop.permute.xlu0 %2400
        %v2404 = vadd.f32 %v2312, %v2399
        %v2405 = vadd.f32 %v2313, %v2401
        %v2406 = vadd.f32 %v2384, %v2404
        %v2407 = vadd.f32 %v2385, %v2405
        %v2408 = vadd.f32 %v2337, %v2361
        %v2409 = vadd.f32 %v2338, %v2362
        %v2410 = vadd.f32 %v2339, %v2363
        %v2414 = vrot.slane %v2408, 1
        %v2415 = vrot.slane %v2409, 1
        %v2416 = vsel %vm618, %v2414, %v2415
        %v2417 = vrot.slane %v2410, 1
        %v2418 = vsel %vm618, %v2415, %v2417
        %v2421 = vadd.f32 %v2406, %v2416
        %v2422 = vadd.f32 %v2407, %v2418
        %v2423 = vxor.u32 %v2421, 2147483648
        %v2424 = vxor.u32 %v2422, 2147483648
        %v2425 = vmul.f32 %v2423, 1.442695
        %v2426 = vpow.pop %v2425
        %v2427 = vmul.f32 %v2424, 1.442695
        %v2428 = vpow.pop %v2427
        %v2429 = vadd.f32 %v2426, 1.0
        %v2430 = vadd.f32 %v2428, 1.0
        %v2431 = vrcp.pop %v2429
        %v2432 = vmul.f32 1.0, %v2431
        %v2433 = vrcp.pop %v2430
        %v2434 = vmul.f32 1.0, %v2433
        %v2435 = vlaneseq
        %vm2436 = vcmp.ge.s32.totalorder %v2435, 0
        %vm2437 = vcmp.lt.s32.totalorder %v2435, 16
        %vm2438 = vmand %vm2436, %vm2437
        %2439 = vst.msk [vmem:[#allocation4] sm:$0x1] %vm2438, %v2432
        %v2442 = vunpack.c.l.s4 1966171168
        %v2443 = vunpack.c.0.s8 %v2442
        %v2444 = vlaneseq
        %v2445 = vshrl.u32 %v2444, 7
        %v2446 = vsub.s32 %v2443, %v2445
        %v2447 = vrot.slane %v2432, %v2446
        %v2448 = vcombine.high %v2447, %v2447
        %v2450 = vunpack.c.l.s4 1966171168
        %v2451 = vunpack.c.0.s8 %v2450
        %v2452 = vlaneseq
        %v2453 = vshrl.u32 %v2452, 7
        %v2454 = vsub.s32 %v2451, %v2453
        %v2455 = vrot.slane %v2447, %v2454
        %v2457 = vunpack.c.l.s4 1966171168
        %v2458 = vunpack.c.0.s8 %v2457
        %v2459 = vlaneseq
        %v2460 = vshrl.u32 %v2459, 7
        %v2461 = vsub.s32 %v2458, %v2460
        %v2462 = vrot.slane %v2448, %v2461
        %2463 = vrot.lane.b32.xlu0 %v2462, 16
        %v2464 = vpop.permute.xlu0 %2463
        %vm2466 = vcmp.ge.s32.totalorder %v2435, 16
        %vm2467 = vcmp.lt.s32.totalorder %v2435, 32
        %vm2468 = vmand %vm2466, %vm2467
        %2469 = vst.msk [vmem:[#allocation4] sm:$0x1] %vm2468, %v2464
        %v2470 = vcombine.high %v2455, %v2455
        %2471 = vrot.lane.b32.xlu0 %v2470, 32
        %v2472 = vpop.permute.xlu0 %2471
        %vm2474 = vcmp.ge.s32.totalorder %v2435, 32
        %vm2475 = vcmp.lt.s32.totalorder %v2435, 48
        %vm2476 = vmand %vm2474, %vm2475
        %2477 = vst.msk [vmem:[#allocation4] sm:$0x1] %vm2476, %v2472
        %v2478 = vcombine.high %v2462, %v2462
        %2479 = vrot.lane.b32.xlu0 %v2478, 48
        %v2480 = vpop.permute.xlu0 %2479
        %vm2482 = vcmp.ge.s32.totalorder %v2435, 48
        %vm2483 = vcmp.lt.s32.totalorder %v2435, 64
        %vm2484 = vmand %vm2482, %vm2483
        %2485 = vst.msk [vmem:[#allocation4] sm:$0x1] %vm2484, %v2480
        %v2486 = vcombine.high %v2432, %v2432
        %v2488 = vunpack.c.l.s4 1966171168
        %v2489 = vunpack.c.0.s8 %v2488
        %v2490 = vlaneseq
        %v2491 = vshrl.u32 %v2490, 7
        %v2492 = vsub.s32 %v2489, %v2491
        %v2493 = vrot.slane %v2486, %v2492
        %v2495 = vunpack.c.l.s4 1966171168
        %v2496 = vunpack.c.0.s8 %v2495
        %v2497 = vlaneseq
        %v2498 = vshrl.u32 %v2497, 7
        %v2499 = vsub.s32 %v2496, %v2498
        %v2500 = vrot.slane %v2493, %v2499
        %2501 = vrot.lane.b32.xlu0 %v2500, 64
        %v2502 = vpop.permute.xlu0 %2501
        %vm2504 = vcmp.ge.s32.totalorder %v2435, 64
        %vm2505 = vcmp.lt.s32.totalorder %v2435, 80
        %vm2506 = vmand %vm2504, %vm2505
        %2507 = vst.msk [vmem:[#allocation4] sm:$0x1] %vm2506, %v2502
        %v2508 = vcombine.high %v2493, %v2493
        %v2510 = vunpack.c.l.s4 1966171168
        %v2511 = vunpack.c.0.s8 %v2510
        %v2512 = vlaneseq
        %v2513 = vshrl.u32 %v2512, 7
        %v2514 = vsub.s32 %v2511, %v2513
        %v2515 = vrot.slane %v2508, %v2514
        %2516 = vrot.lane.b32.xlu0 %v2515, 80
        %v2517 = vpop.permute.xlu0 %2516
        %vm2519 = vcmp.ge.s32.totalorder %v2435, 80
        %vm2520 = vcmp.lt.s32.totalorder %v2435, 96
        %vm2521 = vmand %vm2519, %vm2520
        %2522 = vst.msk [vmem:[#allocation4] sm:$0x1] %vm2521, %v2517
        %v2523 = vcombine.high %v2500, %v2500
        %2524 = vrot.lane.b32.xlu0 %v2523, 96
        %v2525 = vpop.permute.xlu0 %2524
        %vm2527 = vcmp.ge.s32.totalorder %v2435, 96
        %vm2528 = vcmp.lt.s32.totalorder %v2435, 112
        %vm2529 = vmand %vm2527, %vm2528
        %2530 = vst.msk [vmem:[#allocation4] sm:$0x1] %vm2529, %v2525
        %v2531 = vcombine.high %v2515, %v2515
        %2532 = vrot.lane.b32.xlu0 %v2531, 112
        %v2533 = vpop.permute.xlu0 %2532
        %vm2535 = vcmp.ge.s32.totalorder %v2435, 112
        %vm2536 = vcmp.lt.s32.totalorder %v2435, 128
        %vm2537 = vmand %vm2535, %vm2536
        %2538 = vst.msk [vmem:[#allocation4] sm:$0x1] %vm2537, %v2533
        %2539 = vst.msk [vmem:[#allocation4 + $0x1] sm:$0x1] %vm2438, %v2434
        %v2542 = vunpack.c.l.s4 1966171168
        %v2543 = vunpack.c.0.s8 %v2542
        %v2544 = vlaneseq
        %v2545 = vshrl.u32 %v2544, 7
        %v2546 = vsub.s32 %v2543, %v2545
        %v2547 = vrot.slane %v2434, %v2546
        %v2548 = vcombine.high %v2547, %v2547
        %v2550 = vunpack.c.l.s4 1966171168
        %v2551 = vunpack.c.0.s8 %v2550
        %v2552 = vlaneseq
        %v2553 = vshrl.u32 %v2552, 7
        %v2554 = vsub.s32 %v2551, %v2553
        %v2555 = vrot.slane %v2547, %v2554
        %v2557 = vunpack.c.l.s4 1966171168
        %v2558 = vunpack.c.0.s8 %v2557
        %v2559 = vlaneseq
        %v2560 = vshrl.u32 %v2559, 7
        %v2561 = vsub.s32 %v2558, %v2560
        %v2562 = vrot.slane %v2548, %v2561
        %2563 = vrot.lane.b32.xlu0 %v2562, 16
        %v2564 = vpop.permute.xlu0 %2563
        %2566 = vst.msk [vmem:[#allocation4 + $0x1] sm:$0x1] %vm2468, %v2564
        %v2567 = vcombine.high %v2555, %v2555
        %2568 = vrot.lane.b32.xlu0 %v2567, 32
        %v2569 = vpop.permute.xlu0 %2568
        %2571 = vst.msk [vmem:[#allocation4 + $0x1] sm:$0x1] %vm2476, %v2569
        %v2572 = vcombine.high %v2562, %v2562
        %2573 = vrot.lane.b32.xlu0 %v2572, 48
        %v2574 = vpop.permute.xlu0 %2573
        %2576 = vst.msk [vmem:[#allocation4 + $0x1] sm:$0x1] %vm2484, %v2574
        %v2577 = vcombine.high %v2434, %v2434
        %v2579 = vunpack.c.l.s4 1966171168
        %v2580 = vunpack.c.0.s8 %v2579
        %v2581 = vlaneseq
        %v2582 = vshrl.u32 %v2581, 7
        %v2583 = vsub.s32 %v2580, %v2582
        %v2584 = vrot.slane %v2577, %v2583
        %v2586 = vunpack.c.l.s4 1966171168
        %v2587 = vunpack.c.0.s8 %v2586
        %v2588 = vlaneseq
        %v2589 = vshrl.u32 %v2588, 7
        %v2590 = vsub.s32 %v2587, %v2589
        %v2591 = vrot.slane %v2584, %v2590
        %2592 = vrot.lane.b32.xlu0 %v2591, 64
        %v2593 = vpop.permute.xlu0 %2592
        %2595 = vst.msk [vmem:[#allocation4 + $0x1] sm:$0x1] %vm2506, %v2593
        %v2596 = vcombine.high %v2584, %v2584
        %v2598 = vunpack.c.l.s4 1966171168
        %v2599 = vunpack.c.0.s8 %v2598
        %v2600 = vlaneseq
        %v2601 = vshrl.u32 %v2600, 7
        %v2602 = vsub.s32 %v2599, %v2601
        %v2603 = vrot.slane %v2596, %v2602
        %2604 = vrot.lane.b32.xlu0 %v2603, 80
        %v2605 = vpop.permute.xlu0 %2604
        %2607 = vst.msk [vmem:[#allocation4 + $0x1] sm:$0x1] %vm2521, %v2605
        %v2608 = vcombine.high %v2591, %v2591
        %2609 = vrot.lane.b32.xlu0 %v2608, 96
        %v2610 = vpop.permute.xlu0 %2609
        %2612 = vst.msk [vmem:[#allocation4 + $0x1] sm:$0x1] %vm2529, %v2610
        %v2613 = vcombine.high %v2603, %v2603
        %2614 = vrot.lane.b32.xlu0 %v2613, 112
        %v2615 = vpop.permute.xlu0 %2614
        %2617 = vst.msk [vmem:[#allocation4 + $0x1] sm:$0x1] %vm2537, %v2615
        %v2618 = vld [vmem:[#allocation4] sm:$0x3]
        %v2619 = vld [vmem:[%s148] sm:$0xff]
        %v2621 = vlaneseq
        %v2622 = vshrl.u32 %v2621, 7
        %v2623 = vsub.s32 0, %v2622
        %v2624 = vrot.slane %v2618, %v2623
        %v2625 = vlaneseq
        %v2626 = vshrl.u32 %v2625, 7
        %v2627 = vsub.s32 1, %v2626
        %v2628 = vrot.slane %v2618, %v2627
        %v2629 = vcombine.low %v2624, %v2628
        %v2631 = vmul.f32 %v2619, %v2629
        %2632 = vst [vmem:[%s173] sm:$0xff] %v2631
        %s2633 = sand.u32 %s75, 1
        %s2634 = scalar_lea.sflag [#allocation7], %s2633
        %s2635 = sand.u32 %s75, 1
        %s2636 = smul.addr %s2635, 8
        %s2637 = scalar_lea.vmem [#allocation10], %s2636
        // Predicated region
        $region37: #{tpu_custom_call.1} parent=27 // pred_check
          %p2638 = pneg %p85
        $region38: #{tpu_custom_call.1} parent=27 // pred_check_branch
          %2640 = sbr.rel (%p2638) target = $region40
        $region39: #{tpu_custom_call.1} parent=27 // pred_region
          %s2642 = ssub.s32 128, 128
          %2643 = vsyncadd %s2634, %s2642
          %s2644 = smul.addr %s20, 2
          %s2645 = smul.addr %s2644, 64
          %s2646 = scalar_lea.hbm %s2, %s2645
          %s2648 = sshll.u32 %s2637, 4
          %s2649 = int_to_ptr.vmem [resolvable:$true] %s2648
          %2651 = dma.vmem_to_hbm [thread:$0]  %s2649, 128, %s2646, %s2634
        $region40: #{tpu_custom_call.1} parent=27 // pred_fallthru
          _
      $region28: #{tpu_custom_call.1} parent=5 // pred_fallthru
        _
      %p2652 = scmp.le.s32.totalorder 2, %s15
      // Predicated region
      $region41: #{tpu_custom_call.1} parent=5 // pred_check
        %p2653 = pneg %p2652
      $region42: #{tpu_custom_call.1} parent=5 // pred_check_branch
        %2655 = sbr.rel (%p2653) target = $region44
      $region43: #{tpu_custom_call.1} parent=5 // pred_region
        %s2656 = ssub.s32 %s15, 2
        // Predicated region
        $region45: #{tpu_custom_call.1} parent=43 // pred_check
          %p2657 = pneg %p91
        $region46: #{tpu_custom_call.1} parent=43 // pred_check_branch
          %2659 = sbr.rel (%p2657) target = $region48
        $region47: #{tpu_custom_call.1} parent=43 // pred_region
          %s2660 = sand.u32 %s76, 1
          %s2661 = scalar_lea.sflag [#allocation7], %s2660
          %s2662 = sand.u32 %s76, 1
          %s2663 = smul.addr %s2662, 8
          %s2664 = scalar_lea.vmem [#allocation10], %s2663
          %2665 = dma.done %s2661, 128
        $region48: #{tpu_custom_call.1} parent=43 // pred_fallthru
          _
      $region44: #{tpu_custom_call.1} parent=5 // pred_fallthru
        _
    $region6: #{tpu_custom_call.1} parent=1 // loop_footer
      %s19 = sadd.s32 1, %s15
    $region7: #{tpu_custom_call.1} parent=1 // loop_footer_branch
      %14 = sbr.rel target = $region3
    $region8: #{tpu_custom_call.1} parent=1 // loop_exit
      _
    %2666 = vsyncpa [#allocation6], 1
    %s2667 = scalar_lea.sflag [#allocation6], 1
    %2668 = vsyncpa %s2667, 1
    %2669 = vsyncpa [#allocation7], 1
    %s2670 = scalar_lea.sflag [#allocation7], 1
    %2671 = vsyncpa %s2670, 1
    %2672 = vsyncpa [#allocation8], 1
    %s2673 = scalar_lea.sflag [#allocation8], 1
    %2674 = vsyncpa %s2673, 1

</llo_original>
